<compile_context>
chip_gen: v6e
topology: v6e:2x2x1
jax: 0.10.0
libtpu: 0.0.40
codegen_flags: <defaults>
</compile_context>

<pallas_src>
import functools
import math

import jax
import jax.numpy as jnp
from jax.experimental import pallas as pl
from jax.experimental.pallas import tpu as pltpu


# --------------------------------------------------------------------------- kernel
def _mha_kernel(q_ref, k_ref, v_ref,
                wq_ref, bq_ref, wk_ref, bk_ref, wv_ref, bv_ref,
                wo_ref, bo_ref,
                o_ref, attn_ref, ctx_ref, *, n_heads, scale):
    """Fused MHA for a block of BB batch elements.

    q_ref:   (BB, L, d_model)      k_ref/v_ref: (BB, S, d_model)
    weights: (in, out)             biases: (1, out)
    o_ref:   (BB, L, d_model)      attn_ref: (n_heads, BB, L, S)
    ctx_ref: VMEM scratch (BB, L, d_model)
    """
    BB, L, d_model = q_ref.shape
    S = k_ref.shape[1]
    d_head = d_model // n_heads

    # ---- Q/K/V projections as tall 2-D matmuls (fills the MXU) -------------
    xq = q_ref[...].reshape(BB * L, d_model)
    xk = k_ref[...].reshape(BB * S, d_model)
    xv = v_ref[...].reshape(BB * S, d_model)
    q = (jnp.dot(xq, wq_ref[...], preferred_element_type=jnp.float32)
         + bq_ref[...]).reshape(BB, L, d_model)
    k = (jnp.dot(xk, wk_ref[...], preferred_element_type=jnp.float32)
         + bk_ref[...]).reshape(BB, S, d_model)
    v = (jnp.dot(xv, wv_ref[...], preferred_element_type=jnp.float32)
         + bv_ref[...]).reshape(BB, S, d_model)

    # ---- per-head scaled dot-product attention (batched over BB) -----------
    for h in range(n_heads):
        sl = slice(h * d_head, (h + 1) * d_head)
        s = jnp.einsum('bqd,bkd->bqk', q[:, :, sl], k[:, :, sl],
                       preferred_element_type=jnp.float32) * scale
        s = s - jnp.max(s, axis=-1, keepdims=True)
        e = jnp.exp(s)
        a = e * pl.reciprocal(jnp.sum(e, axis=-1, keepdims=True), approx=True)
        attn_ref[h] = a                       # attn_dropout(p=0.0) == identity
        ctx_ref[:, :, sl] = jnp.einsum('bqk,bkd->bqd', a, v[:, :, sl],
                                       preferred_element_type=jnp.float32)

    # ---- single fused output projection (concat of heads == scratch slab) --
    ctx = ctx_ref[...].reshape(BB * L, d_model)
    out = jnp.dot(ctx, wo_ref[...], preferred_element_type=jnp.float32) + bo_ref[...]
    o_ref[...] = out.reshape(BB, L, d_model)   # proj Dropout(p=0.0) == identity


# --------------------------------------------------------------------------- wrapper
def _full_spec(a):
    zeros = (0,) * a.ndim
    return pl.BlockSpec(a.shape, lambda i: zeros)


def multihead_attention(Q, K=None, V=None, *, params, n_heads, block_b=None):
    """Mirrors _MultiheadAttention.forward: returns (output, attn_weights)."""
    if K is None:
        K = Q
    if V is None:
        V = Q
    bs, L, d_model = Q.shape
    S = K.shape[1]
    assert d_model % n_heads == 0
    d_head = d_model // n_heads
    scale = d_head ** (-0.5)

    if block_b is None:
        # keep at least 2 grid steps when possible (v7x has 2 TensorCores)
        block_b = bs // 2 if bs % 2 == 0 and bs >= 2 else bs
    assert bs % block_b == 0
    grid = (bs // block_b,)

    p = params
    out, attn_hm = pl.pallas_call(
        functools.partial(_mha_kernel, n_heads=n_heads, scale=scale),
        out_shape=(
            jax.ShapeDtypeStruct((bs, L, d_model), jnp.float32),
            jax.ShapeDtypeStruct((n_heads, bs, L, S), jnp.float32),
        ),
        grid=grid,
        in_specs=[
            pl.BlockSpec((block_b, L, d_model), lambda i: (i, 0, 0)),
            pl.BlockSpec((block_b, S, d_model), lambda i: (i, 0, 0)),
            pl.BlockSpec((block_b, S, d_model), lambda i: (i, 0, 0)),
            _full_spec(p["wq"]), _full_spec(p["bq"]),
            _full_spec(p["wk"]), _full_spec(p["bk"]),
            _full_spec(p["wv"]), _full_spec(p["bv"]),
            _full_spec(p["wo"]), _full_spec(p["bo"]),
        ],
        out_specs=(
            pl.BlockSpec((block_b, L, d_model), lambda i: (i, 0, 0)),
            pl.BlockSpec((n_heads, block_b, L, S), lambda i: (0, i, 0, 0)),
        ),
        scratch_shapes=[pltpu.VMEM((block_b, L, d_model), jnp.float32)],
        compiler_params=pltpu.CompilerParams(dimension_semantics=("parallel",)),
    )(Q, K, V, p["wq"], p["bq"], p["wk"], p["bk"], p["wv"], p["bv"],
      p["wo"], p["bo"])

    # kernel writes attention head-major; present it as [bs, n_heads, L, S]
    attn = jnp.transpose(attn_hm, (1, 0, 2, 3))
    return out, attn


# --------------------------------------------------------------------------- params
def init_params(key, d_model, n_heads):
    """PyTorch nn.Linear default init; weights stored as (in, out)."""
    def linear(k, fan_in, fan_out):
        k1, k2 = jax.random.split(k)
        bound = 1.0 / math.sqrt(fan_in)
        w = jax.random.uniform(k1, (fan_in, fan_out), jnp.float32, -bound, bound)
        b = jax.random.uniform(k2, (1, fan_out), jnp.float32, -bound, bound)
        return w, b

    ks = jax.random.split(key, 4)
    wq, bq = linear(ks[0], d_model, d_model)   # d_k * n_heads == d_model
    wk, bk = linear(ks[1], d_model, d_model)
    wv, bv = linear(ks[2], d_model, d_model)
    wo, bo = linear(ks[3], d_model, d_model)
    return dict(wq=wq, bq=bq, wk=wk, bk=bk, wv=wv, bv=bv, wo=wo, bo=bo)


# --------------------------------------------------------------------------- reference
def _mha_ref(Q, K, V, p, n_heads):
    bs, L, d_model = Q.shape
    S = K.shape[1]
    d_head = d_model // n_heads
    q = (Q @ p["wq"] + p["bq"]).reshape(bs, L, n_heads, d_head).transpose(0, 2, 1, 3)
    k = (K @ p["wk"] + p["bk"]).reshape(bs, S, n_heads, d_head).transpose(0, 2, 1, 3)
    v = (V @ p["wv"] + p["bv"]).reshape(bs, S, n_heads, d_head).transpose(0, 2, 1, 3)
    s = jnp.einsum('bhqd,bhkd->bhqk', q, k) * (d_head ** (-0.5))
    a = jax.nn.softmax(s, axis=-1)
    o = jnp.einsum('bhqk,bhkd->bhqd', a, v).transpose(0, 2, 1, 3).reshape(bs, L, d_model)
    return o @ p["wo"] + p["bo"], a


# --------------------------------------------------------------------------- main
if __name__ == "__main__":
    bs, q_len, d_model, n_heads = 8, 16, 32, 4

    key = jax.random.PRNGKey(0)
    kx, kp = jax.random.split(key)
    Q = jax.random.normal(kx, (bs, q_len, d_model), jnp.float32)
    params = init_params(kp, d_model, n_heads)

    fwd = jax.jit(lambda q, p: multihead_attention(q, params=p, n_heads=n_heads))
    out, attn = fwd(Q, params)
    out, attn = jax.block_until_ready((out, attn))

    assert out.shape == (bs, q_len, d_model)
    assert attn.shape == (bs, n_heads, q_len, q_len)
    assert bool(jnp.all(jnp.isfinite(out)))
    assert bool(jnp.all(jnp.isfinite(attn)))

    # numerical sanity check vs plain-JAX reference (approx reciprocal in softmax
    # is the only deliberate deviation, well inside these tolerances)
    ref_out, ref_attn = _mha_ref(Q, Q, Q, params, n_heads)
    assert bool(jnp.allclose(out, ref_out, atol=2e-2, rtol=2e-2))
    assert bool(jnp.allclose(attn, ref_attn, atol=2e-2, rtol=2e-2))

    print("KERNEL_OK")
</pallas_src>

<mosaic_0001>
module attributes {stable_mosaic.version = 11 : i64} {
  func.func @_mha_kernel(%arg0: i32, %arg1: memref<4x16x32xf32, #tpu.memory_space<vmem>>, %arg2: memref<4x16x32xf32, #tpu.memory_space<vmem>>, %arg3: memref<4x16x32xf32, #tpu.memory_space<vmem>>, %arg4: memref<32x32xf32, #tpu.memory_space<vmem>>, %arg5: memref<1x32xf32, #tpu.memory_space<vmem>>, %arg6: memref<32x32xf32, #tpu.memory_space<vmem>>, %arg7: memref<1x32xf32, #tpu.memory_space<vmem>>, %arg8: memref<32x32xf32, #tpu.memory_space<vmem>>, %arg9: memref<1x32xf32, #tpu.memory_space<vmem>>, %arg10: memref<32x32xf32, #tpu.memory_space<vmem>>, %arg11: memref<1x32xf32, #tpu.memory_space<vmem>>, %arg12: memref<4x16x32xf32, #tpu.memory_space<vmem>>, %arg13: memref<4x4x16x16xf32, #tpu.memory_space<vmem>>, %arg14: memref<4x16x32xf32, #tpu.memory_space<vmem>>) attributes {dimension_semantics = [#tpu.dimension_semantics<parallel>], iteration_bounds = array<i64: 2>, scalar_prefetch = 0 : i64, scratch_operands = 1 : i64, tpu.core_type = #tpu.core_type<tc>, window_params = [{transform_indices = @transform_0, window_bounds = array<i64: 4, 16, 32>}, {transform_indices = @transform_1, window_bounds = array<i64: 4, 16, 32>}, {transform_indices = @transform_2, window_bounds = array<i64: 4, 16, 32>}, {pipeline_mode = #tpu.pipeline_mode<synchronous>, transform_indices = @transform_3, window_bounds = array<i64: 32, 32>}, {pipeline_mode = #tpu.pipeline_mode<synchronous>, transform_indices = @transform_4, window_bounds = array<i64: 1, 32>}, {pipeline_mode = #tpu.pipeline_mode<synchronous>, transform_indices = @transform_5, window_bounds = array<i64: 32, 32>}, {pipeline_mode = #tpu.pipeline_mode<synchronous>, transform_indices = @transform_6, window_bounds = array<i64: 1, 32>}, {pipeline_mode = #tpu.pipeline_mode<synchronous>, transform_indices = @transform_7, window_bounds = array<i64: 32, 32>}, {pipeline_mode = #tpu.pipeline_mode<synchronous>, transform_indices = @transform_8, window_bounds = array<i64: 1, 32>}, {pipeline_mode = #tpu.pipeline_mode<synchronous>, transform_indices = @transform_9, window_bounds = array<i64: 32, 32>}, {pipeline_mode = #tpu.pipeline_mode<synchronous>, transform_indices = @transform_10, window_bounds = array<i64: 1, 32>}, {transform_indices = @transform_11, window_bounds = array<i64: 4, 16, 32>}, {transform_indices = @transform_12, window_bounds = array<i64: 4, 4, 16, 16>}]} {
    %c0 = arith.constant 0 : index
    %c0_0 = arith.constant 0 : index
    %c0_1 = arith.constant 0 : index
    %0 = vector.load %arg1[%c0, %c0_0, %c0_1] : memref<4x16x32xf32, #tpu.memory_space<vmem>>, vector<4x16x32xf32>
    %1 = vector.shape_cast %0 : vector<4x16x32xf32> to vector<64x32xf32>
    %c0_2 = arith.constant 0 : index
    %c0_3 = arith.constant 0 : index
    %c0_4 = arith.constant 0 : index
    %2 = vector.load %arg2[%c0_2, %c0_3, %c0_4] : memref<4x16x32xf32, #tpu.memory_space<vmem>>, vector<4x16x32xf32>
    %3 = vector.shape_cast %2 : vector<4x16x32xf32> to vector<64x32xf32>
    %c0_5 = arith.constant 0 : index
    %c0_6 = arith.constant 0 : index
    %c0_7 = arith.constant 0 : index
    %4 = vector.load %arg3[%c0_5, %c0_6, %c0_7] : memref<4x16x32xf32, #tpu.memory_space<vmem>>, vector<4x16x32xf32>
    %5 = vector.shape_cast %4 : vector<4x16x32xf32> to vector<64x32xf32>
    %c0_8 = arith.constant 0 : index
    %c0_9 = arith.constant 0 : index
    %6 = vector.load %arg4[%c0_8, %c0_9] : memref<32x32xf32, #tpu.memory_space<vmem>>, vector<32x32xf32>
    %cst = arith.constant dense<0.000000e+00> : vector<64x32xf32>
    %7 = tpu.matmul %1, %6, %cst {dimension_numbers = #tpu.dot_dimension_numbers<[1], [0], [0], [1], [0, 0, 1, 1], [], []>} : vector<64x32xf32>, vector<32x32xf32>, vector<64x32xf32> -> vector<64x32xf32>
    %c0_10 = arith.constant 0 : index
    %c0_11 = arith.constant 0 : index
    %8 = vector.load %arg5[%c0_10, %c0_11] : memref<1x32xf32, #tpu.memory_space<vmem>>, vector<1x32xf32>
    %9 = vector.broadcast %8 : vector<1x32xf32> to vector<64x32xf32>
    %10 = arith.addf %7, %9 : vector<64x32xf32>
    %11 = vector.shape_cast %10 : vector<64x32xf32> to vector<4x16x32xf32>
    %c0_12 = arith.constant 0 : index
    %c0_13 = arith.constant 0 : index
    %12 = vector.load %arg6[%c0_12, %c0_13] : memref<32x32xf32, #tpu.memory_space<vmem>>, vector<32x32xf32>
    %cst_14 = arith.constant dense<0.000000e+00> : vector<64x32xf32>
    %13 = tpu.matmul %3, %12, %cst_14 {dimension_numbers = #tpu.dot_dimension_numbers<[1], [0], [0], [1], [0, 0, 1, 1], [], []>} : vector<64x32xf32>, vector<32x32xf32>, vector<64x32xf32> -> vector<64x32xf32>
    %c0_15 = arith.constant 0 : index
    %c0_16 = arith.constant 0 : index
    %14 = vector.load %arg7[%c0_15, %c0_16] : memref<1x32xf32, #tpu.memory_space<vmem>>, vector<1x32xf32>
    %15 = vector.broadcast %14 : vector<1x32xf32> to vector<64x32xf32>
    %16 = arith.addf %13, %15 : vector<64x32xf32>
    %17 = vector.shape_cast %16 : vector<64x32xf32> to vector<4x16x32xf32>
    %c0_17 = arith.constant 0 : index
    %c0_18 = arith.constant 0 : index
    %18 = vector.load %arg8[%c0_17, %c0_18] : memref<32x32xf32, #tpu.memory_space<vmem>>, vector<32x32xf32>
    %cst_19 = arith.constant dense<0.000000e+00> : vector<64x32xf32>
    %19 = tpu.matmul %5, %18, %cst_19 {dimension_numbers = #tpu.dot_dimension_numbers<[1], [0], [0], [1], [0, 0, 1, 1], [], []>} : vector<64x32xf32>, vector<32x32xf32>, vector<64x32xf32> -> vector<64x32xf32>
    %c0_20 = arith.constant 0 : index
    %c0_21 = arith.constant 0 : index
    %20 = vector.load %arg9[%c0_20, %c0_21] : memref<1x32xf32, #tpu.memory_space<vmem>>, vector<1x32xf32>
    %21 = vector.broadcast %20 : vector<1x32xf32> to vector<64x32xf32>
    %22 = arith.addf %19, %21 : vector<64x32xf32>
    %23 = vector.shape_cast %22 : vector<64x32xf32> to vector<4x16x32xf32>
    %24 = vector.extract_strided_slice %11 {offsets = [0, 0, 0], sizes = [4, 16, 8], strides = [1, 1, 1]} : vector<4x16x32xf32> to vector<4x16x8xf32>
    %25 = vector.extract_strided_slice %17 {offsets = [0, 0, 0], sizes = [4, 16, 8], strides = [1, 1, 1]} : vector<4x16x32xf32> to vector<4x16x8xf32>
    "tpu.trace_start"() <{level = 10 : i32, message = "bqd,bkd->bqk"}> : () -> ()
    %cst_22 = arith.constant dense<0.000000e+00> : vector<4x16x16xf32>
    %26 = tpu.matmul %24, %25, %cst_22 {dimension_numbers = #tpu.dot_dimension_numbers<[2], [2], [1], [1], [0, 0, 0, 1, 1, 1], [0], [0]>} : vector<4x16x8xf32>, vector<4x16x8xf32>, vector<4x16x16xf32> -> vector<4x16x16xf32>
    "tpu.trace_stop"() : () -> ()
    %cst_23 = arith.constant 0.353553385 : f32
    %27 = vector.broadcast %cst_23 : f32 to vector<4x16x16xf32>
    %28 = arith.mulf %26, %27 : vector<4x16x16xf32>
    %cst_24 = arith.constant dense<0xFF800000> : vector<4x16xf32>
    %29 = vector.multi_reduction <maximumf>, %28, %cst_24 [2] : vector<4x16x16xf32> to vector<4x16xf32>
    %30 = vector.shape_cast %29 : vector<4x16xf32> to vector<4x16x1xf32>
    %31 = vector.broadcast %30 : vector<4x16x1xf32> to vector<4x16x16xf32>
    %32 = arith.subf %28, %31 : vector<4x16x16xf32>
    %33 = math.exp %32 : vector<4x16x16xf32>
    %cst_25 = arith.constant dense<0.000000e+00> : vector<4x16xf32>
    %34 = vector.multi_reduction <add>, %33, %cst_25 [2] : vector<4x16x16xf32> to vector<4x16xf32>
    %35 = vector.shape_cast %34 : vector<4x16xf32> to vector<4x16x1xf32>
    %36 = tpu.reciprocal %35 {approx = true} : vector<4x16x1xf32> -> vector<4x16x1xf32>
    %37 = vector.broadcast %36 : vector<4x16x1xf32> to vector<4x16x16xf32>
    %38 = arith.mulf %33, %37 : vector<4x16x16xf32>
    %c0_26 = arith.constant 0 : index
    %c0_27 = arith.constant 0 : index
    %c0_28 = arith.constant 0 : index
    %c0_29 = arith.constant 0 : index
    %39 = vector.load %arg13[%c0_26, %c0_27, %c0_28, %c0_29] : memref<4x4x16x16xf32, #tpu.memory_space<vmem>>, vector<1x4x16x16xf32>
    %40 = vector.shape_cast %39 : vector<1x4x16x16xf32> to vector<4x16x16xf32>
    %41 = vector.shape_cast %38 : vector<4x16x16xf32> to vector<1x4x16x16xf32>
    tpu.vector_store %arg13[%c0_26, %c0_27, %c0_28, %c0_29], %41 {strides = array<i32>} : memref<4x4x16x16xf32, #tpu.memory_space<vmem>>, vector<1x4x16x16xf32>,
    %42 = vector.extract_strided_slice %23 {offsets = [0, 0, 0], sizes = [4, 16, 8], strides = [1, 1, 1]} : vector<4x16x32xf32> to vector<4x16x8xf32>
    "tpu.trace_start"() <{level = 10 : i32, message = "bqk,bkd->bqd"}> : () -> ()
    %cst_30 = arith.constant dense<0.000000e+00> : vector<4x16x8xf32>
    %43 = tpu.matmul %38, %42, %cst_30 {dimension_numbers = #tpu.dot_dimension_numbers<[2], [1], [1], [2], [0, 0, 0, 1, 1, 2], [0], [0]>} : vector<4x16x16xf32>, vector<4x16x8xf32>, vector<4x16x8xf32> -> vector<4x16x8xf32>
    "tpu.trace_stop"() : () -> ()
    %c0_31 = arith.constant 0 : index
    %c0_32 = arith.constant 0 : index
    %c0_33 = arith.constant 0 : index
    %44 = vector.load %arg14[%c0_31, %c0_32, %c0_33] : memref<4x16x32xf32, #tpu.memory_space<vmem>>, vector<4x16x8xf32>
    tpu.vector_store %arg14[%c0_31, %c0_32, %c0_33], %43 {strides = array<i32>} : memref<4x16x32xf32, #tpu.memory_space<vmem>>, vector<4x16x8xf32>,
    %45 = vector.extract_strided_slice %11 {offsets = [0, 0, 8], sizes = [4, 16, 8], strides = [1, 1, 1]} : vector<4x16x32xf32> to vector<4x16x8xf32>
    %46 = vector.extract_strided_slice %17 {offsets = [0, 0, 8], sizes = [4, 16, 8], strides = [1, 1, 1]} : vector<4x16x32xf32> to vector<4x16x8xf32>
    "tpu.trace_start"() <{level = 10 : i32, message = "bqd,bkd->bqk"}> : () -> ()
    %cst_34 = arith.constant dense<0.000000e+00> : vector<4x16x16xf32>
    %47 = tpu.matmul %45, %46, %cst_34 {dimension_numbers = #tpu.dot_dimension_numbers<[2], [2], [1], [1], [0, 0, 0, 1, 1, 1], [0], [0]>} : vector<4x16x8xf32>, vector<4x16x8xf32>, vector<4x16x16xf32> -> vector<4x16x16xf32>
    "tpu.trace_stop"() : () -> ()
    %cst_35 = arith.constant 0.353553385 : f32
    %48 = vector.broadcast %cst_35 : f32 to vector<4x16x16xf32>
    %49 = arith.mulf %47, %48 : vector<4x16x16xf32>
    %cst_36 = arith.constant dense<0xFF800000> : vector<4x16xf32>
    %50 = vector.multi_reduction <maximumf>, %49, %cst_36 [2] : vector<4x16x16xf32> to vector<4x16xf32>
    %51 = vector.shape_cast %50 : vector<4x16xf32> to vector<4x16x1xf32>
    %52 = vector.broadcast %51 : vector<4x16x1xf32> to vector<4x16x16xf32>
    %53 = arith.subf %49, %52 : vector<4x16x16xf32>
    %54 = math.exp %53 : vector<4x16x16xf32>
    %cst_37 = arith.constant dense<0.000000e+00> : vector<4x16xf32>
    %55 = vector.multi_reduction <add>, %54, %cst_37 [2] : vector<4x16x16xf32> to vector<4x16xf32>
    %56 = vector.shape_cast %55 : vector<4x16xf32> to vector<4x16x1xf32>
    %57 = tpu.reciprocal %56 {approx = true} : vector<4x16x1xf32> -> vector<4x16x1xf32>
    %58 = vector.broadcast %57 : vector<4x16x1xf32> to vector<4x16x16xf32>
    %59 = arith.mulf %54, %58 : vector<4x16x16xf32>
    %c1 = arith.constant 1 : index
    %c0_38 = arith.constant 0 : index
    %c0_39 = arith.constant 0 : index
    %c0_40 = arith.constant 0 : index
    %60 = vector.load %arg13[%c1, %c0_38, %c0_39, %c0_40] : memref<4x4x16x16xf32, #tpu.memory_space<vmem>>, vector<1x4x16x16xf32>
    %61 = vector.shape_cast %60 : vector<1x4x16x16xf32> to vector<4x16x16xf32>
    %62 = vector.shape_cast %59 : vector<4x16x16xf32> to vector<1x4x16x16xf32>
    tpu.vector_store %arg13[%c1, %c0_38, %c0_39, %c0_40], %62 {strides = array<i32>} : memref<4x4x16x16xf32, #tpu.memory_space<vmem>>, vector<1x4x16x16xf32>,
    %63 = vector.extract_strided_slice %23 {offsets = [0, 0, 8], sizes = [4, 16, 8], strides = [1, 1, 1]} : vector<4x16x32xf32> to vector<4x16x8xf32>
    "tpu.trace_start"() <{level = 10 : i32, message = "bqk,bkd->bqd"}> : () -> ()
    %cst_41 = arith.constant dense<0.000000e+00> : vector<4x16x8xf32>
    %64 = tpu.matmul %59, %63, %cst_41 {dimension_numbers = #tpu.dot_dimension_numbers<[2], [1], [1], [2], [0, 0, 0, 1, 1, 2], [0], [0]>} : vector<4x16x16xf32>, vector<4x16x8xf32>, vector<4x16x8xf32> -> vector<4x16x8xf32>
    "tpu.trace_stop"() : () -> ()
    %c0_42 = arith.constant 0 : index
    %c0_43 = arith.constant 0 : index
    %c8 = arith.constant 8 : index
    %65 = vector.load %arg14[%c0_42, %c0_43, %c8] : memref<4x16x32xf32, #tpu.memory_space<vmem>>, vector<4x16x8xf32>
    tpu.vector_store %arg14[%c0_42, %c0_43, %c8], %64 {strides = array<i32>} : memref<4x16x32xf32, #tpu.memory_space<vmem>>, vector<4x16x8xf32>,
    %66 = vector.extract_strided_slice %11 {offsets = [0, 0, 16], sizes = [4, 16, 8], strides = [1, 1, 1]} : vector<4x16x32xf32> to vector<4x16x8xf32>
    %67 = vector.extract_strided_slice %17 {offsets = [0, 0, 16], sizes = [4, 16, 8], strides = [1, 1, 1]} : vector<4x16x32xf32> to vector<4x16x8xf32>
    "tpu.trace_start"() <{level = 10 : i32, message = "bqd,bkd->bqk"}> : () -> ()
    %cst_44 = arith.constant dense<0.000000e+00> : vector<4x16x16xf32>
    %68 = tpu.matmul %66, %67, %cst_44 {dimension_numbers = #tpu.dot_dimension_numbers<[2], [2], [1], [1], [0, 0, 0, 1, 1, 1], [0], [0]>} : vector<4x16x8xf32>, vector<4x16x8xf32>, vector<4x16x16xf32> -> vector<4x16x16xf32>
    "tpu.trace_stop"() : () -> ()
    %cst_45 = arith.constant 0.353553385 : f32
    %69 = vector.broadcast %cst_45 : f32 to vector<4x16x16xf32>
    %70 = arith.mulf %68, %69 : vector<4x16x16xf32>
    %cst_46 = arith.constant dense<0xFF800000> : vector<4x16xf32>
    %71 = vector.multi_reduction <maximumf>, %70, %cst_46 [2] : vector<4x16x16xf32> to vector<4x16xf32>
    %72 = vector.shape_cast %71 : vector<4x16xf32> to vector<4x16x1xf32>
    %73 = vector.broadcast %72 : vector<4x16x1xf32> to vector<4x16x16xf32>
    %74 = arith.subf %70, %73 : vector<4x16x16xf32>
    %75 = math.exp %74 : vector<4x16x16xf32>
    %cst_47 = arith.constant dense<0.000000e+00> : vector<4x16xf32>
    %76 = vector.multi_reduction <add>, %75, %cst_47 [2] : vector<4x16x16xf32> to vector<4x16xf32>
    %77 = vector.shape_cast %76 : vector<4x16xf32> to vector<4x16x1xf32>
    %78 = tpu.reciprocal %77 {approx = true} : vector<4x16x1xf32> -> vector<4x16x1xf32>
    %79 = vector.broadcast %78 : vector<4x16x1xf32> to vector<4x16x16xf32>
    %80 = arith.mulf %75, %79 : vector<4x16x16xf32>
    %c2 = arith.constant 2 : index
    %c0_48 = arith.constant 0 : index
    %c0_49 = arith.constant 0 : index
    %c0_50 = arith.constant 0 : index
    %81 = vector.load %arg13[%c2, %c0_48, %c0_49, %c0_50] : memref<4x4x16x16xf32, #tpu.memory_space<vmem>>, vector<1x4x16x16xf32>
    %82 = vector.shape_cast %81 : vector<1x4x16x16xf32> to vector<4x16x16xf32>
    %83 = vector.shape_cast %80 : vector<4x16x16xf32> to vector<1x4x16x16xf32>
    tpu.vector_store %arg13[%c2, %c0_48, %c0_49, %c0_50], %83 {strides = array<i32>} : memref<4x4x16x16xf32, #tpu.memory_space<vmem>>, vector<1x4x16x16xf32>,
    %84 = vector.extract_strided_slice %23 {offsets = [0, 0, 16], sizes = [4, 16, 8], strides = [1, 1, 1]} : vector<4x16x32xf32> to vector<4x16x8xf32>
    "tpu.trace_start"() <{level = 10 : i32, message = "bqk,bkd->bqd"}> : () -> ()
    %cst_51 = arith.constant dense<0.000000e+00> : vector<4x16x8xf32>
    %85 = tpu.matmul %80, %84, %cst_51 {dimension_numbers = #tpu.dot_dimension_numbers<[2], [1], [1], [2], [0, 0, 0, 1, 1, 2], [0], [0]>} : vector<4x16x16xf32>, vector<4x16x8xf32>, vector<4x16x8xf32> -> vector<4x16x8xf32>
    "tpu.trace_stop"() : () -> ()
    %c0_52 = arith.constant 0 : index
    %c0_53 = arith.constant 0 : index
    %c16 = arith.constant 16 : index
    %86 = vector.load %arg14[%c0_52, %c0_53, %c16] : memref<4x16x32xf32, #tpu.memory_space<vmem>>, vector<4x16x8xf32>
    tpu.vector_store %arg14[%c0_52, %c0_53, %c16], %85 {strides = array<i32>} : memref<4x16x32xf32, #tpu.memory_space<vmem>>, vector<4x16x8xf32>,
    %87 = vector.extract_strided_slice %11 {offsets = [0, 0, 24], sizes = [4, 16, 8], strides = [1, 1, 1]} : vector<4x16x32xf32> to vector<4x16x8xf32>
    %88 = vector.extract_strided_slice %17 {offsets = [0, 0, 24], sizes = [4, 16, 8], strides = [1, 1, 1]} : vector<4x16x32xf32> to vector<4x16x8xf32>
    "tpu.trace_start"() <{level = 10 : i32, message = "bqd,bkd->bqk"}> : () -> ()
    %cst_54 = arith.constant dense<0.000000e+00> : vector<4x16x16xf32>
    %89 = tpu.matmul %87, %88, %cst_54 {dimension_numbers = #tpu.dot_dimension_numbers<[2], [2], [1], [1], [0, 0, 0, 1, 1, 1], [0], [0]>} : vector<4x16x8xf32>, vector<4x16x8xf32>, vector<4x16x16xf32> -> vector<4x16x16xf32>
    "tpu.trace_stop"() : () -> ()
    %cst_55 = arith.constant 0.353553385 : f32
    %90 = vector.broadcast %cst_55 : f32 to vector<4x16x16xf32>
    %91 = arith.mulf %89, %90 : vector<4x16x16xf32>
    %cst_56 = arith.constant dense<0xFF800000> : vector<4x16xf32>
    %92 = vector.multi_reduction <maximumf>, %91, %cst_56 [2] : vector<4x16x16xf32> to vector<4x16xf32>
    %93 = vector.shape_cast %92 : vector<4x16xf32> to vector<4x16x1xf32>
    %94 = vector.broadcast %93 : vector<4x16x1xf32> to vector<4x16x16xf32>
    %95 = arith.subf %91, %94 : vector<4x16x16xf32>
    %96 = math.exp %95 : vector<4x16x16xf32>
    %cst_57 = arith.constant dense<0.000000e+00> : vector<4x16xf32>
    %97 = vector.multi_reduction <add>, %96, %cst_57 [2] : vector<4x16x16xf32> to vector<4x16xf32>
    %98 = vector.shape_cast %97 : vector<4x16xf32> to vector<4x16x1xf32>
    %99 = tpu.reciprocal %98 {approx = true} : vector<4x16x1xf32> -> vector<4x16x1xf32>
    %100 = vector.broadcast %99 : vector<4x16x1xf32> to vector<4x16x16xf32>
    %101 = arith.mulf %96, %100 : vector<4x16x16xf32>
    %c3 = arith.constant 3 : index
    %c0_58 = arith.constant 0 : index
    %c0_59 = arith.constant 0 : index
    %c0_60 = arith.constant 0 : index
    %102 = vector.load %arg13[%c3, %c0_58, %c0_59, %c0_60] : memref<4x4x16x16xf32, #tpu.memory_space<vmem>>, vector<1x4x16x16xf32>
    %103 = vector.shape_cast %102 : vector<1x4x16x16xf32> to vector<4x16x16xf32>
    %104 = vector.shape_cast %101 : vector<4x16x16xf32> to vector<1x4x16x16xf32>
    tpu.vector_store %arg13[%c3, %c0_58, %c0_59, %c0_60], %104 {strides = array<i32>} : memref<4x4x16x16xf32, #tpu.memory_space<vmem>>, vector<1x4x16x16xf32>,
    %105 = vector.extract_strided_slice %23 {offsets = [0, 0, 24], sizes = [4, 16, 8], strides = [1, 1, 1]} : vector<4x16x32xf32> to vector<4x16x8xf32>
    "tpu.trace_start"() <{level = 10 : i32, message = "bqk,bkd->bqd"}> : () -> ()
    %cst_61 = arith.constant dense<0.000000e+00> : vector<4x16x8xf32>
    %106 = tpu.matmul %101, %105, %cst_61 {dimension_numbers = #tpu.dot_dimension_numbers<[2], [1], [1], [2], [0, 0, 0, 1, 1, 2], [0], [0]>} : vector<4x16x16xf32>, vector<4x16x8xf32>, vector<4x16x8xf32> -> vector<4x16x8xf32>
    "tpu.trace_stop"() : () -> ()
    %c0_62 = arith.constant 0 : index
    %c0_63 = arith.constant 0 : index
    %c24 = arith.constant 24 : index
    %107 = vector.load %arg14[%c0_62, %c0_63, %c24] : memref<4x16x32xf32, #tpu.memory_space<vmem>>, vector<4x16x8xf32>
    tpu.vector_store %arg14[%c0_62, %c0_63, %c24], %106 {strides = array<i32>} : memref<4x16x32xf32, #tpu.memory_space<vmem>>, vector<4x16x8xf32>,
    %c0_64 = arith.constant 0 : index
    %c0_65 = arith.constant 0 : index
    %c0_66 = arith.constant 0 : index
    %108 = vector.load %arg14[%c0_64, %c0_65, %c0_66] : memref<4x16x32xf32, #tpu.memory_space<vmem>>, vector<4x16x32xf32>
    %109 = vector.shape_cast %108 : vector<4x16x32xf32> to vector<64x32xf32>
    %c0_67 = arith.constant 0 : index
    %c0_68 = arith.constant 0 : index
    %110 = vector.load %arg10[%c0_67, %c0_68] : memref<32x32xf32, #tpu.memory_space<vmem>>, vector<32x32xf32>
    %cst_69 = arith.constant dense<0.000000e+00> : vector<64x32xf32>
    %111 = tpu.matmul %109, %110, %cst_69 {dimension_numbers = #tpu.dot_dimension_numbers<[1], [0], [0], [1], [0, 0, 1, 1], [], []>} : vector<64x32xf32>, vector<32x32xf32>, vector<64x32xf32> -> vector<64x32xf32>
    %c0_70 = arith.constant 0 : index
    %c0_71 = arith.constant 0 : index
    %112 = vector.load %arg11[%c0_70, %c0_71] : memref<1x32xf32, #tpu.memory_space<vmem>>, vector<1x32xf32>
    %113 = vector.broadcast %112 : vector<1x32xf32> to vector<64x32xf32>
    %114 = arith.addf %111, %113 : vector<64x32xf32>
    %115 = vector.shape_cast %114 : vector<64x32xf32> to vector<4x16x32xf32>
    %c0_72 = arith.constant 0 : index
    %c0_73 = arith.constant 0 : index
    %c0_74 = arith.constant 0 : index
    %116 = vector.load %arg12[%c0_72, %c0_73, %c0_74] : memref<4x16x32xf32, #tpu.memory_space<vmem>>, vector<4x16x32xf32>
    tpu.vector_store %arg12[%c0_72, %c0_73, %c0_74], %115 {strides = array<i32>} : memref<4x16x32xf32, #tpu.memory_space<vmem>>, vector<4x16x32xf32>,
    return
  }
  func.func @transform_0(%arg0: i32) -> (i32, i32, i32) {
    %c0_i32 = arith.constant 0 : i32
    %c0_i32_0 = arith.constant 0 : i32
    %c0_i32_1 = arith.constant 0 : i32
    return %arg0, %c0_i32, %c0_i32_0 : i32, i32, i32
  }
  func.func @transform_1(%arg0: i32) -> (i32, i32, i32) {
    %c0_i32 = arith.constant 0 : i32
    %c0_i32_0 = arith.constant 0 : i32
    %c0_i32_1 = arith.constant 0 : i32
    return %arg0, %c0_i32, %c0_i32_0 : i32, i32, i32
  }
  func.func @transform_2(%arg0: i32) -> (i32, i32, i32) {
    %c0_i32 = arith.constant 0 : i32
    %c0_i32_0 = arith.constant 0 : i32
    %c0_i32_1 = arith.constant 0 : i32
    return %arg0, %c0_i32, %c0_i32_0 : i32, i32, i32
  }
  func.func @transform_3(%arg0: i32) -> (i32, i32) {
    %c0_i32 = arith.constant 0 : i32
    %c0_i32_0 = arith.constant 0 : i32
    %c0_i32_1 = arith.constant 0 : i32
    return %c0_i32, %c0_i32_0 : i32, i32
  }
  func.func @transform_4(%arg0: i32) -> (i32, i32) {
    %c0_i32 = arith.constant 0 : i32
    %c0_i32_0 = arith.constant 0 : i32
    %c0_i32_1 = arith.constant 0 : i32
    return %c0_i32, %c0_i32_0 : i32, i32
  }
  func.func @transform_5(%arg0: i32) -> (i32, i32) {
    %c0_i32 = arith.constant 0 : i32
    %c0_i32_0 = arith.constant 0 : i32
    %c0_i32_1 = arith.constant 0 : i32
    return %c0_i32, %c0_i32_0 : i32, i32
  }
  func.func @transform_6(%arg0: i32) -> (i32, i32) {
    %c0_i32 = arith.constant 0 : i32
    %c0_i32_0 = arith.constant 0 : i32
    %c0_i32_1 = arith.constant 0 : i32
    return %c0_i32, %c0_i32_0 : i32, i32
  }
  func.func @transform_7(%arg0: i32) -> (i32, i32) {
    %c0_i32 = arith.constant 0 : i32
    %c0_i32_0 = arith.constant 0 : i32
    %c0_i32_1 = arith.constant 0 : i32
    return %c0_i32, %c0_i32_0 : i32, i32
  }
  func.func @transform_8(%arg0: i32) -> (i32, i32) {
    %c0_i32 = arith.constant 0 : i32
    %c0_i32_0 = arith.constant 0 : i32
    %c0_i32_1 = arith.constant 0 : i32
    return %c0_i32, %c0_i32_0 : i32, i32
  }
  func.func @transform_9(%arg0: i32) -> (i32, i32) {
    %c0_i32 = arith.constant 0 : i32
    %c0_i32_0 = arith.constant 0 : i32
    %c0_i32_1 = arith.constant 0 : i32
    return %c0_i32, %c0_i32_0 : i32, i32
  }
  func.func @transform_10(%arg0: i32) -> (i32, i32) {
    %c0_i32 = arith.constant 0 : i32
    %c0_i32_0 = arith.constant 0 : i32
    %c0_i32_1 = arith.constant 0 : i32
    return %c0_i32, %c0_i32_0 : i32, i32
  }
  func.func @transform_11(%arg0: i32) -> (i32, i32, i32) {
    %c0_i32 = arith.constant 0 : i32
    %c0_i32_0 = arith.constant 0 : i32
    %c0_i32_1 = arith.constant 0 : i32
    return %arg0, %c0_i32, %c0_i32_0 : i32, i32, i32
  }
  func.func @transform_12(%arg0: i32) -> (i32, i32, i32, i32) {
    %c0_i32 = arith.constant 0 : i32
    %c0_i32_0 = arith.constant 0 : i32
    %c0_i32_1 = arith.constant 0 : i32
    %c0_i32_2 = arith.constant 0 : i32
    return %c0_i32, %arg0, %c0_i32_0, %c0_i32_1 : i32, i32, i32, i32
  }
}

</mosaic_0001>

<llo_original>
// kernel: _lambda_.1
$region0: #{_lambda_.1}
  #allocation0 [shape = 'u32[]', space=smem, size = 0x4, offset = 0x4, fixed_abs, tag = 'smem constant byte address 0x4 - core index']
  #allocation1 [shape = 'u32[144,128]{1,0:T(1,128)}', space=vmem, size = 0x12000, scoped, tag = 'internal scratch']
  #allocation2 [shape = 'f32[4,16,32]{2,1,0:T(8,128)}', space=vmem, size = 0x8000, scoped, tag = 'scratch operand']
  %s0 = inlined_call_operand.hbm [shape: f32[8,16,32], index: 0, kind: input, shape index: {}, may-alias: {0,1,2}]
  %s1 = inlined_call_operand.hbm [shape: f32[8,16,32], index: 1, kind: input, shape index: {}, may-alias: {0,1,2}]
  %s2 = inlined_call_operand.hbm [shape: f32[8,16,32], index: 2, kind: input, shape index: {}, may-alias: {0,1,2}]
  %s3 = inlined_call_operand.hbm [shape: f32[32,32], index: 3, kind: input, shape index: {}]
  %s4 = inlined_call_operand.vmem [shape: f32[1,32], index: 4, kind: input, shape index: {}]
  %s5 = inlined_call_operand.hbm [shape: f32[32,32], index: 5, kind: input, shape index: {}]
  %s6 = inlined_call_operand.hbm [shape: f32[1,32], index: 6, kind: input, shape index: {}]
  %s7 = inlined_call_operand.hbm [shape: f32[32,32], index: 7, kind: input, shape index: {}]
  %s8 = inlined_call_operand.vmem [shape: f32[1,32], index: 8, kind: input, shape index: {}]
  %s9 = inlined_call_operand.hbm [shape: f32[32,32], index: 9, kind: input, shape index: {}]
  %s10 = inlined_call_operand.vmem [shape: f32[1,32], index: 10, kind: input, shape index: {}]
  %s11 = inlined_call_operand.hbm [shape: f32[8,16,32], index: 11, kind: output, shape index: {0}]
  %s12 = inlined_call_operand.vmem [shape: f32[4,8,16,16], index: 12, kind: output, shape index: {1}]
  %13 = xla_tuple %s11, %s12
  %s14 = sld [smem:[#allocation0]]
  $region151: #{_lambda_.1} parent=0
    _
  %s16 = ssub.s32 1, %s14
  %s17 = scalar_select 0, %s16, %s14
  $region1: #{_lambda_.1} parent=0
    #allocation3 [shape = 'u8[65536]{0}', space=vmem, size = 0x10000, scoped, tag = 'input window, operand 0']
    #allocation4 [shape = 's32[2]{0}', space=sflag, size = 0x8, scoped, tag = 'scoped memory for _lambda_.1']
    #allocation5 [shape = 's32[2]{0}', space=sflag, size = 0x8, scoped, tag = 'scoped memory for _lambda_.1']
    #allocation6 [shape = 'u8[65536]{0}', space=vmem, size = 0x10000, scoped, tag = 'input window, operand 1']
    #allocation7 [shape = 's32[2]{0}', space=sflag, size = 0x8, scoped, tag = 'scoped memory for _lambda_.1']
    #allocation8 [shape = 'u8[65536]{0}', space=vmem, size = 0x10000, scoped, tag = 'input window, operand 2']
    #allocation9 [shape = 'u8[16384]{0}', space=vmem, size = 0x4000, scoped, tag = 'input window, operand 3, single buffered']
    #allocation10 [shape = 's32[1]{0}', space=sflag, size = 0x4, scoped, tag = 'scoped memory for _lambda_.1']
    #allocation11 [shape = 'u8[16384]{0}', space=vmem, size = 0x4000, scoped, tag = 'input window, operand 5, single buffered']
    #allocation12 [shape = 'u8[512]{0}', space=vmem, size = 0x400, scoped, tag = 'input window, operand 6, single buffered']
    #allocation13 [shape = 's32[1]{0}', space=sflag, size = 0x4, scoped, tag = 'scoped memory for _lambda_.1']
    #allocation14 [shape = 'u8[16384]{0}', space=vmem, size = 0x4000, scoped, tag = 'input window, operand 7, single buffered']
    #allocation15 [shape = 'u8[16384]{0}', space=vmem, size = 0x4000, scoped, tag = 'input window, operand 9, single buffered']
    #allocation16 [shape = 's32[1]{0}', space=sflag, size = 0x4, scoped, tag = 'scoped memory for _lambda_.1']
    #allocation17 [shape = 'u8[65536]{0}', space=vmem, size = 0x10000, scoped, tag = 'output window, operand 0']
    #allocation18 [shape = 'u8[262144]{0}', space=vmem, size = 0x40000, scoped, tag = 'output window, operand 1']
    %18 = vsyncpa [#allocation4], 0
    %s19 = scalar_lea.sflag [#allocation4], 1
    %20 = vsyncpa %s19, 0
    %21 = vsyncpa [#allocation7], 0
    %s22 = scalar_lea.sflag [#allocation7], 1
    %23 = vsyncpa %s22, 0
    %24 = vsyncpa [#allocation10], 0
    %25 = vsyncpa [#allocation13], 0
    %26 = vsyncpa [#allocation16], 0
    %27 = vsyncpa [#allocation5], 0
    %s28 = scalar_lea.sflag [#allocation5], 1
    %29 = vsyncpa %s28, 0
    loop: start=0, step=1, limit=4
    $region2: #{_lambda_.1} parent=1 // loop_pre_header
      _
    $region3: #{_lambda_.1} parent=1 // loop_header
      %s31 = sphi 0, %s35
      %p32 = scmp.ge.s32.totalorder %s31, 4
      %s41 = sphi 0, %s43
      %s44 = sphi 0, %s41
      %s45 = sphi 0, %s44
      %s61 = sphi 0, %s45
      %s67 = sphi 0, %s69
      %s70 = sphi 0, %s67
      %s71 = sphi 0, %s70
      %s87 = sphi 0, %s71
      %s93 = sphi 0, %s95
      %s96 = sphi 0, %s93
      %s97 = sphi 0, %s96
      %s113 = sphi 0, %s97
      %s117 = sphi 0, %s117
      %s119 = sphi 0, %s117
      %s120 = sphi 0, %s119
      %s134 = sphi 0, %s120
      %s138 = sphi 0, %s138
      %s140 = sphi 0, %s138
      %s141 = sphi 0, %s140
      %s155 = sphi 0, %s141
      %s159 = sphi 0, %s159
      %s161 = sphi 0, %s159
      %s162 = sphi 0, %s161
      %s176 = sphi 0, %s162
      %s180 = sphi 0, %s180
      %s182 = sphi 0, %s180
      %s183 = sphi 0, %s182
      %s197 = sphi 0, %s183
      %s201 = sphi 0, %s201
      %s203 = sphi 0, %s201
      %s204 = sphi 0, %s203
      %s218 = sphi 0, %s204
      %s222 = sphi 0, %s222
      %s224 = sphi 0, %s222
      %s225 = sphi 0, %s224
      %s239 = sphi 0, %s225
      %s243 = sphi 0, %s243
      %s245 = sphi 0, %s243
      %s246 = sphi 0, %s245
      %s260 = sphi 0, %s246
      %s264 = sphi 0, %s264
      %s266 = sphi 0, %s264
      %s267 = sphi 0, %s266
      %s281 = sphi 0, %s267
      %s287 = sphi 0, %s289
      %s290 = sphi 0, %s287
      %s291 = sphi 0, %s290
      %s307 = sphi 0, %s291
      %s313 = sphi 0, %s315
      %s316 = sphi 0, %s313
      %s317 = sphi 0, %s316
      %s333 = sphi 0, %s317
    $region4: #{_lambda_.1} parent=1 // loop_header_branch
      %34 = sbr.rel (%p32) target = $region8
    $region5: #{_lambda_.1} parent=1 // loop_body
      %s36 = ssub.s32 %s31, 1
      %s37 = ssub.s32 %s31, 2
      %s38 = sadd.s32 %s31, 1
      %s39 = ssub.s32 %s31, %s38
      %p40 = scmp.eq.s32.totalorder %s39, 0
      %s42 = sadd.s32 %s41, 1
      %s43 = scalar_select %p40, %s41, %s42
      %p46 = pneg %p40
      %p47 = scmp.eq.s32.totalorder %s31, 1
      %p48 = por %p46, %p47
      %p49 = scmp.ne.s32.totalorder %s41, %s44
      %p50 = scmp.eq.s32.totalorder %s31, 0
      %p51 = por %p49, %p50
      %p52 = scmp.ne.s32.totalorder %s41, %s44
      %p53 = scmp.eq.s32.totalorder %s36, 1
      %p54 = por %p52, %p53
      %p55 = scmp.ne.s32.totalorder %s44, %s45
      %p56 = scmp.eq.s32.totalorder %s36, 0
      %p57 = por %p55, %p56
      %p58 = scmp.ne.s32.totalorder %s44, %s45
      %p59 = scmp.eq.s32.totalorder %s37, 1
      %p60 = por %p58, %p59
      %p62 = scmp.ne.s32.totalorder %s45, %s61
      %p63 = scmp.eq.s32.totalorder %s37, 0
      %p64 = por %p62, %p63
      %s65 = ssub.s32 %s31, %s38
      %p66 = scmp.eq.s32.totalorder %s65, 0
      %s68 = sadd.s32 %s67, 1
      %s69 = scalar_select %p66, %s67, %s68
      %p72 = pneg %p66
      %p73 = scmp.eq.s32.totalorder %s31, 1
      %p74 = por %p72, %p73
      %p75 = scmp.ne.s32.totalorder %s67, %s70
      %p76 = scmp.eq.s32.totalorder %s31, 0
      %p77 = por %p75, %p76
      %p78 = scmp.ne.s32.totalorder %s67, %s70
      %p79 = scmp.eq.s32.totalorder %s36, 1
      %p80 = por %p78, %p79
      %p81 = scmp.ne.s32.totalorder %s70, %s71
      %p82 = scmp.eq.s32.totalorder %s36, 0
      %p83 = por %p81, %p82
      %p84 = scmp.ne.s32.totalorder %s70, %s71
      %p85 = scmp.eq.s32.totalorder %s37, 1
      %p86 = por %p84, %p85
      %p88 = scmp.ne.s32.totalorder %s71, %s87
      %p89 = scmp.eq.s32.totalorder %s37, 0
      %p90 = por %p88, %p89
      %s91 = ssub.s32 %s31, %s38
      %p92 = scmp.eq.s32.totalorder %s91, 0
      %s94 = sadd.s32 %s93, 1
      %s95 = scalar_select %p92, %s93, %s94
      %p98 = pneg %p92
      %p99 = scmp.eq.s32.totalorder %s31, 1
      %p100 = por %p98, %p99
      %p101 = scmp.ne.s32.totalorder %s93, %s96
      %p102 = scmp.eq.s32.totalorder %s31, 0
      %p103 = por %p101, %p102
      %p104 = scmp.ne.s32.totalorder %s93, %s96
      %p105 = scmp.eq.s32.totalorder %s36, 1
      %p106 = por %p104, %p105
      %p107 = scmp.ne.s32.totalorder %s96, %s97
      %p108 = scmp.eq.s32.totalorder %s36, 0
      %p109 = por %p107, %p108
      %p110 = scmp.ne.s32.totalorder %s96, %s97
      %p111 = scmp.eq.s32.totalorder %s37, 1
      %p112 = por %p110, %p111
      %p114 = scmp.ne.s32.totalorder %s97, %s113
      %p115 = scmp.eq.s32.totalorder %s37, 0
      %p116 = por %p114, %p115
      %s118 = sadd.s32 %s117, 1
      %p121 = scmp.eq.s32.totalorder %s31, 1
      %p122 = scmp.ne.s32.totalorder %s117, %s119
      %p123 = scmp.eq.s32.totalorder %s31, 0
      %p124 = por %p122, %p123
      %p125 = scmp.ne.s32.totalorder %s117, %s119
      %p126 = scmp.eq.s32.totalorder %s36, 1
      %p127 = por %p125, %p126
      %p128 = scmp.ne.s32.totalorder %s119, %s120
      %p129 = scmp.eq.s32.totalorder %s36, 0
      %p130 = por %p128, %p129
      %p131 = scmp.ne.s32.totalorder %s119, %s120
      %p132 = scmp.eq.s32.totalorder %s37, 1
      %p133 = por %p131, %p132
      %p135 = scmp.ne.s32.totalorder %s120, %s134
      %p136 = scmp.eq.s32.totalorder %s37, 0
      %p137 = por %p135, %p136
      %s139 = sadd.s32 %s138, 1
      %p142 = scmp.eq.s32.totalorder %s31, 1
      %p143 = scmp.ne.s32.totalorder %s138, %s140
      %p144 = scmp.eq.s32.totalorder %s31, 0
      %p145 = por %p143, %p144
      %p146 = scmp.ne.s32.totalorder %s138, %s140
      %p147 = scmp.eq.s32.totalorder %s36, 1
      %p148 = por %p146, %p147
      %p149 = scmp.ne.s32.totalorder %s140, %s141
      %p150 = scmp.eq.s32.totalorder %s36, 0
      %p151 = por %p149, %p150
      %p152 = scmp.ne.s32.totalorder %s140, %s141
      %p153 = scmp.eq.s32.totalorder %s37, 1
      %p154 = por %p152, %p153
      %p156 = scmp.ne.s32.totalorder %s141, %s155
      %p157 = scmp.eq.s32.totalorder %s37, 0
      %p158 = por %p156, %p157
      %s160 = sadd.s32 %s159, 1
      %p163 = scmp.eq.s32.totalorder %s31, 1
      %p164 = scmp.ne.s32.totalorder %s159, %s161
      %p165 = scmp.eq.s32.totalorder %s31, 0
      %p166 = por %p164, %p165
      %p167 = scmp.ne.s32.totalorder %s159, %s161
      %p168 = scmp.eq.s32.totalorder %s36, 1
      %p169 = por %p167, %p168
      %p170 = scmp.ne.s32.totalorder %s161, %s162
      %p171 = scmp.eq.s32.totalorder %s36, 0
      %p172 = por %p170, %p171
      %p173 = scmp.ne.s32.totalorder %s161, %s162
      %p174 = scmp.eq.s32.totalorder %s37, 1
      %p175 = por %p173, %p174
      %p177 = scmp.ne.s32.totalorder %s162, %s176
      %p178 = scmp.eq.s32.totalorder %s37, 0
      %p179 = por %p177, %p178
      %s181 = sadd.s32 %s180, 1
      %p184 = scmp.eq.s32.totalorder %s31, 1
      %p185 = scmp.ne.s32.totalorder %s180, %s182
      %p186 = scmp.eq.s32.totalorder %s31, 0
      %p187 = por %p185, %p186
      %p188 = scmp.ne.s32.totalorder %s180, %s182
      %p189 = scmp.eq.s32.totalorder %s36, 1
      %p190 = por %p188, %p189
      %p191 = scmp.ne.s32.totalorder %s182, %s183
      %p192 = scmp.eq.s32.totalorder %s36, 0
      %p193 = por %p191, %p192
      %p194 = scmp.ne.s32.totalorder %s182, %s183
      %p195 = scmp.eq.s32.totalorder %s37, 1
      %p196 = por %p194, %p195
      %p198 = scmp.ne.s32.totalorder %s183, %s197
      %p199 = scmp.eq.s32.totalorder %s37, 0
      %p200 = por %p198, %p199
      %s202 = sadd.s32 %s201, 1
      %p205 = scmp.eq.s32.totalorder %s31, 1
      %p206 = scmp.ne.s32.totalorder %s201, %s203
      %p207 = scmp.eq.s32.totalorder %s31, 0
      %p208 = por %p206, %p207
      %p209 = scmp.ne.s32.totalorder %s201, %s203
      %p210 = scmp.eq.s32.totalorder %s36, 1
      %p211 = por %p209, %p210
      %p212 = scmp.ne.s32.totalorder %s203, %s204
      %p213 = scmp.eq.s32.totalorder %s36, 0
      %p214 = por %p212, %p213
      %p215 = scmp.ne.s32.totalorder %s203, %s204
      %p216 = scmp.eq.s32.totalorder %s37, 1
      %p217 = por %p215, %p216
      %p219 = scmp.ne.s32.totalorder %s204, %s218
      %p220 = scmp.eq.s32.totalorder %s37, 0
      %p221 = por %p219, %p220
      %s223 = sadd.s32 %s222, 1
      %p226 = scmp.eq.s32.totalorder %s31, 1
      %p227 = scmp.ne.s32.totalorder %s222, %s224
      %p228 = scmp.eq.s32.totalorder %s31, 0
      %p229 = por %p227, %p228
      %p230 = scmp.ne.s32.totalorder %s222, %s224
      %p231 = scmp.eq.s32.totalorder %s36, 1
      %p232 = por %p230, %p231
      %p233 = scmp.ne.s32.totalorder %s224, %s225
      %p234 = scmp.eq.s32.totalorder %s36, 0
      %p235 = por %p233, %p234
      %p236 = scmp.ne.s32.totalorder %s224, %s225
      %p237 = scmp.eq.s32.totalorder %s37, 1
      %p238 = por %p236, %p237
      %p240 = scmp.ne.s32.totalorder %s225, %s239
      %p241 = scmp.eq.s32.totalorder %s37, 0
      %p242 = por %p240, %p241
      %s244 = sadd.s32 %s243, 1
      %p247 = scmp.eq.s32.totalorder %s31, 1
      %p248 = scmp.ne.s32.totalorder %s243, %s245
      %p249 = scmp.eq.s32.totalorder %s31, 0
      %p250 = por %p248, %p249
      %p251 = scmp.ne.s32.totalorder %s243, %s245
      %p252 = scmp.eq.s32.totalorder %s36, 1
      %p253 = por %p251, %p252
      %p254 = scmp.ne.s32.totalorder %s245, %s246
      %p255 = scmp.eq.s32.totalorder %s36, 0
      %p256 = por %p254, %p255
      %p257 = scmp.ne.s32.totalorder %s245, %s246
      %p258 = scmp.eq.s32.totalorder %s37, 1
      %p259 = por %p257, %p258
      %p261 = scmp.ne.s32.totalorder %s246, %s260
      %p262 = scmp.eq.s32.totalorder %s37, 0
      %p263 = por %p261, %p262
      %s265 = sadd.s32 %s264, 1
      %p268 = scmp.eq.s32.totalorder %s31, 1
      %p269 = scmp.ne.s32.totalorder %s264, %s266
      %p270 = scmp.eq.s32.totalorder %s31, 0
      %p271 = por %p269, %p270
      %p272 = scmp.ne.s32.totalorder %s264, %s266
      %p273 = scmp.eq.s32.totalorder %s36, 1
      %p274 = por %p272, %p273
      %p275 = scmp.ne.s32.totalorder %s266, %s267
      %p276 = scmp.eq.s32.totalorder %s36, 0
      %p277 = por %p275, %p276
      %p278 = scmp.ne.s32.totalorder %s266, %s267
      %p279 = scmp.eq.s32.totalorder %s37, 1
      %p280 = por %p278, %p279
      %p282 = scmp.ne.s32.totalorder %s267, %s281
      %p283 = scmp.eq.s32.totalorder %s37, 0
      %p284 = por %p282, %p283
      %s285 = ssub.s32 %s31, %s38
      %p286 = scmp.eq.s32.totalorder %s285, 0
      %s288 = sadd.s32 %s287, 1
      %s289 = scalar_select %p286, %s287, %s288
      %p292 = pneg %p286
      %p293 = scmp.eq.s32.totalorder %s31, 1
      %p294 = por %p292, %p293
      %p295 = scmp.ne.s32.totalorder %s287, %s290
      %p296 = scmp.eq.s32.totalorder %s31, 0
      %p297 = por %p295, %p296
      %p298 = scmp.ne.s32.totalorder %s287, %s290
      %p299 = scmp.eq.s32.totalorder %s36, 1
      %p300 = por %p298, %p299
      %p301 = scmp.ne.s32.totalorder %s290, %s291
      %p302 = scmp.eq.s32.totalorder %s36, 0
      %p303 = por %p301, %p302
      %p304 = scmp.ne.s32.totalorder %s290, %s291
      %p305 = scmp.eq.s32.totalorder %s37, 1
      %p306 = por %p304, %p305
      %p308 = scmp.ne.s32.totalorder %s291, %s307
      %p309 = scmp.eq.s32.totalorder %s37, 0
      %p310 = por %p308, %p309
      %s311 = ssub.s32 %s31, %s38
      %p312 = scmp.eq.s32.totalorder %s311, 0
      %s314 = sadd.s32 %s313, 1
      %s315 = scalar_select %p312, %s313, %s314
      %p318 = pneg %p312
      %p319 = scmp.eq.s32.totalorder %s31, 1
      %p320 = por %p318, %p319
      %p321 = scmp.ne.s32.totalorder %s313, %s316
      %p322 = scmp.eq.s32.totalorder %s31, 0
      %p323 = por %p321, %p322
      %p324 = scmp.ne.s32.totalorder %s313, %s316
      %p325 = scmp.eq.s32.totalorder %s36, 1
      %p326 = por %p324, %p325
      %p327 = scmp.ne.s32.totalorder %s316, %s317
      %p328 = scmp.eq.s32.totalorder %s36, 0
      %p329 = por %p327, %p328
      %p330 = scmp.ne.s32.totalorder %s316, %s317
      %p331 = scmp.eq.s32.totalorder %s37, 1
      %p332 = por %p330, %p331
      %p334 = scmp.ne.s32.totalorder %s317, %s333
      %p335 = scmp.eq.s32.totalorder %s37, 0
      %p336 = por %p334, %p335
      %p337 = scmp.le.s32.totalorder 1, %s31
      %p338 = scmp.lt.s32.totalorder %s31, 3
      %p339 = pnand %p337, %p338
      %p340 = pneg %p339
      // Predicated region
      $region9: #{_lambda_.1} parent=5 // pred_check
        _
      $region10: #{_lambda_.1} parent=5 // pred_check_branch
        %342 = sbr.rel (%p339) target = $region12
      $region11: #{_lambda_.1} parent=5 // pred_region
        %s343 = ssub.s32 %s31, 1
        // Predicated region
        $region13: #{_lambda_.1} parent=11 // pred_check
          %p344 = pneg %p130
        $region14: #{_lambda_.1} parent=11 // pred_check_branch
          %346 = sbr.rel (%p344) target = $region16
        $region15: #{_lambda_.1} parent=11 // pred_region
          %s348 = ssub.s32 512, 512
          %349 = vsyncadd [#allocation10], %s348
          %s350 = sshll.u32 [#allocation9], 4
          %s351 = int_to_ptr.vmem [resolvable:$true] %s350
          %356 = dma.hbm_to_vmem [thread:$0]  %s3, 512, %s351, [#allocation10], 128, 128, 8
        $region16: #{_lambda_.1} parent=11 // pred_fallthru
          _
        // Predicated region
        $region17: #{_lambda_.1} parent=11 // pred_check
          %p357 = pneg %p151
        $region18: #{_lambda_.1} parent=11 // pred_check_branch
          %359 = sbr.rel (%p357) target = $region20
        $region19: #{_lambda_.1} parent=11 // pred_region
          _
        $region20: #{_lambda_.1} parent=11 // pred_fallthru
          _
        // Predicated region
        $region21: #{_lambda_.1} parent=11 // pred_check
          %p360 = pneg %p172
        $region22: #{_lambda_.1} parent=11 // pred_check_branch
          %362 = sbr.rel (%p360) target = $region24
        $region23: #{_lambda_.1} parent=11 // pred_region
          %s364 = ssub.s32 512, 512
          %365 = vsyncadd [#allocation10], %s364
          %s366 = sshll.u32 [#allocation11], 4
          %s367 = int_to_ptr.vmem [resolvable:$true] %s366
          %372 = dma.hbm_to_vmem [thread:$0]  %s5, 512, %s367, [#allocation10], 128, 128, 8
        $region24: #{_lambda_.1} parent=11 // pred_fallthru
          _
        // Predicated region
        $region25: #{_lambda_.1} parent=11 // pred_check
          %p373 = pneg %p193
        $region26: #{_lambda_.1} parent=11 // pred_check_branch
          %375 = sbr.rel (%p373) target = $region28
        $region27: #{_lambda_.1} parent=11 // pred_region
          %s377 = ssub.s32 16, 16
          %378 = vsyncadd [#allocation13], %s377
          %s380 = sshll.u32 [#allocation12], 4
          %s381 = int_to_ptr.vmem [resolvable:$true] %s380
          %383 = dma.hbm_to_vmem [thread:$0]  %s6, 16, %s381, [#allocation13]
        $region28: #{_lambda_.1} parent=11 // pred_fallthru
          _
        // Predicated region
        $region29: #{_lambda_.1} parent=11 // pred_check
          %p384 = pneg %p214
        $region30: #{_lambda_.1} parent=11 // pred_check_branch
          %386 = sbr.rel (%p384) target = $region32
        $region31: #{_lambda_.1} parent=11 // pred_region
          %s388 = ssub.s32 512, 512
          %389 = vsyncadd [#allocation13], %s388
          %s390 = sshll.u32 [#allocation14], 4
          %s391 = int_to_ptr.vmem [resolvable:$true] %s390
          %396 = dma.hbm_to_vmem [thread:$0]  %s7, 512, %s391, [#allocation13], 128, 128, 8
        $region32: #{_lambda_.1} parent=11 // pred_fallthru
          _
        // Predicated region
        $region33: #{_lambda_.1} parent=11 // pred_check
          %p397 = pneg %p235
        $region34: #{_lambda_.1} parent=11 // pred_check_branch
          %399 = sbr.rel (%p397) target = $region36
        $region35: #{_lambda_.1} parent=11 // pred_region
          _
        $region36: #{_lambda_.1} parent=11 // pred_fallthru
          _
        // Predicated region
        $region37: #{_lambda_.1} parent=11 // pred_check
          %p400 = pneg %p256
        $region38: #{_lambda_.1} parent=11 // pred_check_branch
          %402 = sbr.rel (%p400) target = $region40
        $region39: #{_lambda_.1} parent=11 // pred_region
          %s404 = ssub.s32 512, 512
          %405 = vsyncadd [#allocation16], %s404
          %s406 = sshll.u32 [#allocation15], 4
          %s407 = int_to_ptr.vmem [resolvable:$true] %s406
          %412 = dma.hbm_to_vmem [thread:$0]  %s9, 512, %s407, [#allocation16], 128, 128, 8
        $region40: #{_lambda_.1} parent=11 // pred_fallthru
          _
        // Predicated region
        $region41: #{_lambda_.1} parent=11 // pred_check
          %p413 = pneg %p277
        $region42: #{_lambda_.1} parent=11 // pred_check_branch
          %415 = sbr.rel (%p413) target = $region44
        $region43: #{_lambda_.1} parent=11 // pred_region
          _
        $region44: #{_lambda_.1} parent=11 // pred_fallthru
          _
      $region12: #{_lambda_.1} parent=5 // pred_fallthru
        _
      %p416 = scmp.lt.s32.totalorder %s31, 2
      // Predicated region
      $region45: #{_lambda_.1} parent=5 // pred_check
        %p417 = pneg %p416
      $region46: #{_lambda_.1} parent=5 // pred_check_branch
        %419 = sbr.rel (%p417) target = $region48
      $region47: #{_lambda_.1} parent=5 // pred_region
        // Predicated region
        $region49: #{_lambda_.1} parent=47 // pred_check
          %p420 = pneg %p51
        $region50: #{_lambda_.1} parent=47 // pred_check_branch
          %422 = sbr.rel (%p420) target = $region52
        $region51: #{_lambda_.1} parent=47 // pred_region
          %s423 = sand.u32 %s41, 1
          %s424 = scalar_lea.sflag [#allocation4], %s423
          %s425 = sand.u32 %s41, 1
          %s426 = smul.addr %s425, 64
          %s427 = scalar_lea.vmem [#allocation3], %s426
          %s428 = smul.u32 4, %s31
          %s430 = ssub.s32 1024, 1024
          %431 = vsyncadd %s424, %s430
          %s432 = smul.addr %s428, 2
          %s433 = smul.addr %s432, 128
          %s434 = scalar_lea.hbm %s0, %s433
          %s435 = sshll.u32 %s427, 4
          %s436 = int_to_ptr.vmem [resolvable:$true] %s435
          %441 = dma.hbm_to_vmem [thread:$0]  %s434, 1024, %s436, %s424, 128, 128, 8
        $region52: #{_lambda_.1} parent=47 // pred_fallthru
          _
        // Predicated region
        $region53: #{_lambda_.1} parent=47 // pred_check
          %p442 = pneg %p77
        $region54: #{_lambda_.1} parent=47 // pred_check_branch
          %444 = sbr.rel (%p442) target = $region56
        $region55: #{_lambda_.1} parent=47 // pred_region
          %s445 = sand.u32 %s31, 1
          %s446 = scalar_lea.sflag [#allocation7], %s445
          %s447 = sand.u32 %s67, 1
          %s448 = smul.addr %s447, 64
          %s449 = scalar_lea.vmem [#allocation6], %s448
          %s450 = smul.u32 4, %s31
          %s452 = ssub.s32 1024, 1024
          %453 = vsyncadd %s446, %s452
          %s454 = smul.addr %s450, 2
          %s455 = smul.addr %s454, 128
          %s456 = scalar_lea.hbm %s1, %s455
          %s457 = sshll.u32 %s449, 4
          %s458 = int_to_ptr.vmem [resolvable:$true] %s457
          %463 = dma.hbm_to_vmem [thread:$0]  %s456, 1024, %s458, %s446, 128, 128, 8
        $region56: #{_lambda_.1} parent=47 // pred_fallthru
          _
        // Predicated region
        $region57: #{_lambda_.1} parent=47 // pred_check
          %p464 = pneg %p103
        $region58: #{_lambda_.1} parent=47 // pred_check_branch
          %466 = sbr.rel (%p464) target = $region60
        $region59: #{_lambda_.1} parent=47 // pred_region
          %s467 = sand.u32 %s31, 1
          %s468 = scalar_lea.sflag [#allocation7], %s467
          %s469 = sand.u32 %s93, 1
          %s470 = smul.addr %s469, 64
          %s471 = scalar_lea.vmem [#allocation8], %s470
          %s472 = smul.u32 4, %s31
          %s474 = ssub.s32 1024, 1024
          %475 = vsyncadd %s468, %s474
          %s476 = smul.addr %s472, 2
          %s477 = smul.addr %s476, 128
          %s478 = scalar_lea.hbm %s2, %s477
          %s479 = sshll.u32 %s471, 4
          %s480 = int_to_ptr.vmem [resolvable:$true] %s479
          %485 = dma.hbm_to_vmem [thread:$0]  %s478, 1024, %s480, %s468, 128, 128, 8
        $region60: #{_lambda_.1} parent=47 // pred_fallthru
          _
      $region48: #{_lambda_.1} parent=5 // pred_fallthru
        _
      %p486 = scmp.le.s32.totalorder 1, %s31
      %p487 = scmp.lt.s32.totalorder %s31, 3
      %p488 = pnand %p486, %p487
      %p489 = pneg %p488
      // Predicated region
      $region61: #{_lambda_.1} parent=5 // pred_check
        _
      $region62: #{_lambda_.1} parent=5 // pred_check_branch
        %491 = sbr.rel (%p488) target = $region64
      $region63: #{_lambda_.1} parent=5 // pred_region
        %s492 = ssub.s32 %s31, 1
        %s493 = sand.u32 %s44, 1
        %s494 = scalar_lea.sflag [#allocation4], %s493
        %s495 = sand.u32 %s44, 1
        %s496 = smul.addr %s495, 64
        %s497 = scalar_lea.vmem [#allocation3], %s496
        // Predicated region
        $region65: #{_lambda_.1} parent=63 // pred_check
          %p498 = pneg %p57
        $region66: #{_lambda_.1} parent=63 // pred_check_branch
          %500 = sbr.rel (%p498) target = $region68
        $region67: #{_lambda_.1} parent=63 // pred_region
          %501 = dma.done %s494, 1024
        $region68: #{_lambda_.1} parent=63 // pred_fallthru
          _
        %s502 = sand.u32 %s36, 1
        %s503 = scalar_lea.sflag [#allocation7], %s502
        %s504 = sand.u32 %s70, 1
        %s505 = smul.addr %s504, 64
        %s506 = scalar_lea.vmem [#allocation6], %s505
        // Predicated region
        $region69: #{_lambda_.1} parent=63 // pred_check
          %p507 = pneg %p83
        $region70: #{_lambda_.1} parent=63 // pred_check_branch
          %509 = sbr.rel (%p507) target = $region72
        $region71: #{_lambda_.1} parent=63 // pred_region
          %510 = dma.done %s503, 1024
        $region72: #{_lambda_.1} parent=63 // pred_fallthru
          _
        %s511 = sand.u32 %s36, 1
        %s512 = scalar_lea.sflag [#allocation7], %s511
        %s513 = sand.u32 %s96, 1
        %s514 = smul.addr %s513, 64
        %s515 = scalar_lea.vmem [#allocation8], %s514
        // Predicated region
        $region73: #{_lambda_.1} parent=63 // pred_check
          %p516 = pneg %p109
        $region74: #{_lambda_.1} parent=63 // pred_check_branch
          %518 = sbr.rel (%p516) target = $region76
        $region75: #{_lambda_.1} parent=63 // pred_region
          %519 = dma.done %s512, 1024
        $region76: #{_lambda_.1} parent=63 // pred_fallthru
          _
        // Predicated region
        $region77: #{_lambda_.1} parent=63 // pred_check
          %p520 = pneg %p130
        $region78: #{_lambda_.1} parent=63 // pred_check_branch
          %522 = sbr.rel (%p520) target = $region80
        $region79: #{_lambda_.1} parent=63 // pred_region
          %523 = dma.done [#allocation10], 512
        $region80: #{_lambda_.1} parent=63 // pred_fallthru
          _
        // Predicated region
        $region81: #{_lambda_.1} parent=63 // pred_check
          %p524 = pneg %p172
        $region82: #{_lambda_.1} parent=63 // pred_check_branch
          %526 = sbr.rel (%p524) target = $region84
        $region83: #{_lambda_.1} parent=63 // pred_region
          %527 = dma.done [#allocation10], 512
        $region84: #{_lambda_.1} parent=63 // pred_fallthru
          _
        // Predicated region
        $region85: #{_lambda_.1} parent=63 // pred_check
          %p528 = pneg %p193
        $region86: #{_lambda_.1} parent=63 // pred_check_branch
          %530 = sbr.rel (%p528) target = $region88
        $region87: #{_lambda_.1} parent=63 // pred_region
          %531 = dma.done [#allocation13], 16
        $region88: #{_lambda_.1} parent=63 // pred_fallthru
          _
        // Predicated region
        $region89: #{_lambda_.1} parent=63 // pred_check
          %p532 = pneg %p214
        $region90: #{_lambda_.1} parent=63 // pred_check_branch
          %534 = sbr.rel (%p532) target = $region92
        $region91: #{_lambda_.1} parent=63 // pred_region
          %535 = dma.done [#allocation13], 512
        $region92: #{_lambda_.1} parent=63 // pred_fallthru
          _
        // Predicated region
        $region93: #{_lambda_.1} parent=63 // pred_check
          %p536 = pneg %p256
        $region94: #{_lambda_.1} parent=63 // pred_check_branch
          %538 = sbr.rel (%p536) target = $region96
        $region95: #{_lambda_.1} parent=63 // pred_region
          %539 = dma.done [#allocation16], 512
        $region96: #{_lambda_.1} parent=63 // pred_fallthru
          _
        %s540 = sand.u32 %s44, 1
        %s541 = scalar_lea.sflag [#allocation4], %s540
        %s542 = sand.u32 %s44, 1
        %s543 = smul.addr %s542, 64
        %s544 = scalar_lea.vmem [#allocation3], %s543
        %p545 = pneg %p57
        %p546 = pneg %p54
        %s547 = sand.u32 %s36, 1
        %s548 = scalar_lea.sflag [#allocation7], %s547
        %s549 = sand.u32 %s70, 1
        %s550 = smul.addr %s549, 64
        %s551 = scalar_lea.vmem [#allocation6], %s550
        %p552 = pneg %p83
        %p553 = pneg %p80
        %s554 = sand.u32 %s36, 1
        %s555 = scalar_lea.sflag [#allocation7], %s554
        %s556 = sand.u32 %s96, 1
        %s557 = smul.addr %s556, 64
        %s558 = scalar_lea.vmem [#allocation8], %s557
        %p559 = pneg %p109
        %p560 = pneg %p106
        %p561 = pneg %p130
        %p562 = pneg %p127
        %p563 = pneg %p151
        %p564 = pneg %p148
        %p565 = pneg %p172
        %p566 = pneg %p169
        %p567 = pneg %p193
        %p568 = pneg %p190
        %p569 = pneg %p214
        %p570 = pneg %p211
        %p571 = pneg %p235
        %p572 = pneg %p232
        %p573 = pneg %p256
        %p574 = pneg %p253
        %p575 = pneg %p277
        %p576 = pneg %p274
        %p577 = pneg %p303
        %p578 = pneg %p300
        %s579 = sand.u32 %s290, 1
        %s580 = scalar_lea.sflag [#allocation5], %s579
        %s581 = sand.u32 %s290, 1
        %s582 = smul.addr %s581, 64
        %s583 = scalar_lea.vmem [#allocation17], %s582
        %p584 = pneg %p329
        %p585 = pneg %p326
        %s586 = sand.u32 %s316, 1
        %s587 = sand.u32 %s316, 1
        %s588 = smul.addr %s587, 256
        %s589 = scalar_lea.vmem [#allocation18], %s588
        %s590 = smul.u32 4, %s36
        %s591 = smul.u32 4, %s36
        %s592 = smul.u32 4, %s36
        %s593 = smul.u32 4, %s36
        %s594 = smul.u32 4, %s36
        %v595 = vld [vmem:[%s497] sm:$0xff]
        %v596 = vld [vmem:[%s497 + $0x8] sm:$0xff]
        %v597 = vld [vmem:[%s497 + $0x10] sm:$0xff]
        %v598 = vld [vmem:[%s497 + $0x18] sm:$0xff]
        %v599 = vld [vmem:[%s497 + $0x20] sm:$0xff]
        %v600 = vld [vmem:[%s497 + $0x28] sm:$0xff]
        %v601 = vld [vmem:[%s497 + $0x30] sm:$0xff]
        %v602 = vld [vmem:[%s497 + $0x38] sm:$0xff]
        %v603 = vld [vmem:[%s506] sm:$0xff]
        %v604 = vld [vmem:[%s506 + $0x8] sm:$0xff]
        %v605 = vld [vmem:[%s506 + $0x10] sm:$0xff]
        %v606 = vld [vmem:[%s506 + $0x18] sm:$0xff]
        %v607 = vld [vmem:[%s506 + $0x20] sm:$0xff]
        %v608 = vld [vmem:[%s506 + $0x28] sm:$0xff]
        %v609 = vld [vmem:[%s506 + $0x30] sm:$0xff]
        %v610 = vld [vmem:[%s506 + $0x38] sm:$0xff]
        %v611 = vld [vmem:[%s515] sm:$0xff]
        %v612 = vld [vmem:[%s515 + $0x8] sm:$0xff]
        %v613 = vld [vmem:[%s515 + $0x10] sm:$0xff]
        %v614 = vld [vmem:[%s515 + $0x18] sm:$0xff]
        %v615 = vld [vmem:[%s515 + $0x20] sm:$0xff]
        %v616 = vld [vmem:[%s515 + $0x28] sm:$0xff]
        %v617 = vld [vmem:[%s515 + $0x30] sm:$0xff]
        %v618 = vld [vmem:[%s515 + $0x38] sm:$0xff]
        %v619 = vld [vmem:[#allocation9] sm:$0xff]
        %v620 = vld [vmem:[#allocation9 + $0x8] sm:$0xff]
        %v621 = vld [vmem:[#allocation9 + $0x10] sm:$0xff]
        %v622 = vld [vmem:[#allocation9 + $0x18] sm:$0xff]
        %v623 = vld [vmem:[%s4] sm:$0x1]
        %v625 = vlaneseq
        %v626 = vshrl.u32 %v625, 7
        %v627 = vsub.s32 0, %v626
        %v628 = vrot.slane %v623, %v627
        %vm630 = vcmask 261120
        %v632 = vsel %vm630, %v595, 0
        %v635 = vsel %vm630, %v596, 0
        %v638 = vsel %vm630, %v597, 0
        %v641 = vsel %vm630, %v598, 0
        %v644 = vsel %vm630, %v599, 0
        %v647 = vsel %vm630, %v600, 0
        %v650 = vsel %vm630, %v601, 0
        %v653 = vsel %vm630, %v602, 0
        %655 = vmatprep.subr.mxu0 0.0
        %656 = vmatpush1.msra.mxu0 0.0
        %657 = vmatprep.subr.mxu0 0.0
        %658 = vmatpush1.msra.mxu0 0.0
        %659 = vmatprep.subr.mxu0 0.0
        %660 = vmatpush1.msra.mxu0 0.0
        %661 = vmatprep.subr.mxu0 0.0
        %662 = vmatpush1.msra.mxu0 0.0
        %663 = vmatprep.subr.mxu0 0.0
        %664 = vmatpush1.msra.mxu0 0.0
        %665 = vmatprep.subr.mxu0 0.0
        %666 = vmatpush1.msra.mxu0 0.0
        %667 = vmatprep.subr.mxu0 0.0
        %668 = vmatpush1.msra.mxu0 0.0
        %669 = vmatprep.subr.mxu0 0.0
        %670 = vmatpush1.msra.mxu0 0.0
        %671 = vmatprep.subr.mxu0 0.0
        %672 = vmatpush1.msra.mxu0 0.0
        %673 = vmatprep.subr.mxu0 0.0
        %674 = vmatpush1.msra.mxu0 0.0
        %675 = vmatprep.subr.mxu0 0.0
        %676 = vmatpush1.msra.mxu0 0.0
        %677 = vmatprep.subr.mxu0 0.0
        %678 = vmatpush1.msra.mxu0 0.0
        %679 = vmatprep.subr.mxu0 0.0
        %680 = vmatpush1.msra.mxu0 %v622
        %681 = vmatprep.subr.mxu0 0.0
        %682 = vmatpush1.msra.mxu0 %v621
        %683 = vmatprep.subr.mxu0 0.0
        %684 = vmatpush1.msra.mxu0 %v620
        %685 = vmatprep.subr.mxu0 0.0
        %686 = vmatpush1.msra.mxu0 %v619
        %687 = vmatprep.subr.mxu0 0.0
        %688 = vmatpush2.msra.mxu0 0.0
        %689 = vmatprep.subr.mxu0 0.0
        %690 = vmatpush2.msra.mxu0 0.0
        %691 = vmatprep.subr.mxu0 0.0
        %692 = vmatpush2.msra.mxu0 0.0
        %693 = vmatprep.subr.mxu0 0.0
        %694 = vmatpush2.msra.mxu0 0.0
        %695 = vmatprep.subr.mxu0 0.0
        %696 = vmatpush2.msra.mxu0 0.0
        %697 = vmatprep.subr.mxu0 0.0
        %698 = vmatpush2.msra.mxu0 0.0
        %699 = vmatprep.subr.mxu0 0.0
        %700 = vmatpush2.msra.mxu0 0.0
        %701 = vmatprep.subr.mxu0 0.0
        %702 = vmatpush2.msra.mxu0 0.0
        %703 = vmatprep.subr.mxu0 0.0
        %704 = vmatpush2.msra.mxu0 0.0
        %705 = vmatprep.subr.mxu0 0.0
        %706 = vmatpush2.msra.mxu0 0.0
        %707 = vmatprep.subr.mxu0 0.0
        %708 = vmatpush2.msra.mxu0 0.0
        %709 = vmatprep.subr.mxu0 0.0
        %710 = vmatpush2.msra.mxu0 0.0
        %711 = vmatprep.subr.mxu0 0.0
        %712 = vmatpush2.msra.mxu0 0.0
        %713 = vmatprep.subr.mxu0 0.0
        %714 = vmatpush2.msra.mxu0 0.0
        %715 = vmatprep.subr.mxu0 0.0
        %716 = vmatpush2.msra.mxu0 0.0
        %717 = vmatprep.subr.mxu0 0.0
        %718 = vmatpush2.msra.mxu0 0.0
        %719 = vmatprep.mubr.f32.mxu0 0.0
        %720 = vmatmul.mubr.f32.gmra.mxu0 %v632
        %v721 = vpop.f32.mrf.mxu0
        %v722 = vadd.f32 %v628, %v721
        %v723 = vpop.f32.mrf.mxu0
        %724 = vmatprep.mubr.f32.mxu0 0.0
        %725 = vmatmul.mubr.f32.gmra.mxu0 %v635
        %v726 = vpop.f32.mrf.mxu0
        %v727 = vadd.f32 %v628, %v726
        %v728 = vpop.f32.mrf.mxu0
        %729 = vmatprep.mubr.f32.mxu0 0.0
        %730 = vmatmul.mubr.f32.gmra.mxu0 %v638
        %v731 = vpop.f32.mrf.mxu0
        %v732 = vadd.f32 %v628, %v731
        %v733 = vpop.f32.mrf.mxu0
        %734 = vmatprep.mubr.f32.mxu0 0.0
        %735 = vmatmul.mubr.f32.gmra.mxu0 %v641
        %v736 = vpop.f32.mrf.mxu0
        %v737 = vadd.f32 %v628, %v736
        %v738 = vpop.f32.mrf.mxu0
        %739 = vmatprep.mubr.f32.mxu0 0.0
        %740 = vmatmul.mubr.f32.gmra.mxu0 %v644
        %v741 = vpop.f32.mrf.mxu0
        %v742 = vadd.f32 %v628, %v741
        %v743 = vpop.f32.mrf.mxu0
        %744 = vmatprep.mubr.f32.mxu0 0.0
        %745 = vmatmul.mubr.f32.gmra.mxu0 %v647
        %v746 = vpop.f32.mrf.mxu0
        %v747 = vadd.f32 %v628, %v746
        %v748 = vpop.f32.mrf.mxu0
        %749 = vmatprep.mubr.f32.mxu0 0.0
        %750 = vmatmul.mubr.f32.gmra.mxu0 %v650
        %v751 = vpop.f32.mrf.mxu0
        %v752 = vadd.f32 %v628, %v751
        %v753 = vpop.f32.mrf.mxu0
        %754 = vmatprep.mubr.f32.mxu0 0.0
        %755 = vmatmul.mubr.f32.gmra.mxu0 %v653
        %v756 = vpop.f32.mrf.mxu0
        %v757 = vadd.f32 %v628, %v756
        %v758 = vpop.f32.mrf.mxu0
        %759 = vdwg.mxu0
        %v760 = vld [vmem:[#allocation11] sm:$0xff]
        %v761 = vld [vmem:[#allocation11 + $0x8] sm:$0xff]
        %v762 = vld [vmem:[#allocation11 + $0x10] sm:$0xff]
        %v763 = vld [vmem:[#allocation11 + $0x18] sm:$0xff]
        %v764 = vld [vmem:[#allocation12] sm:$0x1]
        %v766 = vlaneseq
        %v767 = vshrl.u32 %v766, 7
        %v768 = vsub.s32 0, %v767
        %v769 = vrot.slane %v764, %v768
        %v772 = vsel %vm630, %v603, 0
        %v775 = vsel %vm630, %v604, 0
        %v778 = vsel %vm630, %v605, 0
        %v781 = vsel %vm630, %v606, 0
        %v784 = vsel %vm630, %v607, 0
        %v787 = vsel %vm630, %v608, 0
        %v790 = vsel %vm630, %v609, 0
        %v793 = vsel %vm630, %v610, 0
        %795 = vmatprep.subr.mxu0 0.0
        %796 = vmatpush1.msra.mxu0 0.0
        %797 = vmatprep.subr.mxu0 0.0
        %798 = vmatpush1.msra.mxu0 0.0
        %799 = vmatprep.subr.mxu0 0.0
        %800 = vmatpush1.msra.mxu0 0.0
        %801 = vmatprep.subr.mxu0 0.0
        %802 = vmatpush1.msra.mxu0 0.0
        %803 = vmatprep.subr.mxu0 0.0
        %804 = vmatpush1.msra.mxu0 0.0
        %805 = vmatprep.subr.mxu0 0.0
        %806 = vmatpush1.msra.mxu0 0.0
        %807 = vmatprep.subr.mxu0 0.0
        %808 = vmatpush1.msra.mxu0 0.0
        %809 = vmatprep.subr.mxu0 0.0
        %810 = vmatpush1.msra.mxu0 0.0
        %811 = vmatprep.subr.mxu0 0.0
        %812 = vmatpush1.msra.mxu0 0.0
        %813 = vmatprep.subr.mxu0 0.0
        %814 = vmatpush1.msra.mxu0 0.0
        %815 = vmatprep.subr.mxu0 0.0
        %816 = vmatpush1.msra.mxu0 0.0
        %817 = vmatprep.subr.mxu0 0.0
        %818 = vmatpush1.msra.mxu0 0.0
        %819 = vmatprep.subr.mxu0 0.0
        %820 = vmatpush1.msra.mxu0 %v763
        %821 = vmatprep.subr.mxu0 0.0
        %822 = vmatpush1.msra.mxu0 %v762
        %823 = vmatprep.subr.mxu0 0.0
        %824 = vmatpush1.msra.mxu0 %v761
        %825 = vmatprep.subr.mxu0 0.0
        %826 = vmatpush1.msra.mxu0 %v760
        %827 = vmatprep.subr.mxu0 0.0
        %828 = vmatpush2.msra.mxu0 0.0
        %829 = vmatprep.subr.mxu0 0.0
        %830 = vmatpush2.msra.mxu0 0.0
        %831 = vmatprep.subr.mxu0 0.0
        %832 = vmatpush2.msra.mxu0 0.0
        %833 = vmatprep.subr.mxu0 0.0
        %834 = vmatpush2.msra.mxu0 0.0
        %835 = vmatprep.subr.mxu0 0.0
        %836 = vmatpush2.msra.mxu0 0.0
        %837 = vmatprep.subr.mxu0 0.0
        %838 = vmatpush2.msra.mxu0 0.0
        %839 = vmatprep.subr.mxu0 0.0
        %840 = vmatpush2.msra.mxu0 0.0
        %841 = vmatprep.subr.mxu0 0.0
        %842 = vmatpush2.msra.mxu0 0.0
        %843 = vmatprep.subr.mxu0 0.0
        %844 = vmatpush2.msra.mxu0 0.0
        %845 = vmatprep.subr.mxu0 0.0
        %846 = vmatpush2.msra.mxu0 0.0
        %847 = vmatprep.subr.mxu0 0.0
        %848 = vmatpush2.msra.mxu0 0.0
        %849 = vmatprep.subr.mxu0 0.0
        %850 = vmatpush2.msra.mxu0 0.0
        %851 = vmatprep.subr.mxu0 0.0
        %852 = vmatpush2.msra.mxu0 0.0
        %853 = vmatprep.subr.mxu0 0.0
        %854 = vmatpush2.msra.mxu0 0.0
        %855 = vmatprep.subr.mxu0 0.0
        %856 = vmatpush2.msra.mxu0 0.0
        %857 = vmatprep.subr.mxu0 0.0
        %858 = vmatpush2.msra.mxu0 0.0
        %859 = vmatprep.mubr.f32.mxu0 0.0
        %860 = vmatmul.mubr.f32.gmra.mxu0 %v772
        %v861 = vpop.f32.mrf.mxu0
        %v862 = vadd.f32 %v769, %v861
        %v863 = vpop.f32.mrf.mxu0
        %864 = vmatprep.mubr.f32.mxu0 0.0
        %865 = vmatmul.mubr.f32.gmra.mxu0 %v775
        %v866 = vpop.f32.mrf.mxu0
        %v867 = vadd.f32 %v769, %v866
        %v868 = vpop.f32.mrf.mxu0
        %869 = vmatprep.mubr.f32.mxu0 0.0
        %870 = vmatmul.mubr.f32.gmra.mxu0 %v778
        %v871 = vpop.f32.mrf.mxu0
        %v872 = vadd.f32 %v769, %v871
        %v873 = vpop.f32.mrf.mxu0
        %874 = vmatprep.mubr.f32.mxu0 0.0
        %875 = vmatmul.mubr.f32.gmra.mxu0 %v781
        %v876 = vpop.f32.mrf.mxu0
        %v877 = vadd.f32 %v769, %v876
        %v878 = vpop.f32.mrf.mxu0
        %879 = vmatprep.mubr.f32.mxu0 0.0
        %880 = vmatmul.mubr.f32.gmra.mxu0 %v784
        %v881 = vpop.f32.mrf.mxu0
        %v882 = vadd.f32 %v769, %v881
        %v883 = vpop.f32.mrf.mxu0
        %884 = vmatprep.mubr.f32.mxu0 0.0
        %885 = vmatmul.mubr.f32.gmra.mxu0 %v787
        %v886 = vpop.f32.mrf.mxu0
        %v887 = vadd.f32 %v769, %v886
        %v888 = vpop.f32.mrf.mxu0
        %889 = vmatprep.mubr.f32.mxu0 0.0
        %890 = vmatmul.mubr.f32.gmra.mxu0 %v790
        %v891 = vpop.f32.mrf.mxu0
        %v892 = vadd.f32 %v769, %v891
        %v893 = vpop.f32.mrf.mxu0
        %894 = vmatprep.mubr.f32.mxu0 0.0
        %895 = vmatmul.mubr.f32.gmra.mxu0 %v793
        %v896 = vpop.f32.mrf.mxu0
        %v897 = vadd.f32 %v769, %v896
        %v898 = vpop.f32.mrf.mxu0
        %899 = vdwg.mxu0
        %v900 = vld [vmem:[#allocation14] sm:$0xff]
        %v901 = vld [vmem:[#allocation14 + $0x8] sm:$0xff]
        %v902 = vld [vmem:[#allocation14 + $0x10] sm:$0xff]
        %v903 = vld [vmem:[#allocation14 + $0x18] sm:$0xff]
        %v904 = vld [vmem:[%s8] sm:$0x1]
        %v906 = vlaneseq
        %v907 = vshrl.u32 %v906, 7
        %v908 = vsub.s32 0, %v907
        %v909 = vrot.slane %v904, %v908
        %v912 = vsel %vm630, %v611, 0
        %v915 = vsel %vm630, %v612, 0
        %v918 = vsel %vm630, %v613, 0
        %v921 = vsel %vm630, %v614, 0
        %v924 = vsel %vm630, %v615, 0
        %v927 = vsel %vm630, %v616, 0
        %v930 = vsel %vm630, %v617, 0
        %v933 = vsel %vm630, %v618, 0
        %935 = vmatprep.subr.mxu0 0.0
        %936 = vmatpush1.msra.mxu0 0.0
        %937 = vmatprep.subr.mxu0 0.0
        %938 = vmatpush1.msra.mxu0 0.0
        %939 = vmatprep.subr.mxu0 0.0
        %940 = vmatpush1.msra.mxu0 0.0
        %941 = vmatprep.subr.mxu0 0.0
        %942 = vmatpush1.msra.mxu0 0.0
        %943 = vmatprep.subr.mxu0 0.0
        %944 = vmatpush1.msra.mxu0 0.0
        %945 = vmatprep.subr.mxu0 0.0
        %946 = vmatpush1.msra.mxu0 0.0
        %947 = vmatprep.subr.mxu0 0.0
        %948 = vmatpush1.msra.mxu0 0.0
        %949 = vmatprep.subr.mxu0 0.0
        %950 = vmatpush1.msra.mxu0 0.0
        %951 = vmatprep.subr.mxu0 0.0
        %952 = vmatpush1.msra.mxu0 0.0
        %953 = vmatprep.subr.mxu0 0.0
        %954 = vmatpush1.msra.mxu0 0.0
        %955 = vmatprep.subr.mxu0 0.0
        %956 = vmatpush1.msra.mxu0 0.0
        %957 = vmatprep.subr.mxu0 0.0
        %958 = vmatpush1.msra.mxu0 0.0
        %959 = vmatprep.subr.mxu0 0.0
        %960 = vmatpush1.msra.mxu0 %v903
        %961 = vmatprep.subr.mxu0 0.0
        %962 = vmatpush1.msra.mxu0 %v902
        %963 = vmatprep.subr.mxu0 0.0
        %964 = vmatpush1.msra.mxu0 %v901
        %965 = vmatprep.subr.mxu0 0.0
        %966 = vmatpush1.msra.mxu0 %v900
        %967 = vmatprep.subr.mxu0 0.0
        %968 = vmatpush2.msra.mxu0 0.0
        %969 = vmatprep.subr.mxu0 0.0
        %970 = vmatpush2.msra.mxu0 0.0
        %971 = vmatprep.subr.mxu0 0.0
        %972 = vmatpush2.msra.mxu0 0.0
        %973 = vmatprep.subr.mxu0 0.0
        %974 = vmatpush2.msra.mxu0 0.0
        %975 = vmatprep.subr.mxu0 0.0
        %976 = vmatpush2.msra.mxu0 0.0
        %977 = vmatprep.subr.mxu0 0.0
        %978 = vmatpush2.msra.mxu0 0.0
        %979 = vmatprep.subr.mxu0 0.0
        %980 = vmatpush2.msra.mxu0 0.0
        %981 = vmatprep.subr.mxu0 0.0
        %982 = vmatpush2.msra.mxu0 0.0
        %983 = vmatprep.subr.mxu0 0.0
        %984 = vmatpush2.msra.mxu0 0.0
        %985 = vmatprep.subr.mxu0 0.0
        %986 = vmatpush2.msra.mxu0 0.0
        %987 = vmatprep.subr.mxu0 0.0
        %988 = vmatpush2.msra.mxu0 0.0
        %989 = vmatprep.subr.mxu0 0.0
        %990 = vmatpush2.msra.mxu0 0.0
        %991 = vmatprep.subr.mxu0 0.0
        %992 = vmatpush2.msra.mxu0 0.0
        %993 = vmatprep.subr.mxu0 0.0
        %994 = vmatpush2.msra.mxu0 0.0
        %995 = vmatprep.subr.mxu0 0.0
        %996 = vmatpush2.msra.mxu0 0.0
        %997 = vmatprep.subr.mxu0 0.0
        %998 = vmatpush2.msra.mxu0 0.0
        %999 = vmatprep.mubr.f32.mxu0 0.0
        %1000 = vmatmul.mubr.f32.gmra.mxu0 %v912
        %v1001 = vpop.f32.mrf.mxu0
        %v1002 = vadd.f32 %v909, %v1001
        %v1003 = vpop.f32.mrf.mxu0
        %1004 = vmatprep.mubr.f32.mxu0 0.0
        %1005 = vmatmul.mubr.f32.gmra.mxu0 %v915
        %v1006 = vpop.f32.mrf.mxu0
        %v1007 = vadd.f32 %v909, %v1006
        %v1008 = vpop.f32.mrf.mxu0
        %1009 = vmatprep.mubr.f32.mxu0 0.0
        %1010 = vmatmul.mubr.f32.gmra.mxu0 %v918
        %v1011 = vpop.f32.mrf.mxu0
        %v1012 = vadd.f32 %v909, %v1011
        %v1013 = vpop.f32.mrf.mxu0
        %1014 = vmatprep.mubr.f32.mxu0 0.0
        %1015 = vmatmul.mubr.f32.gmra.mxu0 %v921
        %v1016 = vpop.f32.mrf.mxu0
        %v1017 = vadd.f32 %v909, %v1016
        %v1018 = vpop.f32.mrf.mxu0
        %1019 = vmatprep.mubr.f32.mxu0 0.0
        %1020 = vmatmul.mubr.f32.gmra.mxu0 %v924
        %v1021 = vpop.f32.mrf.mxu0
        %v1022 = vadd.f32 %v909, %v1021
        %v1023 = vpop.f32.mrf.mxu0
        %1024 = vmatprep.mubr.f32.mxu0 0.0
        %1025 = vmatmul.mubr.f32.gmra.mxu0 %v927
        %v1026 = vpop.f32.mrf.mxu0
        %v1027 = vadd.f32 %v909, %v1026
        %v1028 = vpop.f32.mrf.mxu0
        %1029 = vmatprep.mubr.f32.mxu0 0.0
        %1030 = vmatmul.mubr.f32.gmra.mxu0 %v930
        %v1031 = vpop.f32.mrf.mxu0
        %v1032 = vadd.f32 %v909, %v1031
        %v1033 = vpop.f32.mrf.mxu0
        %1034 = vmatprep.mubr.f32.mxu0 0.0
        %1035 = vmatmul.mubr.f32.gmra.mxu0 %v933
        %v1036 = vpop.f32.mrf.mxu0
        %v1037 = vadd.f32 %v909, %v1036
        %v1038 = vpop.f32.mrf.mxu0
        %1039 = vdwg.mxu0
        %vm1040 = vcmask 64512
        %v1042 = vsel %vm1040, %v722, 0
        %v1045 = vsel %vm1040, %v727, 0
        %v1048 = vsel %vm1040, %v862, 0
        %v1051 = vsel %vm1040, %v867, 0
        %1053 = vmatprep.subr.mxu0 0.0
        %1054 = vmatpush1.xpose.msra.mxu0 0.0
        %1055 = vmatprep.subr.mxu0 0.0
        %1056 = vmatpush1.xpose.msra.mxu0 0.0
        %1057 = vmatprep.subr.mxu0 0.0
        %1058 = vmatpush1.xpose.msra.mxu0 0.0
        %1059 = vmatprep.subr.mxu0 0.0
        %1060 = vmatpush1.xpose.msra.mxu0 0.0
        %1061 = vmatprep.subr.mxu0 0.0
        %1062 = vmatpush1.xpose.msra.mxu0 0.0
        %1063 = vmatprep.subr.mxu0 0.0
        %1064 = vmatpush1.xpose.msra.mxu0 0.0
        %1065 = vmatprep.subr.mxu0 0.0
        %1066 = vmatpush1.xpose.msra.mxu0 0.0
        %1067 = vmatprep.subr.mxu0 0.0
        %1068 = vmatpush1.xpose.msra.mxu0 0.0
        %1069 = vmatprep.subr.mxu0 0.0
        %1070 = vmatpush1.xpose.msra.mxu0 0.0
        %1071 = vmatprep.subr.mxu0 0.0
        %1072 = vmatpush1.xpose.msra.mxu0 0.0
        %1073 = vmatprep.subr.mxu0 0.0
        %1074 = vmatpush1.xpose.msra.mxu0 0.0
        %1075 = vmatprep.subr.mxu0 0.0
        %1076 = vmatpush1.xpose.msra.mxu0 0.0
        %1077 = vmatprep.subr.mxu0 0.0
        %1078 = vmatpush1.xpose.msra.mxu0 0.0
        %1079 = vmatprep.subr.mxu0 0.0
        %1080 = vmatpush1.xpose.msra.mxu0 0.0
        %1081 = vmatprep.subr.mxu0 0.0
        %1082 = vmatpush1.xpose.msra.mxu0 %v1051
        %1083 = vmatprep.subr.mxu0 0.0
        %1084 = vmatpush1.xpose.msra.mxu0 %v1048
        %1085 = vmatprep.subr.mxu0 0.0
        %1086 = vmatpush2.xpose.msra.mxu0 0.0
        %1087 = vmatprep.subr.mxu0 0.0
        %1088 = vmatpush2.xpose.msra.mxu0 0.0
        %1089 = vmatprep.subr.mxu0 0.0
        %1090 = vmatpush2.xpose.msra.mxu0 0.0
        %1091 = vmatprep.subr.mxu0 0.0
        %1092 = vmatpush2.xpose.msra.mxu0 0.0
        %1093 = vmatprep.subr.mxu0 0.0
        %1094 = vmatpush2.xpose.msra.mxu0 0.0
        %1095 = vmatprep.subr.mxu0 0.0
        %1096 = vmatpush2.xpose.msra.mxu0 0.0
        %1097 = vmatprep.subr.mxu0 0.0
        %1098 = vmatpush2.xpose.msra.mxu0 0.0
        %1099 = vmatprep.subr.mxu0 0.0
        %1100 = vmatpush2.xpose.msra.mxu0 0.0
        %1101 = vmatprep.subr.mxu0 0.0
        %1102 = vmatpush2.xpose.msra.mxu0 0.0
        %1103 = vmatprep.subr.mxu0 0.0
        %1104 = vmatpush2.xpose.msra.mxu0 0.0
        %1105 = vmatprep.subr.mxu0 0.0
        %1106 = vmatpush2.xpose.msra.mxu0 0.0
        %1107 = vmatprep.subr.mxu0 0.0
        %1108 = vmatpush2.xpose.msra.mxu0 0.0
        %1109 = vmatprep.subr.mxu0 0.0
        %1110 = vmatpush2.xpose.msra.mxu0 0.0
        %1111 = vmatprep.subr.mxu0 0.0
        %1112 = vmatpush2.xpose.msra.mxu0 0.0
        %1113 = vmatprep.subr.mxu0 0.0
        %1114 = vmatpush2.xpose.msra.mxu0 0.0
        %1115 = vmatprep.subr.mxu0 0.0
        %1116 = vmatpush2.xpose.msra.mxu0 0.0
        %1117 = vmatprep.mubr.f32.mxu0 0.0
        %1118 = vmatmul.mubr.f32.gmra.mxu0 %v1042
        %v1119 = vpop.f32.mrf.mxu0
        %v1120 = vadd.f32 0.0, %v1119
        %v1121 = vpop.f32.mrf.mxu0
        %1122 = vmatprep.mubr.f32.mxu0 0.0
        %1123 = vmatmul.mubr.f32.gmra.mxu0 %v1045
        %v1124 = vpop.f32.mrf.mxu0
        %v1125 = vadd.f32 0.0, %v1124
        %v1126 = vpop.f32.mrf.mxu0
        %1127 = vdwg.mxu0
        %v1129 = vsel %vm1040, %v732, 0
        %v1132 = vsel %vm1040, %v737, 0
        %v1135 = vsel %vm1040, %v872, 0
        %v1138 = vsel %vm1040, %v877, 0
        %1140 = vmatprep.subr.mxu0 0.0
        %1141 = vmatpush1.xpose.msra.mxu0 0.0
        %1142 = vmatprep.subr.mxu0 0.0
        %1143 = vmatpush1.xpose.msra.mxu0 0.0
        %1144 = vmatprep.subr.mxu0 0.0
        %1145 = vmatpush1.xpose.msra.mxu0 0.0
        %1146 = vmatprep.subr.mxu0 0.0
        %1147 = vmatpush1.xpose.msra.mxu0 0.0
        %1148 = vmatprep.subr.mxu0 0.0
        %1149 = vmatpush1.xpose.msra.mxu0 0.0
        %1150 = vmatprep.subr.mxu0 0.0
        %1151 = vmatpush1.xpose.msra.mxu0 0.0
        %1152 = vmatprep.subr.mxu0 0.0
        %1153 = vmatpush1.xpose.msra.mxu0 0.0
        %1154 = vmatprep.subr.mxu0 0.0
        %1155 = vmatpush1.xpose.msra.mxu0 0.0
        %1156 = vmatprep.subr.mxu0 0.0
        %1157 = vmatpush1.xpose.msra.mxu0 0.0
        %1158 = vmatprep.subr.mxu0 0.0
        %1159 = vmatpush1.xpose.msra.mxu0 0.0
        %1160 = vmatprep.subr.mxu0 0.0
        %1161 = vmatpush1.xpose.msra.mxu0 0.0
        %1162 = vmatprep.subr.mxu0 0.0
        %1163 = vmatpush1.xpose.msra.mxu0 0.0
        %1164 = vmatprep.subr.mxu0 0.0
        %1165 = vmatpush1.xpose.msra.mxu0 0.0
        %1166 = vmatprep.subr.mxu0 0.0
        %1167 = vmatpush1.xpose.msra.mxu0 0.0
        %1168 = vmatprep.subr.mxu0 0.0
        %1169 = vmatpush1.xpose.msra.mxu0 %v1138
        %1170 = vmatprep.subr.mxu0 0.0
        %1171 = vmatpush1.xpose.msra.mxu0 %v1135
        %1172 = vmatprep.subr.mxu0 0.0
        %1173 = vmatpush2.xpose.msra.mxu0 0.0
        %1174 = vmatprep.subr.mxu0 0.0
        %1175 = vmatpush2.xpose.msra.mxu0 0.0
        %1176 = vmatprep.subr.mxu0 0.0
        %1177 = vmatpush2.xpose.msra.mxu0 0.0
        %1178 = vmatprep.subr.mxu0 0.0
        %1179 = vmatpush2.xpose.msra.mxu0 0.0
        %1180 = vmatprep.subr.mxu0 0.0
        %1181 = vmatpush2.xpose.msra.mxu0 0.0
        %1182 = vmatprep.subr.mxu0 0.0
        %1183 = vmatpush2.xpose.msra.mxu0 0.0
        %1184 = vmatprep.subr.mxu0 0.0
        %1185 = vmatpush2.xpose.msra.mxu0 0.0
        %1186 = vmatprep.subr.mxu0 0.0
        %1187 = vmatpush2.xpose.msra.mxu0 0.0
        %1188 = vmatprep.subr.mxu0 0.0
        %1189 = vmatpush2.xpose.msra.mxu0 0.0
        %1190 = vmatprep.subr.mxu0 0.0
        %1191 = vmatpush2.xpose.msra.mxu0 0.0
        %1192 = vmatprep.subr.mxu0 0.0
        %1193 = vmatpush2.xpose.msra.mxu0 0.0
        %1194 = vmatprep.subr.mxu0 0.0
        %1195 = vmatpush2.xpose.msra.mxu0 0.0
        %1196 = vmatprep.subr.mxu0 0.0
        %1197 = vmatpush2.xpose.msra.mxu0 0.0
        %1198 = vmatprep.subr.mxu0 0.0
        %1199 = vmatpush2.xpose.msra.mxu0 0.0
        %1200 = vmatprep.subr.mxu0 0.0
        %1201 = vmatpush2.xpose.msra.mxu0 0.0
        %1202 = vmatprep.subr.mxu0 0.0
        %1203 = vmatpush2.xpose.msra.mxu0 0.0
        %1204 = vmatprep.mubr.f32.mxu0 0.0
        %1205 = vmatmul.mubr.f32.gmra.mxu0 %v1129
        %v1206 = vpop.f32.mrf.mxu0
        %v1207 = vadd.f32 0.0, %v1206
        %v1208 = vpop.f32.mrf.mxu0
        %1209 = vmatprep.mubr.f32.mxu0 0.0
        %1210 = vmatmul.mubr.f32.gmra.mxu0 %v1132
        %v1211 = vpop.f32.mrf.mxu0
        %v1212 = vadd.f32 0.0, %v1211
        %v1213 = vpop.f32.mrf.mxu0
        %1214 = vdwg.mxu0
        %v1216 = vsel %vm1040, %v742, 0
        %v1219 = vsel %vm1040, %v747, 0
        %v1222 = vsel %vm1040, %v882, 0
        %v1225 = vsel %vm1040, %v887, 0
        %1227 = vmatprep.subr.mxu0 0.0
        %1228 = vmatpush1.xpose.msra.mxu0 0.0
        %1229 = vmatprep.subr.mxu0 0.0
        %1230 = vmatpush1.xpose.msra.mxu0 0.0
        %1231 = vmatprep.subr.mxu0 0.0
        %1232 = vmatpush1.xpose.msra.mxu0 0.0
        %1233 = vmatprep.subr.mxu0 0.0
        %1234 = vmatpush1.xpose.msra.mxu0 0.0
        %1235 = vmatprep.subr.mxu0 0.0
        %1236 = vmatpush1.xpose.msra.mxu0 0.0
        %1237 = vmatprep.subr.mxu0 0.0
        %1238 = vmatpush1.xpose.msra.mxu0 0.0
        %1239 = vmatprep.subr.mxu0 0.0
        %1240 = vmatpush1.xpose.msra.mxu0 0.0
        %1241 = vmatprep.subr.mxu0 0.0
        %1242 = vmatpush1.xpose.msra.mxu0 0.0
        %1243 = vmatprep.subr.mxu0 0.0
        %1244 = vmatpush1.xpose.msra.mxu0 0.0
        %1245 = vmatprep.subr.mxu0 0.0
        %1246 = vmatpush1.xpose.msra.mxu0 0.0
        %1247 = vmatprep.subr.mxu0 0.0
        %1248 = vmatpush1.xpose.msra.mxu0 0.0
        %1249 = vmatprep.subr.mxu0 0.0
        %1250 = vmatpush1.xpose.msra.mxu0 0.0
        %1251 = vmatprep.subr.mxu0 0.0
        %1252 = vmatpush1.xpose.msra.mxu0 0.0
        %1253 = vmatprep.subr.mxu0 0.0
        %1254 = vmatpush1.xpose.msra.mxu0 0.0
        %1255 = vmatprep.subr.mxu0 0.0
        %1256 = vmatpush1.xpose.msra.mxu0 %v1225
        %1257 = vmatprep.subr.mxu0 0.0
        %1258 = vmatpush1.xpose.msra.mxu0 %v1222
        %1259 = vmatprep.subr.mxu0 0.0
        %1260 = vmatpush2.xpose.msra.mxu0 0.0
        %1261 = vmatprep.subr.mxu0 0.0
        %1262 = vmatpush2.xpose.msra.mxu0 0.0
        %1263 = vmatprep.subr.mxu0 0.0
        %1264 = vmatpush2.xpose.msra.mxu0 0.0
        %1265 = vmatprep.subr.mxu0 0.0
        %1266 = vmatpush2.xpose.msra.mxu0 0.0
        %1267 = vmatprep.subr.mxu0 0.0
        %1268 = vmatpush2.xpose.msra.mxu0 0.0
        %1269 = vmatprep.subr.mxu0 0.0
        %1270 = vmatpush2.xpose.msra.mxu0 0.0
        %1271 = vmatprep.subr.mxu0 0.0
        %1272 = vmatpush2.xpose.msra.mxu0 0.0
        %1273 = vmatprep.subr.mxu0 0.0
        %1274 = vmatpush2.xpose.msra.mxu0 0.0
        %1275 = vmatprep.subr.mxu0 0.0
        %1276 = vmatpush2.xpose.msra.mxu0 0.0
        %1277 = vmatprep.subr.mxu0 0.0
        %1278 = vmatpush2.xpose.msra.mxu0 0.0
        %1279 = vmatprep.subr.mxu0 0.0
        %1280 = vmatpush2.xpose.msra.mxu0 0.0
        %1281 = vmatprep.subr.mxu0 0.0
        %1282 = vmatpush2.xpose.msra.mxu0 0.0
        %1283 = vmatprep.subr.mxu0 0.0
        %1284 = vmatpush2.xpose.msra.mxu0 0.0
        %1285 = vmatprep.subr.mxu0 0.0
        %1286 = vmatpush2.xpose.msra.mxu0 0.0
        %1287 = vmatprep.subr.mxu0 0.0
        %1288 = vmatpush2.xpose.msra.mxu0 0.0
        %1289 = vmatprep.subr.mxu0 0.0
        %1290 = vmatpush2.xpose.msra.mxu0 0.0
        %1291 = vmatprep.mubr.f32.mxu0 0.0
        %1292 = vmatmul.mubr.f32.gmra.mxu0 %v1216
        %v1293 = vpop.f32.mrf.mxu0
        %v1294 = vadd.f32 0.0, %v1293
        %v1295 = vpop.f32.mrf.mxu0
        %1296 = vmatprep.mubr.f32.mxu0 0.0
        %1297 = vmatmul.mubr.f32.gmra.mxu0 %v1219
        %v1298 = vpop.f32.mrf.mxu0
        %v1299 = vadd.f32 0.0, %v1298
        %v1300 = vpop.f32.mrf.mxu0
        %1301 = vdwg.mxu0
        %v1303 = vsel %vm1040, %v752, 0
        %v1306 = vsel %vm1040, %v757, 0
        %v1309 = vsel %vm1040, %v892, 0
        %v1312 = vsel %vm1040, %v897, 0
        %1314 = vmatprep.subr.mxu0 0.0
        %1315 = vmatpush1.xpose.msra.mxu0 0.0
        %1316 = vmatprep.subr.mxu0 0.0
        %1317 = vmatpush1.xpose.msra.mxu0 0.0
        %1318 = vmatprep.subr.mxu0 0.0
        %1319 = vmatpush1.xpose.msra.mxu0 0.0
        %1320 = vmatprep.subr.mxu0 0.0
        %1321 = vmatpush1.xpose.msra.mxu0 0.0
        %1322 = vmatprep.subr.mxu0 0.0
        %1323 = vmatpush1.xpose.msra.mxu0 0.0
        %1324 = vmatprep.subr.mxu0 0.0
        %1325 = vmatpush1.xpose.msra.mxu0 0.0
        %1326 = vmatprep.subr.mxu0 0.0
        %1327 = vmatpush1.xpose.msra.mxu0 0.0
        %1328 = vmatprep.subr.mxu0 0.0
        %1329 = vmatpush1.xpose.msra.mxu0 0.0
        %1330 = vmatprep.subr.mxu0 0.0
        %1331 = vmatpush1.xpose.msra.mxu0 0.0
        %1332 = vmatprep.subr.mxu0 0.0
        %1333 = vmatpush1.xpose.msra.mxu0 0.0
        %1334 = vmatprep.subr.mxu0 0.0
        %1335 = vmatpush1.xpose.msra.mxu0 0.0
        %1336 = vmatprep.subr.mxu0 0.0
        %1337 = vmatpush1.xpose.msra.mxu0 0.0
        %1338 = vmatprep.subr.mxu0 0.0
        %1339 = vmatpush1.xpose.msra.mxu0 0.0
        %1340 = vmatprep.subr.mxu0 0.0
        %1341 = vmatpush1.xpose.msra.mxu0 0.0
        %1342 = vmatprep.subr.mxu0 0.0
        %1343 = vmatpush1.xpose.msra.mxu0 %v1312
        %1344 = vmatprep.subr.mxu0 0.0
        %1345 = vmatpush1.xpose.msra.mxu0 %v1309
        %1346 = vmatprep.subr.mxu0 0.0
        %1347 = vmatpush2.xpose.msra.mxu0 0.0
        %1348 = vmatprep.subr.mxu0 0.0
        %1349 = vmatpush2.xpose.msra.mxu0 0.0
        %1350 = vmatprep.subr.mxu0 0.0
        %1351 = vmatpush2.xpose.msra.mxu0 0.0
        %1352 = vmatprep.subr.mxu0 0.0
        %1353 = vmatpush2.xpose.msra.mxu0 0.0
        %1354 = vmatprep.subr.mxu0 0.0
        %1355 = vmatpush2.xpose.msra.mxu0 0.0
        %1356 = vmatprep.subr.mxu0 0.0
        %1357 = vmatpush2.xpose.msra.mxu0 0.0
        %1358 = vmatprep.subr.mxu0 0.0
        %1359 = vmatpush2.xpose.msra.mxu0 0.0
        %1360 = vmatprep.subr.mxu0 0.0
        %1361 = vmatpush2.xpose.msra.mxu0 0.0
        %1362 = vmatprep.subr.mxu0 0.0
        %1363 = vmatpush2.xpose.msra.mxu0 0.0
        %1364 = vmatprep.subr.mxu0 0.0
        %1365 = vmatpush2.xpose.msra.mxu0 0.0
        %1366 = vmatprep.subr.mxu0 0.0
        %1367 = vmatpush2.xpose.msra.mxu0 0.0
        %1368 = vmatprep.subr.mxu0 0.0
        %1369 = vmatpush2.xpose.msra.mxu0 0.0
        %1370 = vmatprep.subr.mxu0 0.0
        %1371 = vmatpush2.xpose.msra.mxu0 0.0
        %1372 = vmatprep.subr.mxu0 0.0
        %1373 = vmatpush2.xpose.msra.mxu0 0.0
        %1374 = vmatprep.subr.mxu0 0.0
        %1375 = vmatpush2.xpose.msra.mxu0 0.0
        %1376 = vmatprep.subr.mxu0 0.0
        %1377 = vmatpush2.xpose.msra.mxu0 0.0
        %1378 = vmatprep.mubr.f32.mxu0 0.0
        %1379 = vmatmul.mubr.f32.gmra.mxu0 %v1303
        %v1380 = vpop.f32.mrf.mxu0
        %v1381 = vadd.f32 0.0, %v1380
        %v1382 = vpop.f32.mrf.mxu0
        %1383 = vmatprep.mubr.f32.mxu0 0.0
        %1384 = vmatmul.mubr.f32.gmra.mxu0 %v1306
        %v1385 = vpop.f32.mrf.mxu0
        %v1386 = vadd.f32 0.0, %v1385
        %v1387 = vpop.f32.mrf.mxu0
        %1388 = vdwg.mxu0
        %v1389 = vmul.f32 %v1120, 0.35355338
        %v1390 = vmul.f32 %v1125, 0.35355338
        %v1391 = vmul.f32 %v1207, 0.35355338
        %v1392 = vmul.f32 %v1212, 0.35355338
        %v1393 = vmul.f32 %v1294, 0.35355338
        %v1394 = vmul.f32 %v1299, 0.35355338
        %v1395 = vmul.f32 %v1381, 0.35355338
        %v1396 = vmul.f32 %v1386, 0.35355338
        %vm1397 = vcmask 130048
        %v1398 = vsel %vm1397, %v1389, -inf
        %1399 = vmax.xlane.f32.xlu0 %v1398
        %v1400 = vpop.xlane.xlu0 %1399
        %v1401 = vsel %vm1397, %v1390, -inf
        %1402 = vmax.xlane.f32.xlu0 %v1401
        %v1403 = vpop.xlane.xlu0 %1402
        %v1404 = vsel %vm1397, %v1391, -inf
        %1405 = vmax.xlane.f32.xlu0 %v1404
        %v1406 = vpop.xlane.xlu0 %1405
        %v1407 = vsel %vm1397, %v1392, -inf
        %1408 = vmax.xlane.f32.xlu0 %v1407
        %v1409 = vpop.xlane.xlu0 %1408
        %v1410 = vsel %vm1397, %v1393, -inf
        %1411 = vmax.xlane.f32.xlu0 %v1410
        %v1412 = vpop.xlane.xlu0 %1411
        %v1413 = vsel %vm1397, %v1394, -inf
        %1414 = vmax.xlane.f32.xlu0 %v1413
        %v1415 = vpop.xlane.xlu0 %1414
        %v1416 = vsel %vm1397, %v1395, -inf
        %1417 = vmax.xlane.f32.xlu0 %v1416
        %v1418 = vpop.xlane.xlu0 %1417
        %v1419 = vsel %vm1397, %v1396, -inf
        %1420 = vmax.xlane.f32.xlu0 %v1419
        %v1421 = vpop.xlane.xlu0 %1420
        %v1422 = vsub.f32 %v1389, %v1400
        %v1423 = vsub.f32 %v1390, %v1403
        %v1424 = vsub.f32 %v1391, %v1406
        %v1425 = vsub.f32 %v1392, %v1409
        %v1426 = vsub.f32 %v1393, %v1412
        %v1427 = vsub.f32 %v1394, %v1415
        %v1428 = vsub.f32 %v1395, %v1418
        %v1429 = vsub.f32 %v1396, %v1421
        %v1430 = vmul.f32 %v1422, 1.442695
        %v1431 = vpow.pop %v1430
        %v1432 = vmul.f32 %v1423, 1.442695
        %v1433 = vpow.pop %v1432
        %v1434 = vmul.f32 %v1424, 1.442695
        %v1435 = vpow.pop %v1434
        %v1436 = vmul.f32 %v1425, 1.442695
        %v1437 = vpow.pop %v1436
        %v1438 = vmul.f32 %v1426, 1.442695
        %v1439 = vpow.pop %v1438
        %v1440 = vmul.f32 %v1427, 1.442695
        %v1441 = vpow.pop %v1440
        %v1442 = vmul.f32 %v1428, 1.442695
        %v1443 = vpow.pop %v1442
        %v1444 = vmul.f32 %v1429, 1.442695
        %v1445 = vpow.pop %v1444
        %v1446 = vsel %vm1397, %v1431, 0.0
        %1447 = vadd.xlane.f32.xlu0 %v1446
        %v1448 = vpop.xlane.xlu0 %1447
        %v1449 = vsel %vm1397, %v1433, 0.0
        %1450 = vadd.xlane.f32.xlu0 %v1449
        %v1451 = vpop.xlane.xlu0 %1450
        %v1452 = vsel %vm1397, %v1435, 0.0
        %1453 = vadd.xlane.f32.xlu0 %v1452
        %v1454 = vpop.xlane.xlu0 %1453
        %v1455 = vsel %vm1397, %v1437, 0.0
        %1456 = vadd.xlane.f32.xlu0 %v1455
        %v1457 = vpop.xlane.xlu0 %1456
        %v1458 = vsel %vm1397, %v1439, 0.0
        %1459 = vadd.xlane.f32.xlu0 %v1458
        %v1460 = vpop.xlane.xlu0 %1459
        %v1461 = vsel %vm1397, %v1441, 0.0
        %1462 = vadd.xlane.f32.xlu0 %v1461
        %v1463 = vpop.xlane.xlu0 %1462
        %v1464 = vsel %vm1397, %v1443, 0.0
        %1465 = vadd.xlane.f32.xlu0 %v1464
        %v1466 = vpop.xlane.xlu0 %1465
        %v1467 = vsel %vm1397, %v1445, 0.0
        %1468 = vadd.xlane.f32.xlu0 %v1467
        %v1469 = vpop.xlane.xlu0 %1468
        %v1470 = vrcp.pop %v1448
        %v1471 = vrcp.pop %v1451
        %v1472 = vrcp.pop %v1454
        %v1473 = vrcp.pop %v1457
        %v1474 = vrcp.pop %v1460
        %v1475 = vrcp.pop %v1463
        %v1476 = vrcp.pop %v1466
        %v1477 = vrcp.pop %v1469
        %v1478 = vmul.f32 %v1431, %v1470
        %v1479 = vmul.f32 %v1433, %v1471
        %v1480 = vmul.f32 %v1435, %v1472
        %v1481 = vmul.f32 %v1437, %v1473
        %v1482 = vmul.f32 %v1439, %v1474
        %v1483 = vmul.f32 %v1441, %v1475
        %v1484 = vmul.f32 %v1443, %v1476
        %v1485 = vmul.f32 %v1445, %v1477
        %1486 = vst.msk [vmem:[%s589] sm:$0xff] %vm1397, %v1478
        %1487 = vst.msk [vmem:[%s589 + $0x8] sm:$0xff] %vm1397, %v1479
        %1488 = vst.msk [vmem:[%s589 + $0x10] sm:$0xff] %vm1397, %v1480
        %1489 = vst.msk [vmem:[%s589 + $0x18] sm:$0xff] %vm1397, %v1481
        %1490 = vst.msk [vmem:[%s589 + $0x20] sm:$0xff] %vm1397, %v1482
        %1491 = vst.msk [vmem:[%s589 + $0x28] sm:$0xff] %vm1397, %v1483
        %1492 = vst.msk [vmem:[%s589 + $0x30] sm:$0xff] %vm1397, %v1484
        %1493 = vst.msk [vmem:[%s589 + $0x38] sm:$0xff] %vm1397, %v1485
        %v1495 = vsel %vm1397, %v1478, 0
        %v1498 = vsel %vm1397, %v1479, 0
        %1500 = vmatprep.subr.mxu0 0.0
        %1501 = vmatpush1.msra.mxu0 0.0
        %1502 = vmatprep.subr.mxu0 0.0
        %1503 = vmatpush1.msra.mxu0 0.0
        %1504 = vmatprep.subr.mxu0 0.0
        %1505 = vmatpush1.msra.mxu0 0.0
        %1506 = vmatprep.subr.mxu0 0.0
        %1507 = vmatpush1.msra.mxu0 0.0
        %1508 = vmatprep.subr.mxu0 0.0
        %1509 = vmatpush1.msra.mxu0 0.0
        %1510 = vmatprep.subr.mxu0 0.0
        %1511 = vmatpush1.msra.mxu0 0.0
        %1512 = vmatprep.subr.mxu0 0.0
        %1513 = vmatpush1.msra.mxu0 0.0
        %1514 = vmatprep.subr.mxu0 0.0
        %1515 = vmatpush1.msra.mxu0 0.0
        %1516 = vmatprep.subr.mxu0 0.0
        %1517 = vmatpush1.msra.mxu0 0.0
        %1518 = vmatprep.subr.mxu0 0.0
        %1519 = vmatpush1.msra.mxu0 0.0
        %1520 = vmatprep.subr.mxu0 0.0
        %1521 = vmatpush1.msra.mxu0 0.0
        %1522 = vmatprep.subr.mxu0 0.0
        %1523 = vmatpush1.msra.mxu0 0.0
        %1524 = vmatprep.subr.mxu0 0.0
        %1525 = vmatpush1.msra.mxu0 0.0
        %1526 = vmatprep.subr.mxu0 0.0
        %1527 = vmatpush1.msra.mxu0 0.0
        %1528 = vmatprep.subr.mxu0 0.0
        %1529 = vmatpush1.msra.mxu0 %v1007
        %1530 = vmatprep.subr.mxu0 0.0
        %1531 = vmatpush1.msra.mxu0 %v1002
        %1532 = vmatprep.subr.mxu0 0.0
        %1533 = vmatpush2.msra.mxu0 0.0
        %1534 = vmatprep.subr.mxu0 0.0
        %1535 = vmatpush2.msra.mxu0 0.0
        %1536 = vmatprep.subr.mxu0 0.0
        %1537 = vmatpush2.msra.mxu0 0.0
        %1538 = vmatprep.subr.mxu0 0.0
        %1539 = vmatpush2.msra.mxu0 0.0
        %1540 = vmatprep.subr.mxu0 0.0
        %1541 = vmatpush2.msra.mxu0 0.0
        %1542 = vmatprep.subr.mxu0 0.0
        %1543 = vmatpush2.msra.mxu0 0.0
        %1544 = vmatprep.subr.mxu0 0.0
        %1545 = vmatpush2.msra.mxu0 0.0
        %1546 = vmatprep.subr.mxu0 0.0
        %1547 = vmatpush2.msra.mxu0 0.0
        %1548 = vmatprep.subr.mxu0 0.0
        %1549 = vmatpush2.msra.mxu0 0.0
        %1550 = vmatprep.subr.mxu0 0.0
        %1551 = vmatpush2.msra.mxu0 0.0
        %1552 = vmatprep.subr.mxu0 0.0
        %1553 = vmatpush2.msra.mxu0 0.0
        %1554 = vmatprep.subr.mxu0 0.0
        %1555 = vmatpush2.msra.mxu0 0.0
        %1556 = vmatprep.subr.mxu0 0.0
        %1557 = vmatpush2.msra.mxu0 0.0
        %1558 = vmatprep.subr.mxu0 0.0
        %1559 = vmatpush2.msra.mxu0 0.0
        %1560 = vmatprep.subr.mxu0 0.0
        %1561 = vmatpush2.msra.mxu0 0.0
        %1562 = vmatprep.subr.mxu0 0.0
        %1563 = vmatpush2.msra.mxu0 0.0
        %1564 = vmatprep.mubr.f32.mxu0 0.0
        %1565 = vmatmul.mubr.f32.gmra.mxu0 %v1495
        %v1566 = vpop.f32.mrf.mxu0
        %v1567 = vadd.f32 0.0, %v1566
        %v1568 = vpop.f32.mrf.mxu0
        %1569 = vmatprep.mubr.f32.mxu0 0.0
        %1570 = vmatmul.mubr.f32.gmra.mxu0 %v1498
        %v1571 = vpop.f32.mrf.mxu0
        %v1572 = vadd.f32 0.0, %v1571
        %v1573 = vpop.f32.mrf.mxu0
        %1574 = vdwg.mxu0
        %v1576 = vsel %vm1397, %v1480, 0
        %v1579 = vsel %vm1397, %v1481, 0
        %1581 = vmatprep.subr.mxu0 0.0
        %1582 = vmatpush1.msra.mxu0 0.0
        %1583 = vmatprep.subr.mxu0 0.0
        %1584 = vmatpush1.msra.mxu0 0.0
        %1585 = vmatprep.subr.mxu0 0.0
        %1586 = vmatpush1.msra.mxu0 0.0
        %1587 = vmatprep.subr.mxu0 0.0
        %1588 = vmatpush1.msra.mxu0 0.0
        %1589 = vmatprep.subr.mxu0 0.0
        %1590 = vmatpush1.msra.mxu0 0.0
        %1591 = vmatprep.subr.mxu0 0.0
        %1592 = vmatpush1.msra.mxu0 0.0
        %1593 = vmatprep.subr.mxu0 0.0
        %1594 = vmatpush1.msra.mxu0 0.0
        %1595 = vmatprep.subr.mxu0 0.0
        %1596 = vmatpush1.msra.mxu0 0.0
        %1597 = vmatprep.subr.mxu0 0.0
        %1598 = vmatpush1.msra.mxu0 0.0
        %1599 = vmatprep.subr.mxu0 0.0
        %1600 = vmatpush1.msra.mxu0 0.0
        %1601 = vmatprep.subr.mxu0 0.0
        %1602 = vmatpush1.msra.mxu0 0.0
        %1603 = vmatprep.subr.mxu0 0.0
        %1604 = vmatpush1.msra.mxu0 0.0
        %1605 = vmatprep.subr.mxu0 0.0
        %1606 = vmatpush1.msra.mxu0 0.0
        %1607 = vmatprep.subr.mxu0 0.0
        %1608 = vmatpush1.msra.mxu0 0.0
        %1609 = vmatprep.subr.mxu0 0.0
        %1610 = vmatpush1.msra.mxu0 %v1017
        %1611 = vmatprep.subr.mxu0 0.0
        %1612 = vmatpush1.msra.mxu0 %v1012
        %1613 = vmatprep.subr.mxu0 0.0
        %1614 = vmatpush2.msra.mxu0 0.0
        %1615 = vmatprep.subr.mxu0 0.0
        %1616 = vmatpush2.msra.mxu0 0.0
        %1617 = vmatprep.subr.mxu0 0.0
        %1618 = vmatpush2.msra.mxu0 0.0
        %1619 = vmatprep.subr.mxu0 0.0
        %1620 = vmatpush2.msra.mxu0 0.0
        %1621 = vmatprep.subr.mxu0 0.0
        %1622 = vmatpush2.msra.mxu0 0.0
        %1623 = vmatprep.subr.mxu0 0.0
        %1624 = vmatpush2.msra.mxu0 0.0
        %1625 = vmatprep.subr.mxu0 0.0
        %1626 = vmatpush2.msra.mxu0 0.0
        %1627 = vmatprep.subr.mxu0 0.0
        %1628 = vmatpush2.msra.mxu0 0.0
        %1629 = vmatprep.subr.mxu0 0.0
        %1630 = vmatpush2.msra.mxu0 0.0
        %1631 = vmatprep.subr.mxu0 0.0
        %1632 = vmatpush2.msra.mxu0 0.0
        %1633 = vmatprep.subr.mxu0 0.0
        %1634 = vmatpush2.msra.mxu0 0.0
        %1635 = vmatprep.subr.mxu0 0.0
        %1636 = vmatpush2.msra.mxu0 0.0
        %1637 = vmatprep.subr.mxu0 0.0
        %1638 = vmatpush2.msra.mxu0 0.0
        %1639 = vmatprep.subr.mxu0 0.0
        %1640 = vmatpush2.msra.mxu0 0.0
        %1641 = vmatprep.subr.mxu0 0.0
        %1642 = vmatpush2.msra.mxu0 0.0
        %1643 = vmatprep.subr.mxu0 0.0
        %1644 = vmatpush2.msra.mxu0 0.0
        %1645 = vmatprep.mubr.f32.mxu0 0.0
        %1646 = vmatmul.mubr.f32.gmra.mxu0 %v1576
        %v1647 = vpop.f32.mrf.mxu0
        %v1648 = vadd.f32 0.0, %v1647
        %v1649 = vpop.f32.mrf.mxu0
        %1650 = vmatprep.mubr.f32.mxu0 0.0
        %1651 = vmatmul.mubr.f32.gmra.mxu0 %v1579
        %v1652 = vpop.f32.mrf.mxu0
        %v1653 = vadd.f32 0.0, %v1652
        %v1654 = vpop.f32.mrf.mxu0
        %1655 = vdwg.mxu0
        %v1657 = vsel %vm1397, %v1482, 0
        %v1660 = vsel %vm1397, %v1483, 0
        %1662 = vmatprep.subr.mxu0 0.0
        %1663 = vmatpush1.msra.mxu0 0.0
        %1664 = vmatprep.subr.mxu0 0.0
        %1665 = vmatpush1.msra.mxu0 0.0
        %1666 = vmatprep.subr.mxu0 0.0
        %1667 = vmatpush1.msra.mxu0 0.0
        %1668 = vmatprep.subr.mxu0 0.0
        %1669 = vmatpush1.msra.mxu0 0.0
        %1670 = vmatprep.subr.mxu0 0.0
        %1671 = vmatpush1.msra.mxu0 0.0
        %1672 = vmatprep.subr.mxu0 0.0
        %1673 = vmatpush1.msra.mxu0 0.0
        %1674 = vmatprep.subr.mxu0 0.0
        %1675 = vmatpush1.msra.mxu0 0.0
        %1676 = vmatprep.subr.mxu0 0.0
        %1677 = vmatpush1.msra.mxu0 0.0
        %1678 = vmatprep.subr.mxu0 0.0
        %1679 = vmatpush1.msra.mxu0 0.0
        %1680 = vmatprep.subr.mxu0 0.0
        %1681 = vmatpush1.msra.mxu0 0.0
        %1682 = vmatprep.subr.mxu0 0.0
        %1683 = vmatpush1.msra.mxu0 0.0
        %1684 = vmatprep.subr.mxu0 0.0
        %1685 = vmatpush1.msra.mxu0 0.0
        %1686 = vmatprep.subr.mxu0 0.0
        %1687 = vmatpush1.msra.mxu0 0.0
        %1688 = vmatprep.subr.mxu0 0.0
        %1689 = vmatpush1.msra.mxu0 0.0
        %1690 = vmatprep.subr.mxu0 0.0
        %1691 = vmatpush1.msra.mxu0 %v1027
        %1692 = vmatprep.subr.mxu0 0.0
        %1693 = vmatpush1.msra.mxu0 %v1022
        %1694 = vmatprep.subr.mxu0 0.0
        %1695 = vmatpush2.msra.mxu0 0.0
        %1696 = vmatprep.subr.mxu0 0.0
        %1697 = vmatpush2.msra.mxu0 0.0
        %1698 = vmatprep.subr.mxu0 0.0
        %1699 = vmatpush2.msra.mxu0 0.0
        %1700 = vmatprep.subr.mxu0 0.0
        %1701 = vmatpush2.msra.mxu0 0.0
        %1702 = vmatprep.subr.mxu0 0.0
        %1703 = vmatpush2.msra.mxu0 0.0
        %1704 = vmatprep.subr.mxu0 0.0
        %1705 = vmatpush2.msra.mxu0 0.0
        %1706 = vmatprep.subr.mxu0 0.0
        %1707 = vmatpush2.msra.mxu0 0.0
        %1708 = vmatprep.subr.mxu0 0.0
        %1709 = vmatpush2.msra.mxu0 0.0
        %1710 = vmatprep.subr.mxu0 0.0
        %1711 = vmatpush2.msra.mxu0 0.0
        %1712 = vmatprep.subr.mxu0 0.0
        %1713 = vmatpush2.msra.mxu0 0.0
        %1714 = vmatprep.subr.mxu0 0.0
        %1715 = vmatpush2.msra.mxu0 0.0
        %1716 = vmatprep.subr.mxu0 0.0
        %1717 = vmatpush2.msra.mxu0 0.0
        %1718 = vmatprep.subr.mxu0 0.0
        %1719 = vmatpush2.msra.mxu0 0.0
        %1720 = vmatprep.subr.mxu0 0.0
        %1721 = vmatpush2.msra.mxu0 0.0
        %1722 = vmatprep.subr.mxu0 0.0
        %1723 = vmatpush2.msra.mxu0 0.0
        %1724 = vmatprep.subr.mxu0 0.0
        %1725 = vmatpush2.msra.mxu0 0.0
        %1726 = vmatprep.mubr.f32.mxu0 0.0
        %1727 = vmatmul.mubr.f32.gmra.mxu0 %v1657
        %v1728 = vpop.f32.mrf.mxu0
        %v1729 = vadd.f32 0.0, %v1728
        %v1730 = vpop.f32.mrf.mxu0
        %1731 = vmatprep.mubr.f32.mxu0 0.0
        %1732 = vmatmul.mubr.f32.gmra.mxu0 %v1660
        %v1733 = vpop.f32.mrf.mxu0
        %v1734 = vadd.f32 0.0, %v1733
        %v1735 = vpop.f32.mrf.mxu0
        %1736 = vdwg.mxu0
        %v1738 = vsel %vm1397, %v1484, 0
        %v1741 = vsel %vm1397, %v1485, 0
        %1743 = vmatprep.subr.mxu0 0.0
        %1744 = vmatpush1.msra.mxu0 0.0
        %1745 = vmatprep.subr.mxu0 0.0
        %1746 = vmatpush1.msra.mxu0 0.0
        %1747 = vmatprep.subr.mxu0 0.0
        %1748 = vmatpush1.msra.mxu0 0.0
        %1749 = vmatprep.subr.mxu0 0.0
        %1750 = vmatpush1.msra.mxu0 0.0
        %1751 = vmatprep.subr.mxu0 0.0
        %1752 = vmatpush1.msra.mxu0 0.0
        %1753 = vmatprep.subr.mxu0 0.0
        %1754 = vmatpush1.msra.mxu0 0.0
        %1755 = vmatprep.subr.mxu0 0.0
        %1756 = vmatpush1.msra.mxu0 0.0
        %1757 = vmatprep.subr.mxu0 0.0
        %1758 = vmatpush1.msra.mxu0 0.0
        %1759 = vmatprep.subr.mxu0 0.0
        %1760 = vmatpush1.msra.mxu0 0.0
        %1761 = vmatprep.subr.mxu0 0.0
        %1762 = vmatpush1.msra.mxu0 0.0
        %1763 = vmatprep.subr.mxu0 0.0
        %1764 = vmatpush1.msra.mxu0 0.0
        %1765 = vmatprep.subr.mxu0 0.0
        %1766 = vmatpush1.msra.mxu0 0.0
        %1767 = vmatprep.subr.mxu0 0.0
        %1768 = vmatpush1.msra.mxu0 0.0
        %1769 = vmatprep.subr.mxu0 0.0
        %1770 = vmatpush1.msra.mxu0 0.0
        %1771 = vmatprep.subr.mxu0 0.0
        %1772 = vmatpush1.msra.mxu0 %v1037
        %1773 = vmatprep.subr.mxu0 0.0
        %1774 = vmatpush1.msra.mxu0 %v1032
        %1775 = vmatprep.subr.mxu0 0.0
        %1776 = vmatpush2.msra.mxu0 0.0
        %1777 = vmatprep.subr.mxu0 0.0
        %1778 = vmatpush2.msra.mxu0 0.0
        %1779 = vmatprep.subr.mxu0 0.0
        %1780 = vmatpush2.msra.mxu0 0.0
        %1781 = vmatprep.subr.mxu0 0.0
        %1782 = vmatpush2.msra.mxu0 0.0
        %1783 = vmatprep.subr.mxu0 0.0
        %1784 = vmatpush2.msra.mxu0 0.0
        %1785 = vmatprep.subr.mxu0 0.0
        %1786 = vmatpush2.msra.mxu0 0.0
        %1787 = vmatprep.subr.mxu0 0.0
        %1788 = vmatpush2.msra.mxu0 0.0
        %1789 = vmatprep.subr.mxu0 0.0
        %1790 = vmatpush2.msra.mxu0 0.0
        %1791 = vmatprep.subr.mxu0 0.0
        %1792 = vmatpush2.msra.mxu0 0.0
        %1793 = vmatprep.subr.mxu0 0.0
        %1794 = vmatpush2.msra.mxu0 0.0
        %1795 = vmatprep.subr.mxu0 0.0
        %1796 = vmatpush2.msra.mxu0 0.0
        %1797 = vmatprep.subr.mxu0 0.0
        %1798 = vmatpush2.msra.mxu0 0.0
        %1799 = vmatprep.subr.mxu0 0.0
        %1800 = vmatpush2.msra.mxu0 0.0
        %1801 = vmatprep.subr.mxu0 0.0
        %1802 = vmatpush2.msra.mxu0 0.0
        %1803 = vmatprep.subr.mxu0 0.0
        %1804 = vmatpush2.msra.mxu0 0.0
        %1805 = vmatprep.subr.mxu0 0.0
        %1806 = vmatpush2.msra.mxu0 0.0
        %1807 = vmatprep.mubr.f32.mxu0 0.0
        %1808 = vmatmul.mubr.f32.gmra.mxu0 %v1738
        %v1809 = vpop.f32.mrf.mxu0
        %v1810 = vadd.f32 0.0, %v1809
        %v1811 = vpop.f32.mrf.mxu0
        %1812 = vmatprep.mubr.f32.mxu0 0.0
        %1813 = vmatmul.mubr.f32.gmra.mxu0 %v1741
        %v1814 = vpop.f32.mrf.mxu0
        %v1815 = vadd.f32 0.0, %v1814
        %v1816 = vpop.f32.mrf.mxu0
        %1817 = vdwg.mxu0
        %1818 = vst.msk [vmem:[#allocation2] sm:$0xff] %vm1040, %v1567
        %1819 = vst.msk [vmem:[#allocation2 + $0x8] sm:$0xff] %vm1040, %v1572
        %1820 = vst.msk [vmem:[#allocation2 + $0x10] sm:$0xff] %vm1040, %v1648
        %1821 = vst.msk [vmem:[#allocation2 + $0x18] sm:$0xff] %vm1040, %v1653
        %1822 = vst.msk [vmem:[#allocation2 + $0x20] sm:$0xff] %vm1040, %v1729
        %1823 = vst.msk [vmem:[#allocation2 + $0x28] sm:$0xff] %vm1040, %v1734
        %1824 = vst.msk [vmem:[#allocation2 + $0x30] sm:$0xff] %vm1040, %v1810
        %1825 = vst.msk [vmem:[#allocation2 + $0x38] sm:$0xff] %vm1040, %v1815
        %1826 = vrot.lane.b32.xlu0 %v722, 120
        %v1827 = vpop.permute.xlu0 %1826
        %1828 = vrot.lane.b32.xlu0 %v727, 120
        %v1829 = vpop.permute.xlu0 %1828
        %1830 = vrot.lane.b32.xlu0 %v862, 120
        %v1831 = vpop.permute.xlu0 %1830
        %1832 = vrot.lane.b32.xlu0 %v867, 120
        %v1833 = vpop.permute.xlu0 %1832
        %v1834 = vsel %vm1040, %v1827, 0
        %v1836 = vsel %vm1040, %v1829, 0
        %v1838 = vsel %vm1040, %v1831, 0
        %v1840 = vsel %vm1040, %v1833, 0
        %1842 = vmatprep.subr.mxu0 0.0
        %1843 = vmatpush1.xpose.msra.mxu0 0.0
        %1844 = vmatprep.subr.mxu0 0.0
        %1845 = vmatpush1.xpose.msra.mxu0 0.0
        %1846 = vmatprep.subr.mxu0 0.0
        %1847 = vmatpush1.xpose.msra.mxu0 0.0
        %1848 = vmatprep.subr.mxu0 0.0
        %1849 = vmatpush1.xpose.msra.mxu0 0.0
        %1850 = vmatprep.subr.mxu0 0.0
        %1851 = vmatpush1.xpose.msra.mxu0 0.0
        %1852 = vmatprep.subr.mxu0 0.0
        %1853 = vmatpush1.xpose.msra.mxu0 0.0
        %1854 = vmatprep.subr.mxu0 0.0
        %1855 = vmatpush1.xpose.msra.mxu0 0.0
        %1856 = vmatprep.subr.mxu0 0.0
        %1857 = vmatpush1.xpose.msra.mxu0 0.0
        %1858 = vmatprep.subr.mxu0 0.0
        %1859 = vmatpush1.xpose.msra.mxu0 0.0
        %1860 = vmatprep.subr.mxu0 0.0
        %1861 = vmatpush1.xpose.msra.mxu0 0.0
        %1862 = vmatprep.subr.mxu0 0.0
        %1863 = vmatpush1.xpose.msra.mxu0 0.0
        %1864 = vmatprep.subr.mxu0 0.0
        %1865 = vmatpush1.xpose.msra.mxu0 0.0
        %1866 = vmatprep.subr.mxu0 0.0
        %1867 = vmatpush1.xpose.msra.mxu0 0.0
        %1868 = vmatprep.subr.mxu0 0.0
        %1869 = vmatpush1.xpose.msra.mxu0 0.0
        %1870 = vmatprep.subr.mxu0 0.0
        %1871 = vmatpush1.xpose.msra.mxu0 %v1840
        %1872 = vmatprep.subr.mxu0 0.0
        %1873 = vmatpush1.xpose.msra.mxu0 %v1838
        %1874 = vmatprep.subr.mxu0 0.0
        %1875 = vmatpush2.xpose.msra.mxu0 0.0
        %1876 = vmatprep.subr.mxu0 0.0
        %1877 = vmatpush2.xpose.msra.mxu0 0.0
        %1878 = vmatprep.subr.mxu0 0.0
        %1879 = vmatpush2.xpose.msra.mxu0 0.0
        %1880 = vmatprep.subr.mxu0 0.0
        %1881 = vmatpush2.xpose.msra.mxu0 0.0
        %1882 = vmatprep.subr.mxu0 0.0
        %1883 = vmatpush2.xpose.msra.mxu0 0.0
        %1884 = vmatprep.subr.mxu0 0.0
        %1885 = vmatpush2.xpose.msra.mxu0 0.0
        %1886 = vmatprep.subr.mxu0 0.0
        %1887 = vmatpush2.xpose.msra.mxu0 0.0
        %1888 = vmatprep.subr.mxu0 0.0
        %1889 = vmatpush2.xpose.msra.mxu0 0.0
        %1890 = vmatprep.subr.mxu0 0.0
        %1891 = vmatpush2.xpose.msra.mxu0 0.0
        %1892 = vmatprep.subr.mxu0 0.0
        %1893 = vmatpush2.xpose.msra.mxu0 0.0
        %1894 = vmatprep.subr.mxu0 0.0
        %1895 = vmatpush2.xpose.msra.mxu0 0.0
        %1896 = vmatprep.subr.mxu0 0.0
        %1897 = vmatpush2.xpose.msra.mxu0 0.0
        %1898 = vmatprep.subr.mxu0 0.0
        %1899 = vmatpush2.xpose.msra.mxu0 0.0
        %1900 = vmatprep.subr.mxu0 0.0
        %1901 = vmatpush2.xpose.msra.mxu0 0.0
        %1902 = vmatprep.subr.mxu0 0.0
        %1903 = vmatpush2.xpose.msra.mxu0 0.0
        %1904 = vmatprep.subr.mxu0 0.0
        %1905 = vmatpush2.xpose.msra.mxu0 0.0
        %1906 = vmatprep.mubr.f32.mxu0 0.0
        %1907 = vmatmul.mubr.f32.gmra.mxu0 %v1834
        %v1908 = vpop.f32.mrf.mxu0
        %v1909 = vadd.f32 0.0, %v1908
        %v1910 = vpop.f32.mrf.mxu0
        %1911 = vmatprep.mubr.f32.mxu0 0.0
        %1912 = vmatmul.mubr.f32.gmra.mxu0 %v1836
        %v1913 = vpop.f32.mrf.mxu0
        %v1914 = vadd.f32 0.0, %v1913
        %v1915 = vpop.f32.mrf.mxu0
        %1916 = vdwg.mxu0
        %1917 = vrot.lane.b32.xlu0 %v732, 120
        %v1918 = vpop.permute.xlu0 %1917
        %1919 = vrot.lane.b32.xlu0 %v737, 120
        %v1920 = vpop.permute.xlu0 %1919
        %1921 = vrot.lane.b32.xlu0 %v872, 120
        %v1922 = vpop.permute.xlu0 %1921
        %1923 = vrot.lane.b32.xlu0 %v877, 120
        %v1924 = vpop.permute.xlu0 %1923
        %v1925 = vsel %vm1040, %v1918, 0
        %v1927 = vsel %vm1040, %v1920, 0
        %v1929 = vsel %vm1040, %v1922, 0
        %v1931 = vsel %vm1040, %v1924, 0
        %1933 = vmatprep.subr.mxu0 0.0
        %1934 = vmatpush1.xpose.msra.mxu0 0.0
        %1935 = vmatprep.subr.mxu0 0.0
        %1936 = vmatpush1.xpose.msra.mxu0 0.0
        %1937 = vmatprep.subr.mxu0 0.0
        %1938 = vmatpush1.xpose.msra.mxu0 0.0
        %1939 = vmatprep.subr.mxu0 0.0
        %1940 = vmatpush1.xpose.msra.mxu0 0.0
        %1941 = vmatprep.subr.mxu0 0.0
        %1942 = vmatpush1.xpose.msra.mxu0 0.0
        %1943 = vmatprep.subr.mxu0 0.0
        %1944 = vmatpush1.xpose.msra.mxu0 0.0
        %1945 = vmatprep.subr.mxu0 0.0
        %1946 = vmatpush1.xpose.msra.mxu0 0.0
        %1947 = vmatprep.subr.mxu0 0.0
        %1948 = vmatpush1.xpose.msra.mxu0 0.0
        %1949 = vmatprep.subr.mxu0 0.0
        %1950 = vmatpush1.xpose.msra.mxu0 0.0
        %1951 = vmatprep.subr.mxu0 0.0
        %1952 = vmatpush1.xpose.msra.mxu0 0.0
        %1953 = vmatprep.subr.mxu0 0.0
        %1954 = vmatpush1.xpose.msra.mxu0 0.0
        %1955 = vmatprep.subr.mxu0 0.0
        %1956 = vmatpush1.xpose.msra.mxu0 0.0
        %1957 = vmatprep.subr.mxu0 0.0
        %1958 = vmatpush1.xpose.msra.mxu0 0.0
        %1959 = vmatprep.subr.mxu0 0.0
        %1960 = vmatpush1.xpose.msra.mxu0 0.0
        %1961 = vmatprep.subr.mxu0 0.0
        %1962 = vmatpush1.xpose.msra.mxu0 %v1931
        %1963 = vmatprep.subr.mxu0 0.0
        %1964 = vmatpush1.xpose.msra.mxu0 %v1929
        %1965 = vmatprep.subr.mxu0 0.0
        %1966 = vmatpush2.xpose.msra.mxu0 0.0
        %1967 = vmatprep.subr.mxu0 0.0
        %1968 = vmatpush2.xpose.msra.mxu0 0.0
        %1969 = vmatprep.subr.mxu0 0.0
        %1970 = vmatpush2.xpose.msra.mxu0 0.0
        %1971 = vmatprep.subr.mxu0 0.0
        %1972 = vmatpush2.xpose.msra.mxu0 0.0
        %1973 = vmatprep.subr.mxu0 0.0
        %1974 = vmatpush2.xpose.msra.mxu0 0.0
        %1975 = vmatprep.subr.mxu0 0.0
        %1976 = vmatpush2.xpose.msra.mxu0 0.0
        %1977 = vmatprep.subr.mxu0 0.0
        %1978 = vmatpush2.xpose.msra.mxu0 0.0
        %1979 = vmatprep.subr.mxu0 0.0
        %1980 = vmatpush2.xpose.msra.mxu0 0.0
        %1981 = vmatprep.subr.mxu0 0.0
        %1982 = vmatpush2.xpose.msra.mxu0 0.0
        %1983 = vmatprep.subr.mxu0 0.0
        %1984 = vmatpush2.xpose.msra.mxu0 0.0
        %1985 = vmatprep.subr.mxu0 0.0
        %1986 = vmatpush2.xpose.msra.mxu0 0.0
        %1987 = vmatprep.subr.mxu0 0.0
        %1988 = vmatpush2.xpose.msra.mxu0 0.0
        %1989 = vmatprep.subr.mxu0 0.0
        %1990 = vmatpush2.xpose.msra.mxu0 0.0
        %1991 = vmatprep.subr.mxu0 0.0
        %1992 = vmatpush2.xpose.msra.mxu0 0.0
        %1993 = vmatprep.subr.mxu0 0.0
        %1994 = vmatpush2.xpose.msra.mxu0 0.0
        %1995 = vmatprep.subr.mxu0 0.0
        %1996 = vmatpush2.xpose.msra.mxu0 0.0
        %1997 = vmatprep.mubr.f32.mxu0 0.0
        %1998 = vmatmul.mubr.f32.gmra.mxu0 %v1925
        %v1999 = vpop.f32.mrf.mxu0
        %v2000 = vadd.f32 0.0, %v1999
        %v2001 = vpop.f32.mrf.mxu0
        %2002 = vmatprep.mubr.f32.mxu0 0.0
        %2003 = vmatmul.mubr.f32.gmra.mxu0 %v1927
        %v2004 = vpop.f32.mrf.mxu0
        %v2005 = vadd.f32 0.0, %v2004
        %v2006 = vpop.f32.mrf.mxu0
        %2007 = vdwg.mxu0
        %2008 = vrot.lane.b32.xlu0 %v742, 120
        %v2009 = vpop.permute.xlu0 %2008
        %2010 = vrot.lane.b32.xlu0 %v747, 120
        %v2011 = vpop.permute.xlu0 %2010
        %2012 = vrot.lane.b32.xlu0 %v882, 120
        %v2013 = vpop.permute.xlu0 %2012
        %2014 = vrot.lane.b32.xlu0 %v887, 120
        %v2015 = vpop.permute.xlu0 %2014
        %v2016 = vsel %vm1040, %v2009, 0
        %v2018 = vsel %vm1040, %v2011, 0
        %v2020 = vsel %vm1040, %v2013, 0
        %v2022 = vsel %vm1040, %v2015, 0
        %2024 = vmatprep.subr.mxu0 0.0
        %2025 = vmatpush1.xpose.msra.mxu0 0.0
        %2026 = vmatprep.subr.mxu0 0.0
        %2027 = vmatpush1.xpose.msra.mxu0 0.0
        %2028 = vmatprep.subr.mxu0 0.0
        %2029 = vmatpush1.xpose.msra.mxu0 0.0
        %2030 = vmatprep.subr.mxu0 0.0
        %2031 = vmatpush1.xpose.msra.mxu0 0.0
        %2032 = vmatprep.subr.mxu0 0.0
        %2033 = vmatpush1.xpose.msra.mxu0 0.0
        %2034 = vmatprep.subr.mxu0 0.0
        %2035 = vmatpush1.xpose.msra.mxu0 0.0
        %2036 = vmatprep.subr.mxu0 0.0
        %2037 = vmatpush1.xpose.msra.mxu0 0.0
        %2038 = vmatprep.subr.mxu0 0.0
        %2039 = vmatpush1.xpose.msra.mxu0 0.0
        %2040 = vmatprep.subr.mxu0 0.0
        %2041 = vmatpush1.xpose.msra.mxu0 0.0
        %2042 = vmatprep.subr.mxu0 0.0
        %2043 = vmatpush1.xpose.msra.mxu0 0.0
        %2044 = vmatprep.subr.mxu0 0.0
        %2045 = vmatpush1.xpose.msra.mxu0 0.0
        %2046 = vmatprep.subr.mxu0 0.0
        %2047 = vmatpush1.xpose.msra.mxu0 0.0
        %2048 = vmatprep.subr.mxu0 0.0
        %2049 = vmatpush1.xpose.msra.mxu0 0.0
        %2050 = vmatprep.subr.mxu0 0.0
        %2051 = vmatpush1.xpose.msra.mxu0 0.0
        %2052 = vmatprep.subr.mxu0 0.0
        %2053 = vmatpush1.xpose.msra.mxu0 %v2022
        %2054 = vmatprep.subr.mxu0 0.0
        %2055 = vmatpush1.xpose.msra.mxu0 %v2020
        %2056 = vmatprep.subr.mxu0 0.0
        %2057 = vmatpush2.xpose.msra.mxu0 0.0
        %2058 = vmatprep.subr.mxu0 0.0
        %2059 = vmatpush2.xpose.msra.mxu0 0.0
        %2060 = vmatprep.subr.mxu0 0.0
        %2061 = vmatpush2.xpose.msra.mxu0 0.0
        %2062 = vmatprep.subr.mxu0 0.0
        %2063 = vmatpush2.xpose.msra.mxu0 0.0
        %2064 = vmatprep.subr.mxu0 0.0
        %2065 = vmatpush2.xpose.msra.mxu0 0.0
        %2066 = vmatprep.subr.mxu0 0.0
        %2067 = vmatpush2.xpose.msra.mxu0 0.0
        %2068 = vmatprep.subr.mxu0 0.0
        %2069 = vmatpush2.xpose.msra.mxu0 0.0
        %2070 = vmatprep.subr.mxu0 0.0
        %2071 = vmatpush2.xpose.msra.mxu0 0.0
        %2072 = vmatprep.subr.mxu0 0.0
        %2073 = vmatpush2.xpose.msra.mxu0 0.0
        %2074 = vmatprep.subr.mxu0 0.0
        %2075 = vmatpush2.xpose.msra.mxu0 0.0
        %2076 = vmatprep.subr.mxu0 0.0
        %2077 = vmatpush2.xpose.msra.mxu0 0.0
        %2078 = vmatprep.subr.mxu0 0.0
        %2079 = vmatpush2.xpose.msra.mxu0 0.0
        %2080 = vmatprep.subr.mxu0 0.0
        %2081 = vmatpush2.xpose.msra.mxu0 0.0
        %2082 = vmatprep.subr.mxu0 0.0
        %2083 = vmatpush2.xpose.msra.mxu0 0.0
        %2084 = vmatprep.subr.mxu0 0.0
        %2085 = vmatpush2.xpose.msra.mxu0 0.0
        %2086 = vmatprep.subr.mxu0 0.0
        %2087 = vmatpush2.xpose.msra.mxu0 0.0
        %2088 = vmatprep.mubr.f32.mxu0 0.0
        %2089 = vmatmul.mubr.f32.gmra.mxu0 %v2016
        %v2090 = vpop.f32.mrf.mxu0
        %v2091 = vadd.f32 0.0, %v2090
        %v2092 = vpop.f32.mrf.mxu0
        %2093 = vmatprep.mubr.f32.mxu0 0.0
        %2094 = vmatmul.mubr.f32.gmra.mxu0 %v2018
        %v2095 = vpop.f32.mrf.mxu0
        %v2096 = vadd.f32 0.0, %v2095
        %v2097 = vpop.f32.mrf.mxu0
        %2098 = vdwg.mxu0
        %2099 = vrot.lane.b32.xlu0 %v752, 120
        %v2100 = vpop.permute.xlu0 %2099
        %2101 = vrot.lane.b32.xlu0 %v757, 120
        %v2102 = vpop.permute.xlu0 %2101
        %2103 = vrot.lane.b32.xlu0 %v892, 120
        %v2104 = vpop.permute.xlu0 %2103
        %2105 = vrot.lane.b32.xlu0 %v897, 120
        %v2106 = vpop.permute.xlu0 %2105
        %v2107 = vsel %vm1040, %v2100, 0
        %v2109 = vsel %vm1040, %v2102, 0
        %v2111 = vsel %vm1040, %v2104, 0
        %v2113 = vsel %vm1040, %v2106, 0
        %2115 = vmatprep.subr.mxu0 0.0
        %2116 = vmatpush1.xpose.msra.mxu0 0.0
        %2117 = vmatprep.subr.mxu0 0.0
        %2118 = vmatpush1.xpose.msra.mxu0 0.0
        %2119 = vmatprep.subr.mxu0 0.0
        %2120 = vmatpush1.xpose.msra.mxu0 0.0
        %2121 = vmatprep.subr.mxu0 0.0
        %2122 = vmatpush1.xpose.msra.mxu0 0.0
        %2123 = vmatprep.subr.mxu0 0.0
        %2124 = vmatpush1.xpose.msra.mxu0 0.0
        %2125 = vmatprep.subr.mxu0 0.0
        %2126 = vmatpush1.xpose.msra.mxu0 0.0
        %2127 = vmatprep.subr.mxu0 0.0
        %2128 = vmatpush1.xpose.msra.mxu0 0.0
        %2129 = vmatprep.subr.mxu0 0.0
        %2130 = vmatpush1.xpose.msra.mxu0 0.0
        %2131 = vmatprep.subr.mxu0 0.0
        %2132 = vmatpush1.xpose.msra.mxu0 0.0
        %2133 = vmatprep.subr.mxu0 0.0
        %2134 = vmatpush1.xpose.msra.mxu0 0.0
        %2135 = vmatprep.subr.mxu0 0.0
        %2136 = vmatpush1.xpose.msra.mxu0 0.0
        %2137 = vmatprep.subr.mxu0 0.0
        %2138 = vmatpush1.xpose.msra.mxu0 0.0
        %2139 = vmatprep.subr.mxu0 0.0
        %2140 = vmatpush1.xpose.msra.mxu0 0.0
        %2141 = vmatprep.subr.mxu0 0.0
        %2142 = vmatpush1.xpose.msra.mxu0 0.0
        %2143 = vmatprep.subr.mxu0 0.0
        %2144 = vmatpush1.xpose.msra.mxu0 %v2113
        %2145 = vmatprep.subr.mxu0 0.0
        %2146 = vmatpush1.xpose.msra.mxu0 %v2111
        %2147 = vmatprep.subr.mxu0 0.0
        %2148 = vmatpush2.xpose.msra.mxu0 0.0
        %2149 = vmatprep.subr.mxu0 0.0
        %2150 = vmatpush2.xpose.msra.mxu0 0.0
        %2151 = vmatprep.subr.mxu0 0.0
        %2152 = vmatpush2.xpose.msra.mxu0 0.0
        %2153 = vmatprep.subr.mxu0 0.0
        %2154 = vmatpush2.xpose.msra.mxu0 0.0
        %2155 = vmatprep.subr.mxu0 0.0
        %2156 = vmatpush2.xpose.msra.mxu0 0.0
        %2157 = vmatprep.subr.mxu0 0.0
        %2158 = vmatpush2.xpose.msra.mxu0 0.0
        %2159 = vmatprep.subr.mxu0 0.0
        %2160 = vmatpush2.xpose.msra.mxu0 0.0
        %2161 = vmatprep.subr.mxu0 0.0
        %2162 = vmatpush2.xpose.msra.mxu0 0.0
        %2163 = vmatprep.subr.mxu0 0.0
        %2164 = vmatpush2.xpose.msra.mxu0 0.0
        %2165 = vmatprep.subr.mxu0 0.0
        %2166 = vmatpush2.xpose.msra.mxu0 0.0
        %2167 = vmatprep.subr.mxu0 0.0
        %2168 = vmatpush2.xpose.msra.mxu0 0.0
        %2169 = vmatprep.subr.mxu0 0.0
        %2170 = vmatpush2.xpose.msra.mxu0 0.0
        %2171 = vmatprep.subr.mxu0 0.0
        %2172 = vmatpush2.xpose.msra.mxu0 0.0
        %2173 = vmatprep.subr.mxu0 0.0
        %2174 = vmatpush2.xpose.msra.mxu0 0.0
        %2175 = vmatprep.subr.mxu0 0.0
        %2176 = vmatpush2.xpose.msra.mxu0 0.0
        %2177 = vmatprep.subr.mxu0 0.0
        %2178 = vmatpush2.xpose.msra.mxu0 0.0
        %2179 = vmatprep.mubr.f32.mxu0 0.0
        %2180 = vmatmul.mubr.f32.gmra.mxu0 %v2107
        %v2181 = vpop.f32.mrf.mxu0
        %v2182 = vadd.f32 0.0, %v2181
        %v2183 = vpop.f32.mrf.mxu0
        %2184 = vmatprep.mubr.f32.mxu0 0.0
        %2185 = vmatmul.mubr.f32.gmra.mxu0 %v2109
        %v2186 = vpop.f32.mrf.mxu0
        %v2187 = vadd.f32 0.0, %v2186
        %v2188 = vpop.f32.mrf.mxu0
        %2189 = vdwg.mxu0
        %v2190 = vmul.f32 %v1909, 0.35355338
        %v2191 = vmul.f32 %v1914, 0.35355338
        %v2192 = vmul.f32 %v2000, 0.35355338
        %v2193 = vmul.f32 %v2005, 0.35355338
        %v2194 = vmul.f32 %v2091, 0.35355338
        %v2195 = vmul.f32 %v2096, 0.35355338
        %v2196 = vmul.f32 %v2182, 0.35355338
        %v2197 = vmul.f32 %v2187, 0.35355338
        %v2198 = vsel %vm1397, %v2190, -inf
        %2199 = vmax.xlane.f32.xlu0 %v2198
        %v2200 = vpop.xlane.xlu0 %2199
        %v2201 = vsel %vm1397, %v2191, -inf
        %2202 = vmax.xlane.f32.xlu0 %v2201
        %v2203 = vpop.xlane.xlu0 %2202
        %v2204 = vsel %vm1397, %v2192, -inf
        %2205 = vmax.xlane.f32.xlu0 %v2204
        %v2206 = vpop.xlane.xlu0 %2205
        %v2207 = vsel %vm1397, %v2193, -inf
        %2208 = vmax.xlane.f32.xlu0 %v2207
        %v2209 = vpop.xlane.xlu0 %2208
        %v2210 = vsel %vm1397, %v2194, -inf
        %2211 = vmax.xlane.f32.xlu0 %v2210
        %v2212 = vpop.xlane.xlu0 %2211
        %v2213 = vsel %vm1397, %v2195, -inf
        %2214 = vmax.xlane.f32.xlu0 %v2213
        %v2215 = vpop.xlane.xlu0 %2214
        %v2216 = vsel %vm1397, %v2196, -inf
        %2217 = vmax.xlane.f32.xlu0 %v2216
        %v2218 = vpop.xlane.xlu0 %2217
        %v2219 = vsel %vm1397, %v2197, -inf
        %2220 = vmax.xlane.f32.xlu0 %v2219
        %v2221 = vpop.xlane.xlu0 %2220
        %v2222 = vsub.f32 %v2190, %v2200
        %v2223 = vsub.f32 %v2191, %v2203
        %v2224 = vsub.f32 %v2192, %v2206
        %v2225 = vsub.f32 %v2193, %v2209
        %v2226 = vsub.f32 %v2194, %v2212
        %v2227 = vsub.f32 %v2195, %v2215
        %v2228 = vsub.f32 %v2196, %v2218
        %v2229 = vsub.f32 %v2197, %v2221
        %v2230 = vmul.f32 %v2222, 1.442695
        %v2231 = vpow.pop %v2230
        %v2232 = vmul.f32 %v2223, 1.442695
        %v2233 = vpow.pop %v2232
        %v2234 = vmul.f32 %v2224, 1.442695
        %v2235 = vpow.pop %v2234
        %v2236 = vmul.f32 %v2225, 1.442695
        %v2237 = vpow.pop %v2236
        %v2238 = vmul.f32 %v2226, 1.442695
        %v2239 = vpow.pop %v2238
        %v2240 = vmul.f32 %v2227, 1.442695
        %v2241 = vpow.pop %v2240
        %v2242 = vmul.f32 %v2228, 1.442695
        %v2243 = vpow.pop %v2242
        %v2244 = vmul.f32 %v2229, 1.442695
        %v2245 = vpow.pop %v2244
        %v2246 = vsel %vm1397, %v2231, 0.0
        %2247 = vadd.xlane.f32.xlu0 %v2246
        %v2248 = vpop.xlane.xlu0 %2247
        %v2249 = vsel %vm1397, %v2233, 0.0
        %2250 = vadd.xlane.f32.xlu0 %v2249
        %v2251 = vpop.xlane.xlu0 %2250
        %v2252 = vsel %vm1397, %v2235, 0.0
        %2253 = vadd.xlane.f32.xlu0 %v2252
        %v2254 = vpop.xlane.xlu0 %2253
        %v2255 = vsel %vm1397, %v2237, 0.0
        %2256 = vadd.xlane.f32.xlu0 %v2255
        %v2257 = vpop.xlane.xlu0 %2256
        %v2258 = vsel %vm1397, %v2239, 0.0
        %2259 = vadd.xlane.f32.xlu0 %v2258
        %v2260 = vpop.xlane.xlu0 %2259
        %v2261 = vsel %vm1397, %v2241, 0.0
        %2262 = vadd.xlane.f32.xlu0 %v2261
        %v2263 = vpop.xlane.xlu0 %2262
        %v2264 = vsel %vm1397, %v2243, 0.0
        %2265 = vadd.xlane.f32.xlu0 %v2264
        %v2266 = vpop.xlane.xlu0 %2265
        %v2267 = vsel %vm1397, %v2245, 0.0
        %2268 = vadd.xlane.f32.xlu0 %v2267
        %v2269 = vpop.xlane.xlu0 %2268
        %v2270 = vrcp.pop %v2248
        %v2271 = vrcp.pop %v2251
        %v2272 = vrcp.pop %v2254
        %v2273 = vrcp.pop %v2257
        %v2274 = vrcp.pop %v2260
        %v2275 = vrcp.pop %v2263
        %v2276 = vrcp.pop %v2266
        %v2277 = vrcp.pop %v2269
        %v2278 = vmul.f32 %v2231, %v2270
        %v2279 = vmul.f32 %v2233, %v2271
        %v2280 = vmul.f32 %v2235, %v2272
        %v2281 = vmul.f32 %v2237, %v2273
        %v2282 = vmul.f32 %v2239, %v2274
        %v2283 = vmul.f32 %v2241, %v2275
        %v2284 = vmul.f32 %v2243, %v2276
        %v2285 = vmul.f32 %v2245, %v2277
        %s2286 = scalar_lea.vmem %s589, 64 [#allocation18]
        %2287 = vst.msk [vmem:[%s2286] sm:$0xff] %vm1397, %v2278
        %2288 = vst.msk [vmem:[%s2286 + $0x8] sm:$0xff] %vm1397, %v2279
        %2289 = vst.msk [vmem:[%s2286 + $0x10] sm:$0xff] %vm1397, %v2280
        %2290 = vst.msk [vmem:[%s2286 + $0x18] sm:$0xff] %vm1397, %v2281
        %2291 = vst.msk [vmem:[%s2286 + $0x20] sm:$0xff] %vm1397, %v2282
        %2292 = vst.msk [vmem:[%s2286 + $0x28] sm:$0xff] %vm1397, %v2283
        %2293 = vst.msk [vmem:[%s2286 + $0x30] sm:$0xff] %vm1397, %v2284
        %2294 = vst.msk [vmem:[%s2286 + $0x38] sm:$0xff] %vm1397, %v2285
        %2297 = vrot.lane.b32.xlu0 %v1002, 120
        %v2298 = vpop.permute.xlu0 %2297
        %2299 = vrot.lane.b32.xlu0 %v1007, 120
        %v2300 = vpop.permute.xlu0 %2299
        %v2304 = vsel %vm1397, %v2278, 0
        %v2307 = vsel %vm1397, %v2279, 0
        %2309 = vmatprep.subr.mxu0 0.0
        %2310 = vmatpush1.msra.mxu0 0.0
        %2311 = vmatprep.subr.mxu0 0.0
        %2312 = vmatpush1.msra.mxu0 0.0
        %2313 = vmatprep.subr.mxu0 0.0
        %2314 = vmatpush1.msra.mxu0 0.0
        %2315 = vmatprep.subr.mxu0 0.0
        %2316 = vmatpush1.msra.mxu0 0.0
        %2317 = vmatprep.subr.mxu0 0.0
        %2318 = vmatpush1.msra.mxu0 0.0
        %2319 = vmatprep.subr.mxu0 0.0
        %2320 = vmatpush1.msra.mxu0 0.0
        %2321 = vmatprep.subr.mxu0 0.0
        %2322 = vmatpush1.msra.mxu0 0.0
        %2323 = vmatprep.subr.mxu0 0.0
        %2324 = vmatpush1.msra.mxu0 0.0
        %2325 = vmatprep.subr.mxu0 0.0
        %2326 = vmatpush1.msra.mxu0 0.0
        %2327 = vmatprep.subr.mxu0 0.0
        %2328 = vmatpush1.msra.mxu0 0.0
        %2329 = vmatprep.subr.mxu0 0.0
        %2330 = vmatpush1.msra.mxu0 0.0
        %2331 = vmatprep.subr.mxu0 0.0
        %2332 = vmatpush1.msra.mxu0 0.0
        %2333 = vmatprep.subr.mxu0 0.0
        %2334 = vmatpush1.msra.mxu0 0.0
        %2335 = vmatprep.subr.mxu0 0.0
        %2336 = vmatpush1.msra.mxu0 0.0
        %2337 = vmatprep.subr.mxu0 0.0
        %2338 = vmatpush1.msra.mxu0 %v2300
        %2339 = vmatprep.subr.mxu0 0.0
        %2340 = vmatpush1.msra.mxu0 %v2298
        %2341 = vmatprep.subr.mxu0 0.0
        %2342 = vmatpush2.msra.mxu0 0.0
        %2343 = vmatprep.subr.mxu0 0.0
        %2344 = vmatpush2.msra.mxu0 0.0
        %2345 = vmatprep.subr.mxu0 0.0
        %2346 = vmatpush2.msra.mxu0 0.0
        %2347 = vmatprep.subr.mxu0 0.0
        %2348 = vmatpush2.msra.mxu0 0.0
        %2349 = vmatprep.subr.mxu0 0.0
        %2350 = vmatpush2.msra.mxu0 0.0
        %2351 = vmatprep.subr.mxu0 0.0
        %2352 = vmatpush2.msra.mxu0 0.0
        %2353 = vmatprep.subr.mxu0 0.0
        %2354 = vmatpush2.msra.mxu0 0.0
        %2355 = vmatprep.subr.mxu0 0.0
        %2356 = vmatpush2.msra.mxu0 0.0
        %2357 = vmatprep.subr.mxu0 0.0
        %2358 = vmatpush2.msra.mxu0 0.0
        %2359 = vmatprep.subr.mxu0 0.0
        %2360 = vmatpush2.msra.mxu0 0.0
        %2361 = vmatprep.subr.mxu0 0.0
        %2362 = vmatpush2.msra.mxu0 0.0
        %2363 = vmatprep.subr.mxu0 0.0
        %2364 = vmatpush2.msra.mxu0 0.0
        %2365 = vmatprep.subr.mxu0 0.0
        %2366 = vmatpush2.msra.mxu0 0.0
        %2367 = vmatprep.subr.mxu0 0.0
        %2368 = vmatpush2.msra.mxu0 0.0
        %2369 = vmatprep.subr.mxu0 0.0
        %2370 = vmatpush2.msra.mxu0 0.0
        %2371 = vmatprep.subr.mxu0 0.0
        %2372 = vmatpush2.msra.mxu0 0.0
        %2373 = vmatprep.mubr.f32.mxu0 0.0
        %2374 = vmatmul.mubr.f32.gmra.mxu0 %v2304
        %v2375 = vpop.f32.mrf.mxu0
        %v2376 = vadd.f32 0.0, %v2375
        %v2377 = vpop.f32.mrf.mxu0
        %2378 = vmatprep.mubr.f32.mxu0 0.0
        %2379 = vmatmul.mubr.f32.gmra.mxu0 %v2307
        %v2380 = vpop.f32.mrf.mxu0
        %v2381 = vadd.f32 0.0, %v2380
        %v2382 = vpop.f32.mrf.mxu0
        %2383 = vdwg.mxu0
        %2386 = vrot.lane.b32.xlu0 %v1012, 120
        %v2387 = vpop.permute.xlu0 %2386
        %2388 = vrot.lane.b32.xlu0 %v1017, 120
        %v2389 = vpop.permute.xlu0 %2388
        %v2393 = vsel %vm1397, %v2280, 0
        %v2396 = vsel %vm1397, %v2281, 0
        %2398 = vmatprep.subr.mxu0 0.0
        %2399 = vmatpush1.msra.mxu0 0.0
        %2400 = vmatprep.subr.mxu0 0.0
        %2401 = vmatpush1.msra.mxu0 0.0
        %2402 = vmatprep.subr.mxu0 0.0
        %2403 = vmatpush1.msra.mxu0 0.0
        %2404 = vmatprep.subr.mxu0 0.0
        %2405 = vmatpush1.msra.mxu0 0.0
        %2406 = vmatprep.subr.mxu0 0.0
        %2407 = vmatpush1.msra.mxu0 0.0
        %2408 = vmatprep.subr.mxu0 0.0
        %2409 = vmatpush1.msra.mxu0 0.0
        %2410 = vmatprep.subr.mxu0 0.0
        %2411 = vmatpush1.msra.mxu0 0.0
        %2412 = vmatprep.subr.mxu0 0.0
        %2413 = vmatpush1.msra.mxu0 0.0
        %2414 = vmatprep.subr.mxu0 0.0
        %2415 = vmatpush1.msra.mxu0 0.0
        %2416 = vmatprep.subr.mxu0 0.0
        %2417 = vmatpush1.msra.mxu0 0.0
        %2418 = vmatprep.subr.mxu0 0.0
        %2419 = vmatpush1.msra.mxu0 0.0
        %2420 = vmatprep.subr.mxu0 0.0
        %2421 = vmatpush1.msra.mxu0 0.0
        %2422 = vmatprep.subr.mxu0 0.0
        %2423 = vmatpush1.msra.mxu0 0.0
        %2424 = vmatprep.subr.mxu0 0.0
        %2425 = vmatpush1.msra.mxu0 0.0
        %2426 = vmatprep.subr.mxu0 0.0
        %2427 = vmatpush1.msra.mxu0 %v2389
        %2428 = vmatprep.subr.mxu0 0.0
        %2429 = vmatpush1.msra.mxu0 %v2387
        %2430 = vmatprep.subr.mxu0 0.0
        %2431 = vmatpush2.msra.mxu0 0.0
        %2432 = vmatprep.subr.mxu0 0.0
        %2433 = vmatpush2.msra.mxu0 0.0
        %2434 = vmatprep.subr.mxu0 0.0
        %2435 = vmatpush2.msra.mxu0 0.0
        %2436 = vmatprep.subr.mxu0 0.0
        %2437 = vmatpush2.msra.mxu0 0.0
        %2438 = vmatprep.subr.mxu0 0.0
        %2439 = vmatpush2.msra.mxu0 0.0
        %2440 = vmatprep.subr.mxu0 0.0
        %2441 = vmatpush2.msra.mxu0 0.0
        %2442 = vmatprep.subr.mxu0 0.0
        %2443 = vmatpush2.msra.mxu0 0.0
        %2444 = vmatprep.subr.mxu0 0.0
        %2445 = vmatpush2.msra.mxu0 0.0
        %2446 = vmatprep.subr.mxu0 0.0
        %2447 = vmatpush2.msra.mxu0 0.0
        %2448 = vmatprep.subr.mxu0 0.0
        %2449 = vmatpush2.msra.mxu0 0.0
        %2450 = vmatprep.subr.mxu0 0.0
        %2451 = vmatpush2.msra.mxu0 0.0
        %2452 = vmatprep.subr.mxu0 0.0
        %2453 = vmatpush2.msra.mxu0 0.0
        %2454 = vmatprep.subr.mxu0 0.0
        %2455 = vmatpush2.msra.mxu0 0.0
        %2456 = vmatprep.subr.mxu0 0.0
        %2457 = vmatpush2.msra.mxu0 0.0
        %2458 = vmatprep.subr.mxu0 0.0
        %2459 = vmatpush2.msra.mxu0 0.0
        %2460 = vmatprep.subr.mxu0 0.0
        %2461 = vmatpush2.msra.mxu0 0.0
        %2462 = vmatprep.mubr.f32.mxu0 0.0
        %2463 = vmatmul.mubr.f32.gmra.mxu0 %v2393
        %v2464 = vpop.f32.mrf.mxu0
        %v2465 = vadd.f32 0.0, %v2464
        %v2466 = vpop.f32.mrf.mxu0
        %2467 = vmatprep.mubr.f32.mxu0 0.0
        %2468 = vmatmul.mubr.f32.gmra.mxu0 %v2396
        %v2469 = vpop.f32.mrf.mxu0
        %v2470 = vadd.f32 0.0, %v2469
        %v2471 = vpop.f32.mrf.mxu0
        %2472 = vdwg.mxu0
        %2475 = vrot.lane.b32.xlu0 %v1022, 120
        %v2476 = vpop.permute.xlu0 %2475
        %2477 = vrot.lane.b32.xlu0 %v1027, 120
        %v2478 = vpop.permute.xlu0 %2477
        %v2482 = vsel %vm1397, %v2282, 0
        %v2485 = vsel %vm1397, %v2283, 0
        %2487 = vmatprep.subr.mxu0 0.0
        %2488 = vmatpush1.msra.mxu0 0.0
        %2489 = vmatprep.subr.mxu0 0.0
        %2490 = vmatpush1.msra.mxu0 0.0
        %2491 = vmatprep.subr.mxu0 0.0
        %2492 = vmatpush1.msra.mxu0 0.0
        %2493 = vmatprep.subr.mxu0 0.0
        %2494 = vmatpush1.msra.mxu0 0.0
        %2495 = vmatprep.subr.mxu0 0.0
        %2496 = vmatpush1.msra.mxu0 0.0
        %2497 = vmatprep.subr.mxu0 0.0
        %2498 = vmatpush1.msra.mxu0 0.0
        %2499 = vmatprep.subr.mxu0 0.0
        %2500 = vmatpush1.msra.mxu0 0.0
        %2501 = vmatprep.subr.mxu0 0.0
        %2502 = vmatpush1.msra.mxu0 0.0
        %2503 = vmatprep.subr.mxu0 0.0
        %2504 = vmatpush1.msra.mxu0 0.0
        %2505 = vmatprep.subr.mxu0 0.0
        %2506 = vmatpush1.msra.mxu0 0.0
        %2507 = vmatprep.subr.mxu0 0.0
        %2508 = vmatpush1.msra.mxu0 0.0
        %2509 = vmatprep.subr.mxu0 0.0
        %2510 = vmatpush1.msra.mxu0 0.0
        %2511 = vmatprep.subr.mxu0 0.0
        %2512 = vmatpush1.msra.mxu0 0.0
        %2513 = vmatprep.subr.mxu0 0.0
        %2514 = vmatpush1.msra.mxu0 0.0
        %2515 = vmatprep.subr.mxu0 0.0
        %2516 = vmatpush1.msra.mxu0 %v2478
        %2517 = vmatprep.subr.mxu0 0.0
        %2518 = vmatpush1.msra.mxu0 %v2476
        %2519 = vmatprep.subr.mxu0 0.0
        %2520 = vmatpush2.msra.mxu0 0.0
        %2521 = vmatprep.subr.mxu0 0.0
        %2522 = vmatpush2.msra.mxu0 0.0
        %2523 = vmatprep.subr.mxu0 0.0
        %2524 = vmatpush2.msra.mxu0 0.0
        %2525 = vmatprep.subr.mxu0 0.0
        %2526 = vmatpush2.msra.mxu0 0.0
        %2527 = vmatprep.subr.mxu0 0.0
        %2528 = vmatpush2.msra.mxu0 0.0
        %2529 = vmatprep.subr.mxu0 0.0
        %2530 = vmatpush2.msra.mxu0 0.0
        %2531 = vmatprep.subr.mxu0 0.0
        %2532 = vmatpush2.msra.mxu0 0.0
        %2533 = vmatprep.subr.mxu0 0.0
        %2534 = vmatpush2.msra.mxu0 0.0
        %2535 = vmatprep.subr.mxu0 0.0
        %2536 = vmatpush2.msra.mxu0 0.0
        %2537 = vmatprep.subr.mxu0 0.0
        %2538 = vmatpush2.msra.mxu0 0.0
        %2539 = vmatprep.subr.mxu0 0.0
        %2540 = vmatpush2.msra.mxu0 0.0
        %2541 = vmatprep.subr.mxu0 0.0
        %2542 = vmatpush2.msra.mxu0 0.0
        %2543 = vmatprep.subr.mxu0 0.0
        %2544 = vmatpush2.msra.mxu0 0.0
        %2545 = vmatprep.subr.mxu0 0.0
        %2546 = vmatpush2.msra.mxu0 0.0
        %2547 = vmatprep.subr.mxu0 0.0
        %2548 = vmatpush2.msra.mxu0 0.0
        %2549 = vmatprep.subr.mxu0 0.0
        %2550 = vmatpush2.msra.mxu0 0.0
        %2551 = vmatprep.mubr.f32.mxu0 0.0
        %2552 = vmatmul.mubr.f32.gmra.mxu0 %v2482
        %v2553 = vpop.f32.mrf.mxu0
        %v2554 = vadd.f32 0.0, %v2553
        %v2555 = vpop.f32.mrf.mxu0
        %2556 = vmatprep.mubr.f32.mxu0 0.0
        %2557 = vmatmul.mubr.f32.gmra.mxu0 %v2485
        %v2558 = vpop.f32.mrf.mxu0
        %v2559 = vadd.f32 0.0, %v2558
        %v2560 = vpop.f32.mrf.mxu0
        %2561 = vdwg.mxu0
        %2564 = vrot.lane.b32.xlu0 %v1032, 120
        %v2565 = vpop.permute.xlu0 %2564
        %2566 = vrot.lane.b32.xlu0 %v1037, 120
        %v2567 = vpop.permute.xlu0 %2566
        %v2571 = vsel %vm1397, %v2284, 0
        %v2574 = vsel %vm1397, %v2285, 0
        %2576 = vmatprep.subr.mxu0 0.0
        %2577 = vmatpush1.msra.mxu0 0.0
        %2578 = vmatprep.subr.mxu0 0.0
        %2579 = vmatpush1.msra.mxu0 0.0
        %2580 = vmatprep.subr.mxu0 0.0
        %2581 = vmatpush1.msra.mxu0 0.0
        %2582 = vmatprep.subr.mxu0 0.0
        %2583 = vmatpush1.msra.mxu0 0.0
        %2584 = vmatprep.subr.mxu0 0.0
        %2585 = vmatpush1.msra.mxu0 0.0
        %2586 = vmatprep.subr.mxu0 0.0
        %2587 = vmatpush1.msra.mxu0 0.0
        %2588 = vmatprep.subr.mxu0 0.0
        %2589 = vmatpush1.msra.mxu0 0.0
        %2590 = vmatprep.subr.mxu0 0.0
        %2591 = vmatpush1.msra.mxu0 0.0
        %2592 = vmatprep.subr.mxu0 0.0
        %2593 = vmatpush1.msra.mxu0 0.0
        %2594 = vmatprep.subr.mxu0 0.0
        %2595 = vmatpush1.msra.mxu0 0.0
        %2596 = vmatprep.subr.mxu0 0.0
        %2597 = vmatpush1.msra.mxu0 0.0
        %2598 = vmatprep.subr.mxu0 0.0
        %2599 = vmatpush1.msra.mxu0 0.0
        %2600 = vmatprep.subr.mxu0 0.0
        %2601 = vmatpush1.msra.mxu0 0.0
        %2602 = vmatprep.subr.mxu0 0.0
        %2603 = vmatpush1.msra.mxu0 0.0
        %2604 = vmatprep.subr.mxu0 0.0
        %2605 = vmatpush1.msra.mxu0 %v2567
        %2606 = vmatprep.subr.mxu0 0.0
        %2607 = vmatpush1.msra.mxu0 %v2565
        %2608 = vmatprep.subr.mxu0 0.0
        %2609 = vmatpush2.msra.mxu0 0.0
        %2610 = vmatprep.subr.mxu0 0.0
        %2611 = vmatpush2.msra.mxu0 0.0
        %2612 = vmatprep.subr.mxu0 0.0
        %2613 = vmatpush2.msra.mxu0 0.0
        %2614 = vmatprep.subr.mxu0 0.0
        %2615 = vmatpush2.msra.mxu0 0.0
        %2616 = vmatprep.subr.mxu0 0.0
        %2617 = vmatpush2.msra.mxu0 0.0
        %2618 = vmatprep.subr.mxu0 0.0
        %2619 = vmatpush2.msra.mxu0 0.0
        %2620 = vmatprep.subr.mxu0 0.0
        %2621 = vmatpush2.msra.mxu0 0.0
        %2622 = vmatprep.subr.mxu0 0.0
        %2623 = vmatpush2.msra.mxu0 0.0
        %2624 = vmatprep.subr.mxu0 0.0
        %2625 = vmatpush2.msra.mxu0 0.0
        %2626 = vmatprep.subr.mxu0 0.0
        %2627 = vmatpush2.msra.mxu0 0.0
        %2628 = vmatprep.subr.mxu0 0.0
        %2629 = vmatpush2.msra.mxu0 0.0
        %2630 = vmatprep.subr.mxu0 0.0
        %2631 = vmatpush2.msra.mxu0 0.0
        %2632 = vmatprep.subr.mxu0 0.0
        %2633 = vmatpush2.msra.mxu0 0.0
        %2634 = vmatprep.subr.mxu0 0.0
        %2635 = vmatpush2.msra.mxu0 0.0
        %2636 = vmatprep.subr.mxu0 0.0
        %2637 = vmatpush2.msra.mxu0 0.0
        %2638 = vmatprep.subr.mxu0 0.0
        %2639 = vmatpush2.msra.mxu0 0.0
        %2640 = vmatprep.mubr.f32.mxu0 0.0
        %2641 = vmatmul.mubr.f32.gmra.mxu0 %v2571
        %v2642 = vpop.f32.mrf.mxu0
        %v2643 = vadd.f32 0.0, %v2642
        %v2644 = vpop.f32.mrf.mxu0
        %2645 = vmatprep.mubr.f32.mxu0 0.0
        %2646 = vmatmul.mubr.f32.gmra.mxu0 %v2574
        %v2647 = vpop.f32.mrf.mxu0
        %v2648 = vadd.f32 0.0, %v2647
        %v2649 = vpop.f32.mrf.mxu0
        %2650 = vdwg.mxu0
        %2659 = vrot.lane.b32.xlu0 %v2376, 8
        %v2660 = vpop.permute.xlu0 %2659
        %2661 = vrot.lane.b32.xlu0 %v2381, 8
        %v2662 = vpop.permute.xlu0 %2661
        %2663 = vrot.lane.b32.xlu0 %v2465, 8
        %v2664 = vpop.permute.xlu0 %2663
        %2665 = vrot.lane.b32.xlu0 %v2470, 8
        %v2666 = vpop.permute.xlu0 %2665
        %2667 = vrot.lane.b32.xlu0 %v2554, 8
        %v2668 = vpop.permute.xlu0 %2667
        %2669 = vrot.lane.b32.xlu0 %v2559, 8
        %v2670 = vpop.permute.xlu0 %2669
        %2671 = vrot.lane.b32.xlu0 %v2643, 8
        %v2672 = vpop.permute.xlu0 %2671
        %2673 = vrot.lane.b32.xlu0 %v2648, 8
        %v2674 = vpop.permute.xlu0 %2673
        %vm2683 = vcmask 130112
        %2684 = vst.msk [vmem:[#allocation2] sm:$0xff] %vm2683, %v2660
        %2685 = vst.msk [vmem:[#allocation2 + $0x8] sm:$0xff] %vm2683, %v2662
        %2686 = vst.msk [vmem:[#allocation2 + $0x10] sm:$0xff] %vm2683, %v2664
        %2687 = vst.msk [vmem:[#allocation2 + $0x18] sm:$0xff] %vm2683, %v2666
        %2688 = vst.msk [vmem:[#allocation2 + $0x20] sm:$0xff] %vm2683, %v2668
        %2689 = vst.msk [vmem:[#allocation2 + $0x28] sm:$0xff] %vm2683, %v2670
        %2690 = vst.msk [vmem:[#allocation2 + $0x30] sm:$0xff] %vm2683, %v2672
        %2691 = vst.msk [vmem:[#allocation2 + $0x38] sm:$0xff] %vm2683, %v2674
        %2692 = vrot.lane.b32.xlu0 %v722, 112
        %v2693 = vpop.permute.xlu0 %2692
        %2694 = vrot.lane.b32.xlu0 %v727, 112
        %v2695 = vpop.permute.xlu0 %2694
        %2696 = vrot.lane.b32.xlu0 %v862, 112
        %v2697 = vpop.permute.xlu0 %2696
        %2698 = vrot.lane.b32.xlu0 %v867, 112
        %v2699 = vpop.permute.xlu0 %2698
        %v2700 = vsel %vm1040, %v2693, 0
        %v2702 = vsel %vm1040, %v2695, 0
        %v2704 = vsel %vm1040, %v2697, 0
        %v2706 = vsel %vm1040, %v2699, 0
        %2708 = vmatprep.subr.mxu0 0.0
        %2709 = vmatpush1.xpose.msra.mxu0 0.0
        %2710 = vmatprep.subr.mxu0 0.0
        %2711 = vmatpush1.xpose.msra.mxu0 0.0
        %2712 = vmatprep.subr.mxu0 0.0
        %2713 = vmatpush1.xpose.msra.mxu0 0.0
        %2714 = vmatprep.subr.mxu0 0.0
        %2715 = vmatpush1.xpose.msra.mxu0 0.0
        %2716 = vmatprep.subr.mxu0 0.0
        %2717 = vmatpush1.xpose.msra.mxu0 0.0
        %2718 = vmatprep.subr.mxu0 0.0
        %2719 = vmatpush1.xpose.msra.mxu0 0.0
        %2720 = vmatprep.subr.mxu0 0.0
        %2721 = vmatpush1.xpose.msra.mxu0 0.0
        %2722 = vmatprep.subr.mxu0 0.0
        %2723 = vmatpush1.xpose.msra.mxu0 0.0
        %2724 = vmatprep.subr.mxu0 0.0
        %2725 = vmatpush1.xpose.msra.mxu0 0.0
        %2726 = vmatprep.subr.mxu0 0.0
        %2727 = vmatpush1.xpose.msra.mxu0 0.0
        %2728 = vmatprep.subr.mxu0 0.0
        %2729 = vmatpush1.xpose.msra.mxu0 0.0
        %2730 = vmatprep.subr.mxu0 0.0
        %2731 = vmatpush1.xpose.msra.mxu0 0.0
        %2732 = vmatprep.subr.mxu0 0.0
        %2733 = vmatpush1.xpose.msra.mxu0 0.0
        %2734 = vmatprep.subr.mxu0 0.0
        %2735 = vmatpush1.xpose.msra.mxu0 0.0
        %2736 = vmatprep.subr.mxu0 0.0
        %2737 = vmatpush1.xpose.msra.mxu0 %v2706
        %2738 = vmatprep.subr.mxu0 0.0
        %2739 = vmatpush1.xpose.msra.mxu0 %v2704
        %2740 = vmatprep.subr.mxu0 0.0
        %2741 = vmatpush2.xpose.msra.mxu0 0.0
        %2742 = vmatprep.subr.mxu0 0.0
        %2743 = vmatpush2.xpose.msra.mxu0 0.0
        %2744 = vmatprep.subr.mxu0 0.0
        %2745 = vmatpush2.xpose.msra.mxu0 0.0
        %2746 = vmatprep.subr.mxu0 0.0
        %2747 = vmatpush2.xpose.msra.mxu0 0.0
        %2748 = vmatprep.subr.mxu0 0.0
        %2749 = vmatpush2.xpose.msra.mxu0 0.0
        %2750 = vmatprep.subr.mxu0 0.0
        %2751 = vmatpush2.xpose.msra.mxu0 0.0
        %2752 = vmatprep.subr.mxu0 0.0
        %2753 = vmatpush2.xpose.msra.mxu0 0.0
        %2754 = vmatprep.subr.mxu0 0.0
        %2755 = vmatpush2.xpose.msra.mxu0 0.0
        %2756 = vmatprep.subr.mxu0 0.0
        %2757 = vmatpush2.xpose.msra.mxu0 0.0
        %2758 = vmatprep.subr.mxu0 0.0
        %2759 = vmatpush2.xpose.msra.mxu0 0.0
        %2760 = vmatprep.subr.mxu0 0.0
        %2761 = vmatpush2.xpose.msra.mxu0 0.0
        %2762 = vmatprep.subr.mxu0 0.0
        %2763 = vmatpush2.xpose.msra.mxu0 0.0
        %2764 = vmatprep.subr.mxu0 0.0
        %2765 = vmatpush2.xpose.msra.mxu0 0.0
        %2766 = vmatprep.subr.mxu0 0.0
        %2767 = vmatpush2.xpose.msra.mxu0 0.0
        %2768 = vmatprep.subr.mxu0 0.0
        %2769 = vmatpush2.xpose.msra.mxu0 0.0
        %2770 = vmatprep.subr.mxu0 0.0
        %2771 = vmatpush2.xpose.msra.mxu0 0.0
        %2772 = vmatprep.mubr.f32.mxu0 0.0
        %2773 = vmatmul.mubr.f32.gmra.mxu0 %v2700
        %v2774 = vpop.f32.mrf.mxu0
        %v2775 = vadd.f32 0.0, %v2774
        %v2776 = vpop.f32.mrf.mxu0
        %2777 = vmatprep.mubr.f32.mxu0 0.0
        %2778 = vmatmul.mubr.f32.gmra.mxu0 %v2702
        %v2779 = vpop.f32.mrf.mxu0
        %v2780 = vadd.f32 0.0, %v2779
        %v2781 = vpop.f32.mrf.mxu0
        %2782 = vdwg.mxu0
        %2783 = vrot.lane.b32.xlu0 %v732, 112
        %v2784 = vpop.permute.xlu0 %2783
        %2785 = vrot.lane.b32.xlu0 %v737, 112
        %v2786 = vpop.permute.xlu0 %2785
        %2787 = vrot.lane.b32.xlu0 %v872, 112
        %v2788 = vpop.permute.xlu0 %2787
        %2789 = vrot.lane.b32.xlu0 %v877, 112
        %v2790 = vpop.permute.xlu0 %2789
        %v2791 = vsel %vm1040, %v2784, 0
        %v2793 = vsel %vm1040, %v2786, 0
        %v2795 = vsel %vm1040, %v2788, 0
        %v2797 = vsel %vm1040, %v2790, 0
        %2799 = vmatprep.subr.mxu0 0.0
        %2800 = vmatpush1.xpose.msra.mxu0 0.0
        %2801 = vmatprep.subr.mxu0 0.0
        %2802 = vmatpush1.xpose.msra.mxu0 0.0
        %2803 = vmatprep.subr.mxu0 0.0
        %2804 = vmatpush1.xpose.msra.mxu0 0.0
        %2805 = vmatprep.subr.mxu0 0.0
        %2806 = vmatpush1.xpose.msra.mxu0 0.0
        %2807 = vmatprep.subr.mxu0 0.0
        %2808 = vmatpush1.xpose.msra.mxu0 0.0
        %2809 = vmatprep.subr.mxu0 0.0
        %2810 = vmatpush1.xpose.msra.mxu0 0.0
        %2811 = vmatprep.subr.mxu0 0.0
        %2812 = vmatpush1.xpose.msra.mxu0 0.0
        %2813 = vmatprep.subr.mxu0 0.0
        %2814 = vmatpush1.xpose.msra.mxu0 0.0
        %2815 = vmatprep.subr.mxu0 0.0
        %2816 = vmatpush1.xpose.msra.mxu0 0.0
        %2817 = vmatprep.subr.mxu0 0.0
        %2818 = vmatpush1.xpose.msra.mxu0 0.0
        %2819 = vmatprep.subr.mxu0 0.0
        %2820 = vmatpush1.xpose.msra.mxu0 0.0
        %2821 = vmatprep.subr.mxu0 0.0
        %2822 = vmatpush1.xpose.msra.mxu0 0.0
        %2823 = vmatprep.subr.mxu0 0.0
        %2824 = vmatpush1.xpose.msra.mxu0 0.0
        %2825 = vmatprep.subr.mxu0 0.0
        %2826 = vmatpush1.xpose.msra.mxu0 0.0
        %2827 = vmatprep.subr.mxu0 0.0
        %2828 = vmatpush1.xpose.msra.mxu0 %v2797
        %2829 = vmatprep.subr.mxu0 0.0
        %2830 = vmatpush1.xpose.msra.mxu0 %v2795
        %2831 = vmatprep.subr.mxu0 0.0
        %2832 = vmatpush2.xpose.msra.mxu0 0.0
        %2833 = vmatprep.subr.mxu0 0.0
        %2834 = vmatpush2.xpose.msra.mxu0 0.0
        %2835 = vmatprep.subr.mxu0 0.0
        %2836 = vmatpush2.xpose.msra.mxu0 0.0
        %2837 = vmatprep.subr.mxu0 0.0
        %2838 = vmatpush2.xpose.msra.mxu0 0.0
        %2839 = vmatprep.subr.mxu0 0.0
        %2840 = vmatpush2.xpose.msra.mxu0 0.0
        %2841 = vmatprep.subr.mxu0 0.0
        %2842 = vmatpush2.xpose.msra.mxu0 0.0
        %2843 = vmatprep.subr.mxu0 0.0
        %2844 = vmatpush2.xpose.msra.mxu0 0.0
        %2845 = vmatprep.subr.mxu0 0.0
        %2846 = vmatpush2.xpose.msra.mxu0 0.0
        %2847 = vmatprep.subr.mxu0 0.0
        %2848 = vmatpush2.xpose.msra.mxu0 0.0
        %2849 = vmatprep.subr.mxu0 0.0
        %2850 = vmatpush2.xpose.msra.mxu0 0.0
        %2851 = vmatprep.subr.mxu0 0.0
        %2852 = vmatpush2.xpose.msra.mxu0 0.0
        %2853 = vmatprep.subr.mxu0 0.0
        %2854 = vmatpush2.xpose.msra.mxu0 0.0
        %2855 = vmatprep.subr.mxu0 0.0
        %2856 = vmatpush2.xpose.msra.mxu0 0.0
        %2857 = vmatprep.subr.mxu0 0.0
        %2858 = vmatpush2.xpose.msra.mxu0 0.0
        %2859 = vmatprep.subr.mxu0 0.0
        %2860 = vmatpush2.xpose.msra.mxu0 0.0
        %2861 = vmatprep.subr.mxu0 0.0
        %2862 = vmatpush2.xpose.msra.mxu0 0.0
        %2863 = vmatprep.mubr.f32.mxu0 0.0
        %2864 = vmatmul.mubr.f32.gmra.mxu0 %v2791
        %v2865 = vpop.f32.mrf.mxu0
        %v2866 = vadd.f32 0.0, %v2865
        %v2867 = vpop.f32.mrf.mxu0
        %2868 = vmatprep.mubr.f32.mxu0 0.0
        %2869 = vmatmul.mubr.f32.gmra.mxu0 %v2793
        %v2870 = vpop.f32.mrf.mxu0
        %v2871 = vadd.f32 0.0, %v2870
        %v2872 = vpop.f32.mrf.mxu0
        %2873 = vdwg.mxu0
        %2874 = vrot.lane.b32.xlu0 %v742, 112
        %v2875 = vpop.permute.xlu0 %2874
        %2876 = vrot.lane.b32.xlu0 %v747, 112
        %v2877 = vpop.permute.xlu0 %2876
        %2878 = vrot.lane.b32.xlu0 %v882, 112
        %v2879 = vpop.permute.xlu0 %2878
        %2880 = vrot.lane.b32.xlu0 %v887, 112
        %v2881 = vpop.permute.xlu0 %2880
        %v2882 = vsel %vm1040, %v2875, 0
        %v2884 = vsel %vm1040, %v2877, 0
        %v2886 = vsel %vm1040, %v2879, 0
        %v2888 = vsel %vm1040, %v2881, 0
        %2890 = vmatprep.subr.mxu0 0.0
        %2891 = vmatpush1.xpose.msra.mxu0 0.0
        %2892 = vmatprep.subr.mxu0 0.0
        %2893 = vmatpush1.xpose.msra.mxu0 0.0
        %2894 = vmatprep.subr.mxu0 0.0
        %2895 = vmatpush1.xpose.msra.mxu0 0.0
        %2896 = vmatprep.subr.mxu0 0.0
        %2897 = vmatpush1.xpose.msra.mxu0 0.0
        %2898 = vmatprep.subr.mxu0 0.0
        %2899 = vmatpush1.xpose.msra.mxu0 0.0
        %2900 = vmatprep.subr.mxu0 0.0
        %2901 = vmatpush1.xpose.msra.mxu0 0.0
        %2902 = vmatprep.subr.mxu0 0.0
        %2903 = vmatpush1.xpose.msra.mxu0 0.0
        %2904 = vmatprep.subr.mxu0 0.0
        %2905 = vmatpush1.xpose.msra.mxu0 0.0
        %2906 = vmatprep.subr.mxu0 0.0
        %2907 = vmatpush1.xpose.msra.mxu0 0.0
        %2908 = vmatprep.subr.mxu0 0.0
        %2909 = vmatpush1.xpose.msra.mxu0 0.0
        %2910 = vmatprep.subr.mxu0 0.0
        %2911 = vmatpush1.xpose.msra.mxu0 0.0
        %2912 = vmatprep.subr.mxu0 0.0
        %2913 = vmatpush1.xpose.msra.mxu0 0.0
        %2914 = vmatprep.subr.mxu0 0.0
        %2915 = vmatpush1.xpose.msra.mxu0 0.0
        %2916 = vmatprep.subr.mxu0 0.0
        %2917 = vmatpush1.xpose.msra.mxu0 0.0
        %2918 = vmatprep.subr.mxu0 0.0
        %2919 = vmatpush1.xpose.msra.mxu0 %v2888
        %2920 = vmatprep.subr.mxu0 0.0
        %2921 = vmatpush1.xpose.msra.mxu0 %v2886
        %2922 = vmatprep.subr.mxu0 0.0
        %2923 = vmatpush2.xpose.msra.mxu0 0.0
        %2924 = vmatprep.subr.mxu0 0.0
        %2925 = vmatpush2.xpose.msra.mxu0 0.0
        %2926 = vmatprep.subr.mxu0 0.0
        %2927 = vmatpush2.xpose.msra.mxu0 0.0
        %2928 = vmatprep.subr.mxu0 0.0
        %2929 = vmatpush2.xpose.msra.mxu0 0.0
        %2930 = vmatprep.subr.mxu0 0.0
        %2931 = vmatpush2.xpose.msra.mxu0 0.0
        %2932 = vmatprep.subr.mxu0 0.0
        %2933 = vmatpush2.xpose.msra.mxu0 0.0
        %2934 = vmatprep.subr.mxu0 0.0
        %2935 = vmatpush2.xpose.msra.mxu0 0.0
        %2936 = vmatprep.subr.mxu0 0.0
        %2937 = vmatpush2.xpose.msra.mxu0 0.0
        %2938 = vmatprep.subr.mxu0 0.0
        %2939 = vmatpush2.xpose.msra.mxu0 0.0
        %2940 = vmatprep.subr.mxu0 0.0
        %2941 = vmatpush2.xpose.msra.mxu0 0.0
        %2942 = vmatprep.subr.mxu0 0.0
        %2943 = vmatpush2.xpose.msra.mxu0 0.0
        %2944 = vmatprep.subr.mxu0 0.0
        %2945 = vmatpush2.xpose.msra.mxu0 0.0
        %2946 = vmatprep.subr.mxu0 0.0
        %2947 = vmatpush2.xpose.msra.mxu0 0.0
        %2948 = vmatprep.subr.mxu0 0.0
        %2949 = vmatpush2.xpose.msra.mxu0 0.0
        %2950 = vmatprep.subr.mxu0 0.0
        %2951 = vmatpush2.xpose.msra.mxu0 0.0
        %2952 = vmatprep.subr.mxu0 0.0
        %2953 = vmatpush2.xpose.msra.mxu0 0.0
        %2954 = vmatprep.mubr.f32.mxu0 0.0
        %2955 = vmatmul.mubr.f32.gmra.mxu0 %v2882
        %v2956 = vpop.f32.mrf.mxu0
        %v2957 = vadd.f32 0.0, %v2956
        %v2958 = vpop.f32.mrf.mxu0
        %2959 = vmatprep.mubr.f32.mxu0 0.0
        %2960 = vmatmul.mubr.f32.gmra.mxu0 %v2884
        %v2961 = vpop.f32.mrf.mxu0
        %v2962 = vadd.f32 0.0, %v2961
        %v2963 = vpop.f32.mrf.mxu0
        %2964 = vdwg.mxu0
        %2965 = vrot.lane.b32.xlu0 %v752, 112
        %v2966 = vpop.permute.xlu0 %2965
        %2967 = vrot.lane.b32.xlu0 %v757, 112
        %v2968 = vpop.permute.xlu0 %2967
        %2969 = vrot.lane.b32.xlu0 %v892, 112
        %v2970 = vpop.permute.xlu0 %2969
        %2971 = vrot.lane.b32.xlu0 %v897, 112
        %v2972 = vpop.permute.xlu0 %2971
        %v2973 = vsel %vm1040, %v2966, 0
        %v2975 = vsel %vm1040, %v2968, 0
        %v2977 = vsel %vm1040, %v2970, 0
        %v2979 = vsel %vm1040, %v2972, 0
        %2981 = vmatprep.subr.mxu0 0.0
        %2982 = vmatpush1.xpose.msra.mxu0 0.0
        %2983 = vmatprep.subr.mxu0 0.0
        %2984 = vmatpush1.xpose.msra.mxu0 0.0
        %2985 = vmatprep.subr.mxu0 0.0
        %2986 = vmatpush1.xpose.msra.mxu0 0.0
        %2987 = vmatprep.subr.mxu0 0.0
        %2988 = vmatpush1.xpose.msra.mxu0 0.0
        %2989 = vmatprep.subr.mxu0 0.0
        %2990 = vmatpush1.xpose.msra.mxu0 0.0
        %2991 = vmatprep.subr.mxu0 0.0
        %2992 = vmatpush1.xpose.msra.mxu0 0.0
        %2993 = vmatprep.subr.mxu0 0.0
        %2994 = vmatpush1.xpose.msra.mxu0 0.0
        %2995 = vmatprep.subr.mxu0 0.0
        %2996 = vmatpush1.xpose.msra.mxu0 0.0
        %2997 = vmatprep.subr.mxu0 0.0
        %2998 = vmatpush1.xpose.msra.mxu0 0.0
        %2999 = vmatprep.subr.mxu0 0.0
        %3000 = vmatpush1.xpose.msra.mxu0 0.0
        %3001 = vmatprep.subr.mxu0 0.0
        %3002 = vmatpush1.xpose.msra.mxu0 0.0
        %3003 = vmatprep.subr.mxu0 0.0
        %3004 = vmatpush1.xpose.msra.mxu0 0.0
        %3005 = vmatprep.subr.mxu0 0.0
        %3006 = vmatpush1.xpose.msra.mxu0 0.0
        %3007 = vmatprep.subr.mxu0 0.0
        %3008 = vmatpush1.xpose.msra.mxu0 0.0
        %3009 = vmatprep.subr.mxu0 0.0
        %3010 = vmatpush1.xpose.msra.mxu0 %v2979
        %3011 = vmatprep.subr.mxu0 0.0
        %3012 = vmatpush1.xpose.msra.mxu0 %v2977
        %3013 = vmatprep.subr.mxu0 0.0
        %3014 = vmatpush2.xpose.msra.mxu0 0.0
        %3015 = vmatprep.subr.mxu0 0.0
        %3016 = vmatpush2.xpose.msra.mxu0 0.0
        %3017 = vmatprep.subr.mxu0 0.0
        %3018 = vmatpush2.xpose.msra.mxu0 0.0
        %3019 = vmatprep.subr.mxu0 0.0
        %3020 = vmatpush2.xpose.msra.mxu0 0.0
        %3021 = vmatprep.subr.mxu0 0.0
        %3022 = vmatpush2.xpose.msra.mxu0 0.0
        %3023 = vmatprep.subr.mxu0 0.0
        %3024 = vmatpush2.xpose.msra.mxu0 0.0
        %3025 = vmatprep.subr.mxu0 0.0
        %3026 = vmatpush2.xpose.msra.mxu0 0.0
        %3027 = vmatprep.subr.mxu0 0.0
        %3028 = vmatpush2.xpose.msra.mxu0 0.0
        %3029 = vmatprep.subr.mxu0 0.0
        %3030 = vmatpush2.xpose.msra.mxu0 0.0
        %3031 = vmatprep.subr.mxu0 0.0
        %3032 = vmatpush2.xpose.msra.mxu0 0.0
        %3033 = vmatprep.subr.mxu0 0.0
        %3034 = vmatpush2.xpose.msra.mxu0 0.0
        %3035 = vmatprep.subr.mxu0 0.0
        %3036 = vmatpush2.xpose.msra.mxu0 0.0
        %3037 = vmatprep.subr.mxu0 0.0
        %3038 = vmatpush2.xpose.msra.mxu0 0.0
        %3039 = vmatprep.subr.mxu0 0.0
        %3040 = vmatpush2.xpose.msra.mxu0 0.0
        %3041 = vmatprep.subr.mxu0 0.0
        %3042 = vmatpush2.xpose.msra.mxu0 0.0
        %3043 = vmatprep.subr.mxu0 0.0
        %3044 = vmatpush2.xpose.msra.mxu0 0.0
        %3045 = vmatprep.mubr.f32.mxu0 0.0
        %3046 = vmatmul.mubr.f32.gmra.mxu0 %v2973
        %v3047 = vpop.f32.mrf.mxu0
        %v3048 = vadd.f32 0.0, %v3047
        %v3049 = vpop.f32.mrf.mxu0
        %3050 = vmatprep.mubr.f32.mxu0 0.0
        %3051 = vmatmul.mubr.f32.gmra.mxu0 %v2975
        %v3052 = vpop.f32.mrf.mxu0
        %v3053 = vadd.f32 0.0, %v3052
        %v3054 = vpop.f32.mrf.mxu0
        %3055 = vdwg.mxu0
        %v3056 = vmul.f32 %v2775, 0.35355338
        %v3057 = vmul.f32 %v2780, 0.35355338
        %v3058 = vmul.f32 %v2866, 0.35355338
        %v3059 = vmul.f32 %v2871, 0.35355338
        %v3060 = vmul.f32 %v2957, 0.35355338
        %v3061 = vmul.f32 %v2962, 0.35355338
        %v3062 = vmul.f32 %v3048, 0.35355338
        %v3063 = vmul.f32 %v3053, 0.35355338
        %v3064 = vsel %vm1397, %v3056, -inf
        %3065 = vmax.xlane.f32.xlu0 %v3064
        %v3066 = vpop.xlane.xlu0 %3065
        %v3067 = vsel %vm1397, %v3057, -inf
        %3068 = vmax.xlane.f32.xlu0 %v3067
        %v3069 = vpop.xlane.xlu0 %3068
        %v3070 = vsel %vm1397, %v3058, -inf
        %3071 = vmax.xlane.f32.xlu0 %v3070
        %v3072 = vpop.xlane.xlu0 %3071
        %v3073 = vsel %vm1397, %v3059, -inf
        %3074 = vmax.xlane.f32.xlu0 %v3073
        %v3075 = vpop.xlane.xlu0 %3074
        %v3076 = vsel %vm1397, %v3060, -inf
        %3077 = vmax.xlane.f32.xlu0 %v3076
        %v3078 = vpop.xlane.xlu0 %3077
        %v3079 = vsel %vm1397, %v3061, -inf
        %3080 = vmax.xlane.f32.xlu0 %v3079
        %v3081 = vpop.xlane.xlu0 %3080
        %v3082 = vsel %vm1397, %v3062, -inf
        %3083 = vmax.xlane.f32.xlu0 %v3082
        %v3084 = vpop.xlane.xlu0 %3083
        %v3085 = vsel %vm1397, %v3063, -inf
        %3086 = vmax.xlane.f32.xlu0 %v3085
        %v3087 = vpop.xlane.xlu0 %3086
        %v3088 = vsub.f32 %v3056, %v3066
        %v3089 = vsub.f32 %v3057, %v3069
        %v3090 = vsub.f32 %v3058, %v3072
        %v3091 = vsub.f32 %v3059, %v3075
        %v3092 = vsub.f32 %v3060, %v3078
        %v3093 = vsub.f32 %v3061, %v3081
        %v3094 = vsub.f32 %v3062, %v3084
        %v3095 = vsub.f32 %v3063, %v3087
        %v3096 = vmul.f32 %v3088, 1.442695
        %v3097 = vpow.pop %v3096
        %v3098 = vmul.f32 %v3089, 1.442695
        %v3099 = vpow.pop %v3098
        %v3100 = vmul.f32 %v3090, 1.442695
        %v3101 = vpow.pop %v3100
        %v3102 = vmul.f32 %v3091, 1.442695
        %v3103 = vpow.pop %v3102
        %v3104 = vmul.f32 %v3092, 1.442695
        %v3105 = vpow.pop %v3104
        %v3106 = vmul.f32 %v3093, 1.442695
        %v3107 = vpow.pop %v3106
        %v3108 = vmul.f32 %v3094, 1.442695
        %v3109 = vpow.pop %v3108
        %v3110 = vmul.f32 %v3095, 1.442695
        %v3111 = vpow.pop %v3110
        %v3112 = vsel %vm1397, %v3097, 0.0
        %3113 = vadd.xlane.f32.xlu0 %v3112
        %v3114 = vpop.xlane.xlu0 %3113
        %v3115 = vsel %vm1397, %v3099, 0.0
        %3116 = vadd.xlane.f32.xlu0 %v3115
        %v3117 = vpop.xlane.xlu0 %3116
        %v3118 = vsel %vm1397, %v3101, 0.0
        %3119 = vadd.xlane.f32.xlu0 %v3118
        %v3120 = vpop.xlane.xlu0 %3119
        %v3121 = vsel %vm1397, %v3103, 0.0
        %3122 = vadd.xlane.f32.xlu0 %v3121
        %v3123 = vpop.xlane.xlu0 %3122
        %v3124 = vsel %vm1397, %v3105, 0.0
        %3125 = vadd.xlane.f32.xlu0 %v3124
        %v3126 = vpop.xlane.xlu0 %3125
        %v3127 = vsel %vm1397, %v3107, 0.0
        %3128 = vadd.xlane.f32.xlu0 %v3127
        %v3129 = vpop.xlane.xlu0 %3128
        %v3130 = vsel %vm1397, %v3109, 0.0
        %3131 = vadd.xlane.f32.xlu0 %v3130
        %v3132 = vpop.xlane.xlu0 %3131
        %v3133 = vsel %vm1397, %v3111, 0.0
        %3134 = vadd.xlane.f32.xlu0 %v3133
        %v3135 = vpop.xlane.xlu0 %3134
        %v3136 = vrcp.pop %v3114
        %v3137 = vrcp.pop %v3117
        %v3138 = vrcp.pop %v3120
        %v3139 = vrcp.pop %v3123
        %v3140 = vrcp.pop %v3126
        %v3141 = vrcp.pop %v3129
        %v3142 = vrcp.pop %v3132
        %v3143 = vrcp.pop %v3135
        %v3144 = vmul.f32 %v3097, %v3136
        %v3145 = vmul.f32 %v3099, %v3137
        %v3146 = vmul.f32 %v3101, %v3138
        %v3147 = vmul.f32 %v3103, %v3139
        %v3148 = vmul.f32 %v3105, %v3140
        %v3149 = vmul.f32 %v3107, %v3141
        %v3150 = vmul.f32 %v3109, %v3142
        %v3151 = vmul.f32 %v3111, %v3143
        %s3152 = scalar_lea.vmem %s589, 128 [#allocation18]
        %3153 = vst.msk [vmem:[%s3152] sm:$0xff] %vm1397, %v3144
        %3154 = vst.msk [vmem:[%s3152 + $0x8] sm:$0xff] %vm1397, %v3145
        %3155 = vst.msk [vmem:[%s3152 + $0x10] sm:$0xff] %vm1397, %v3146
        %3156 = vst.msk [vmem:[%s3152 + $0x18] sm:$0xff] %vm1397, %v3147
        %3157 = vst.msk [vmem:[%s3152 + $0x20] sm:$0xff] %vm1397, %v3148
        %3158 = vst.msk [vmem:[%s3152 + $0x28] sm:$0xff] %vm1397, %v3149
        %3159 = vst.msk [vmem:[%s3152 + $0x30] sm:$0xff] %vm1397, %v3150
        %3160 = vst.msk [vmem:[%s3152 + $0x38] sm:$0xff] %vm1397, %v3151
        %3161 = vrot.lane.b32.xlu0 %v1002, 112
        %v3162 = vpop.permute.xlu0 %3161
        %3163 = vrot.lane.b32.xlu0 %v1007, 112
        %v3164 = vpop.permute.xlu0 %3163
        %v3168 = vsel %vm1397, %v3144, 0
        %v3171 = vsel %vm1397, %v3145, 0
        %3173 = vmatprep.subr.mxu0 0.0
        %3174 = vmatpush1.msra.mxu0 0.0
        %3175 = vmatprep.subr.mxu0 0.0
        %3176 = vmatpush1.msra.mxu0 0.0
        %3177 = vmatprep.subr.mxu0 0.0
        %3178 = vmatpush1.msra.mxu0 0.0
        %3179 = vmatprep.subr.mxu0 0.0
        %3180 = vmatpush1.msra.mxu0 0.0
        %3181 = vmatprep.subr.mxu0 0.0
        %3182 = vmatpush1.msra.mxu0 0.0
        %3183 = vmatprep.subr.mxu0 0.0
        %3184 = vmatpush1.msra.mxu0 0.0
        %3185 = vmatprep.subr.mxu0 0.0
        %3186 = vmatpush1.msra.mxu0 0.0
        %3187 = vmatprep.subr.mxu0 0.0
        %3188 = vmatpush1.msra.mxu0 0.0
        %3189 = vmatprep.subr.mxu0 0.0
        %3190 = vmatpush1.msra.mxu0 0.0
        %3191 = vmatprep.subr.mxu0 0.0
        %3192 = vmatpush1.msra.mxu0 0.0
        %3193 = vmatprep.subr.mxu0 0.0
        %3194 = vmatpush1.msra.mxu0 0.0
        %3195 = vmatprep.subr.mxu0 0.0
        %3196 = vmatpush1.msra.mxu0 0.0
        %3197 = vmatprep.subr.mxu0 0.0
        %3198 = vmatpush1.msra.mxu0 0.0
        %3199 = vmatprep.subr.mxu0 0.0
        %3200 = vmatpush1.msra.mxu0 0.0
        %3201 = vmatprep.subr.mxu0 0.0
        %3202 = vmatpush1.msra.mxu0 %v3164
        %3203 = vmatprep.subr.mxu0 0.0
        %3204 = vmatpush1.msra.mxu0 %v3162
        %3205 = vmatprep.subr.mxu0 0.0
        %3206 = vmatpush2.msra.mxu0 0.0
        %3207 = vmatprep.subr.mxu0 0.0
        %3208 = vmatpush2.msra.mxu0 0.0
        %3209 = vmatprep.subr.mxu0 0.0
        %3210 = vmatpush2.msra.mxu0 0.0
        %3211 = vmatprep.subr.mxu0 0.0
        %3212 = vmatpush2.msra.mxu0 0.0
        %3213 = vmatprep.subr.mxu0 0.0
        %3214 = vmatpush2.msra.mxu0 0.0
        %3215 = vmatprep.subr.mxu0 0.0
        %3216 = vmatpush2.msra.mxu0 0.0
        %3217 = vmatprep.subr.mxu0 0.0
        %3218 = vmatpush2.msra.mxu0 0.0
        %3219 = vmatprep.subr.mxu0 0.0
        %3220 = vmatpush2.msra.mxu0 0.0
        %3221 = vmatprep.subr.mxu0 0.0
        %3222 = vmatpush2.msra.mxu0 0.0
        %3223 = vmatprep.subr.mxu0 0.0
        %3224 = vmatpush2.msra.mxu0 0.0
        %3225 = vmatprep.subr.mxu0 0.0
        %3226 = vmatpush2.msra.mxu0 0.0
        %3227 = vmatprep.subr.mxu0 0.0
        %3228 = vmatpush2.msra.mxu0 0.0
        %3229 = vmatprep.subr.mxu0 0.0
        %3230 = vmatpush2.msra.mxu0 0.0
        %3231 = vmatprep.subr.mxu0 0.0
        %3232 = vmatpush2.msra.mxu0 0.0
        %3233 = vmatprep.subr.mxu0 0.0
        %3234 = vmatpush2.msra.mxu0 0.0
        %3235 = vmatprep.subr.mxu0 0.0
        %3236 = vmatpush2.msra.mxu0 0.0
        %3237 = vmatprep.mubr.f32.mxu0 0.0
        %3238 = vmatmul.mubr.f32.gmra.mxu0 %v3168
        %v3239 = vpop.f32.mrf.mxu0
        %v3240 = vadd.f32 0.0, %v3239
        %v3241 = vpop.f32.mrf.mxu0
        %3242 = vmatprep.mubr.f32.mxu0 0.0
        %3243 = vmatmul.mubr.f32.gmra.mxu0 %v3171
        %v3244 = vpop.f32.mrf.mxu0
        %v3245 = vadd.f32 0.0, %v3244
        %v3246 = vpop.f32.mrf.mxu0
        %3247 = vdwg.mxu0
        %3248 = vrot.lane.b32.xlu0 %v1012, 112
        %v3249 = vpop.permute.xlu0 %3248
        %3250 = vrot.lane.b32.xlu0 %v1017, 112
        %v3251 = vpop.permute.xlu0 %3250
        %v3255 = vsel %vm1397, %v3146, 0
        %v3258 = vsel %vm1397, %v3147, 0
        %3260 = vmatprep.subr.mxu0 0.0
        %3261 = vmatpush1.msra.mxu0 0.0
        %3262 = vmatprep.subr.mxu0 0.0
        %3263 = vmatpush1.msra.mxu0 0.0
        %3264 = vmatprep.subr.mxu0 0.0
        %3265 = vmatpush1.msra.mxu0 0.0
        %3266 = vmatprep.subr.mxu0 0.0
        %3267 = vmatpush1.msra.mxu0 0.0
        %3268 = vmatprep.subr.mxu0 0.0
        %3269 = vmatpush1.msra.mxu0 0.0
        %3270 = vmatprep.subr.mxu0 0.0
        %3271 = vmatpush1.msra.mxu0 0.0
        %3272 = vmatprep.subr.mxu0 0.0
        %3273 = vmatpush1.msra.mxu0 0.0
        %3274 = vmatprep.subr.mxu0 0.0
        %3275 = vmatpush1.msra.mxu0 0.0
        %3276 = vmatprep.subr.mxu0 0.0
        %3277 = vmatpush1.msra.mxu0 0.0
        %3278 = vmatprep.subr.mxu0 0.0
        %3279 = vmatpush1.msra.mxu0 0.0
        %3280 = vmatprep.subr.mxu0 0.0
        %3281 = vmatpush1.msra.mxu0 0.0
        %3282 = vmatprep.subr.mxu0 0.0
        %3283 = vmatpush1.msra.mxu0 0.0
        %3284 = vmatprep.subr.mxu0 0.0
        %3285 = vmatpush1.msra.mxu0 0.0
        %3286 = vmatprep.subr.mxu0 0.0
        %3287 = vmatpush1.msra.mxu0 0.0
        %3288 = vmatprep.subr.mxu0 0.0
        %3289 = vmatpush1.msra.mxu0 %v3251
        %3290 = vmatprep.subr.mxu0 0.0
        %3291 = vmatpush1.msra.mxu0 %v3249
        %3292 = vmatprep.subr.mxu0 0.0
        %3293 = vmatpush2.msra.mxu0 0.0
        %3294 = vmatprep.subr.mxu0 0.0
        %3295 = vmatpush2.msra.mxu0 0.0
        %3296 = vmatprep.subr.mxu0 0.0
        %3297 = vmatpush2.msra.mxu0 0.0
        %3298 = vmatprep.subr.mxu0 0.0
        %3299 = vmatpush2.msra.mxu0 0.0
        %3300 = vmatprep.subr.mxu0 0.0
        %3301 = vmatpush2.msra.mxu0 0.0
        %3302 = vmatprep.subr.mxu0 0.0
        %3303 = vmatpush2.msra.mxu0 0.0
        %3304 = vmatprep.subr.mxu0 0.0
        %3305 = vmatpush2.msra.mxu0 0.0
        %3306 = vmatprep.subr.mxu0 0.0
        %3307 = vmatpush2.msra.mxu0 0.0
        %3308 = vmatprep.subr.mxu0 0.0
        %3309 = vmatpush2.msra.mxu0 0.0
        %3310 = vmatprep.subr.mxu0 0.0
        %3311 = vmatpush2.msra.mxu0 0.0
        %3312 = vmatprep.subr.mxu0 0.0
        %3313 = vmatpush2.msra.mxu0 0.0
        %3314 = vmatprep.subr.mxu0 0.0
        %3315 = vmatpush2.msra.mxu0 0.0
        %3316 = vmatprep.subr.mxu0 0.0
        %3317 = vmatpush2.msra.mxu0 0.0
        %3318 = vmatprep.subr.mxu0 0.0
        %3319 = vmatpush2.msra.mxu0 0.0
        %3320 = vmatprep.subr.mxu0 0.0
        %3321 = vmatpush2.msra.mxu0 0.0
        %3322 = vmatprep.subr.mxu0 0.0
        %3323 = vmatpush2.msra.mxu0 0.0
        %3324 = vmatprep.mubr.f32.mxu0 0.0
        %3325 = vmatmul.mubr.f32.gmra.mxu0 %v3255
        %v3326 = vpop.f32.mrf.mxu0
        %v3327 = vadd.f32 0.0, %v3326
        %v3328 = vpop.f32.mrf.mxu0
        %3329 = vmatprep.mubr.f32.mxu0 0.0
        %3330 = vmatmul.mubr.f32.gmra.mxu0 %v3258
        %v3331 = vpop.f32.mrf.mxu0
        %v3332 = vadd.f32 0.0, %v3331
        %v3333 = vpop.f32.mrf.mxu0
        %3334 = vdwg.mxu0
        %3335 = vrot.lane.b32.xlu0 %v1022, 112
        %v3336 = vpop.permute.xlu0 %3335
        %3337 = vrot.lane.b32.xlu0 %v1027, 112
        %v3338 = vpop.permute.xlu0 %3337
        %v3342 = vsel %vm1397, %v3148, 0
        %v3345 = vsel %vm1397, %v3149, 0
        %3347 = vmatprep.subr.mxu0 0.0
        %3348 = vmatpush1.msra.mxu0 0.0
        %3349 = vmatprep.subr.mxu0 0.0
        %3350 = vmatpush1.msra.mxu0 0.0
        %3351 = vmatprep.subr.mxu0 0.0
        %3352 = vmatpush1.msra.mxu0 0.0
        %3353 = vmatprep.subr.mxu0 0.0
        %3354 = vmatpush1.msra.mxu0 0.0
        %3355 = vmatprep.subr.mxu0 0.0
        %3356 = vmatpush1.msra.mxu0 0.0
        %3357 = vmatprep.subr.mxu0 0.0
        %3358 = vmatpush1.msra.mxu0 0.0
        %3359 = vmatprep.subr.mxu0 0.0
        %3360 = vmatpush1.msra.mxu0 0.0
        %3361 = vmatprep.subr.mxu0 0.0
        %3362 = vmatpush1.msra.mxu0 0.0
        %3363 = vmatprep.subr.mxu0 0.0
        %3364 = vmatpush1.msra.mxu0 0.0
        %3365 = vmatprep.subr.mxu0 0.0
        %3366 = vmatpush1.msra.mxu0 0.0
        %3367 = vmatprep.subr.mxu0 0.0
        %3368 = vmatpush1.msra.mxu0 0.0
        %3369 = vmatprep.subr.mxu0 0.0
        %3370 = vmatpush1.msra.mxu0 0.0
        %3371 = vmatprep.subr.mxu0 0.0
        %3372 = vmatpush1.msra.mxu0 0.0
        %3373 = vmatprep.subr.mxu0 0.0
        %3374 = vmatpush1.msra.mxu0 0.0
        %3375 = vmatprep.subr.mxu0 0.0
        %3376 = vmatpush1.msra.mxu0 %v3338
        %3377 = vmatprep.subr.mxu0 0.0
        %3378 = vmatpush1.msra.mxu0 %v3336
        %3379 = vmatprep.subr.mxu0 0.0
        %3380 = vmatpush2.msra.mxu0 0.0
        %3381 = vmatprep.subr.mxu0 0.0
        %3382 = vmatpush2.msra.mxu0 0.0
        %3383 = vmatprep.subr.mxu0 0.0
        %3384 = vmatpush2.msra.mxu0 0.0
        %3385 = vmatprep.subr.mxu0 0.0
        %3386 = vmatpush2.msra.mxu0 0.0
        %3387 = vmatprep.subr.mxu0 0.0
        %3388 = vmatpush2.msra.mxu0 0.0
        %3389 = vmatprep.subr.mxu0 0.0
        %3390 = vmatpush2.msra.mxu0 0.0
        %3391 = vmatprep.subr.mxu0 0.0
        %3392 = vmatpush2.msra.mxu0 0.0
        %3393 = vmatprep.subr.mxu0 0.0
        %3394 = vmatpush2.msra.mxu0 0.0
        %3395 = vmatprep.subr.mxu0 0.0
        %3396 = vmatpush2.msra.mxu0 0.0
        %3397 = vmatprep.subr.mxu0 0.0
        %3398 = vmatpush2.msra.mxu0 0.0
        %3399 = vmatprep.subr.mxu0 0.0
        %3400 = vmatpush2.msra.mxu0 0.0
        %3401 = vmatprep.subr.mxu0 0.0
        %3402 = vmatpush2.msra.mxu0 0.0
        %3403 = vmatprep.subr.mxu0 0.0
        %3404 = vmatpush2.msra.mxu0 0.0
        %3405 = vmatprep.subr.mxu0 0.0
        %3406 = vmatpush2.msra.mxu0 0.0
        %3407 = vmatprep.subr.mxu0 0.0
        %3408 = vmatpush2.msra.mxu0 0.0
        %3409 = vmatprep.subr.mxu0 0.0
        %3410 = vmatpush2.msra.mxu0 0.0
        %3411 = vmatprep.mubr.f32.mxu0 0.0
        %3412 = vmatmul.mubr.f32.gmra.mxu0 %v3342
        %v3413 = vpop.f32.mrf.mxu0
        %v3414 = vadd.f32 0.0, %v3413
        %v3415 = vpop.f32.mrf.mxu0
        %3416 = vmatprep.mubr.f32.mxu0 0.0
        %3417 = vmatmul.mubr.f32.gmra.mxu0 %v3345
        %v3418 = vpop.f32.mrf.mxu0
        %v3419 = vadd.f32 0.0, %v3418
        %v3420 = vpop.f32.mrf.mxu0
        %3421 = vdwg.mxu0
        %3422 = vrot.lane.b32.xlu0 %v1032, 112
        %v3423 = vpop.permute.xlu0 %3422
        %3424 = vrot.lane.b32.xlu0 %v1037, 112
        %v3425 = vpop.permute.xlu0 %3424
        %v3429 = vsel %vm1397, %v3150, 0
        %v3432 = vsel %vm1397, %v3151, 0
        %3434 = vmatprep.subr.mxu0 0.0
        %3435 = vmatpush1.msra.mxu0 0.0
        %3436 = vmatprep.subr.mxu0 0.0
        %3437 = vmatpush1.msra.mxu0 0.0
        %3438 = vmatprep.subr.mxu0 0.0
        %3439 = vmatpush1.msra.mxu0 0.0
        %3440 = vmatprep.subr.mxu0 0.0
        %3441 = vmatpush1.msra.mxu0 0.0
        %3442 = vmatprep.subr.mxu0 0.0
        %3443 = vmatpush1.msra.mxu0 0.0
        %3444 = vmatprep.subr.mxu0 0.0
        %3445 = vmatpush1.msra.mxu0 0.0
        %3446 = vmatprep.subr.mxu0 0.0
        %3447 = vmatpush1.msra.mxu0 0.0
        %3448 = vmatprep.subr.mxu0 0.0
        %3449 = vmatpush1.msra.mxu0 0.0
        %3450 = vmatprep.subr.mxu0 0.0
        %3451 = vmatpush1.msra.mxu0 0.0
        %3452 = vmatprep.subr.mxu0 0.0
        %3453 = vmatpush1.msra.mxu0 0.0
        %3454 = vmatprep.subr.mxu0 0.0
        %3455 = vmatpush1.msra.mxu0 0.0
        %3456 = vmatprep.subr.mxu0 0.0
        %3457 = vmatpush1.msra.mxu0 0.0
        %3458 = vmatprep.subr.mxu0 0.0
        %3459 = vmatpush1.msra.mxu0 0.0
        %3460 = vmatprep.subr.mxu0 0.0
        %3461 = vmatpush1.msra.mxu0 0.0
        %3462 = vmatprep.subr.mxu0 0.0
        %3463 = vmatpush1.msra.mxu0 %v3425
        %3464 = vmatprep.subr.mxu0 0.0
        %3465 = vmatpush1.msra.mxu0 %v3423
        %3466 = vmatprep.subr.mxu0 0.0
        %3467 = vmatpush2.msra.mxu0 0.0
        %3468 = vmatprep.subr.mxu0 0.0
        %3469 = vmatpush2.msra.mxu0 0.0
        %3470 = vmatprep.subr.mxu0 0.0
        %3471 = vmatpush2.msra.mxu0 0.0
        %3472 = vmatprep.subr.mxu0 0.0
        %3473 = vmatpush2.msra.mxu0 0.0
        %3474 = vmatprep.subr.mxu0 0.0
        %3475 = vmatpush2.msra.mxu0 0.0
        %3476 = vmatprep.subr.mxu0 0.0
        %3477 = vmatpush2.msra.mxu0 0.0
        %3478 = vmatprep.subr.mxu0 0.0
        %3479 = vmatpush2.msra.mxu0 0.0
        %3480 = vmatprep.subr.mxu0 0.0
        %3481 = vmatpush2.msra.mxu0 0.0
        %3482 = vmatprep.subr.mxu0 0.0
        %3483 = vmatpush2.msra.mxu0 0.0
        %3484 = vmatprep.subr.mxu0 0.0
        %3485 = vmatpush2.msra.mxu0 0.0
        %3486 = vmatprep.subr.mxu0 0.0
        %3487 = vmatpush2.msra.mxu0 0.0
        %3488 = vmatprep.subr.mxu0 0.0
        %3489 = vmatpush2.msra.mxu0 0.0
        %3490 = vmatprep.subr.mxu0 0.0
        %3491 = vmatpush2.msra.mxu0 0.0
        %3492 = vmatprep.subr.mxu0 0.0
        %3493 = vmatpush2.msra.mxu0 0.0
        %3494 = vmatprep.subr.mxu0 0.0
        %3495 = vmatpush2.msra.mxu0 0.0
        %3496 = vmatprep.subr.mxu0 0.0
        %3497 = vmatpush2.msra.mxu0 0.0
        %3498 = vmatprep.mubr.f32.mxu0 0.0
        %3499 = vmatmul.mubr.f32.gmra.mxu0 %v3429
        %v3500 = vpop.f32.mrf.mxu0
        %v3501 = vadd.f32 0.0, %v3500
        %v3502 = vpop.f32.mrf.mxu0
        %3503 = vmatprep.mubr.f32.mxu0 0.0
        %3504 = vmatmul.mubr.f32.gmra.mxu0 %v3432
        %v3505 = vpop.f32.mrf.mxu0
        %v3506 = vadd.f32 0.0, %v3505
        %v3507 = vpop.f32.mrf.mxu0
        %3508 = vdwg.mxu0
        %3517 = vrot.lane.b32.xlu0 %v3240, 16
        %v3518 = vpop.permute.xlu0 %3517
        %3519 = vrot.lane.b32.xlu0 %v3245, 16
        %v3520 = vpop.permute.xlu0 %3519
        %3521 = vrot.lane.b32.xlu0 %v3327, 16
        %v3522 = vpop.permute.xlu0 %3521
        %3523 = vrot.lane.b32.xlu0 %v3332, 16
        %v3524 = vpop.permute.xlu0 %3523
        %3525 = vrot.lane.b32.xlu0 %v3414, 16
        %v3526 = vpop.permute.xlu0 %3525
        %3527 = vrot.lane.b32.xlu0 %v3419, 16
        %v3528 = vpop.permute.xlu0 %3527
        %3529 = vrot.lane.b32.xlu0 %v3501, 16
        %v3530 = vpop.permute.xlu0 %3529
        %3531 = vrot.lane.b32.xlu0 %v3506, 16
        %v3532 = vpop.permute.xlu0 %3531
        %vm3541 = vcmask 195712
        %3542 = vst.msk [vmem:[#allocation2] sm:$0xff] %vm3541, %v3518
        %3543 = vst.msk [vmem:[#allocation2 + $0x8] sm:$0xff] %vm3541, %v3520
        %3544 = vst.msk [vmem:[#allocation2 + $0x10] sm:$0xff] %vm3541, %v3522
        %3545 = vst.msk [vmem:[#allocation2 + $0x18] sm:$0xff] %vm3541, %v3524
        %3546 = vst.msk [vmem:[#allocation2 + $0x20] sm:$0xff] %vm3541, %v3526
        %3547 = vst.msk [vmem:[#allocation2 + $0x28] sm:$0xff] %vm3541, %v3528
        %3548 = vst.msk [vmem:[#allocation2 + $0x30] sm:$0xff] %vm3541, %v3530
        %3549 = vst.msk [vmem:[#allocation2 + $0x38] sm:$0xff] %vm3541, %v3532
        %3550 = vrot.lane.b32.xlu0 %v722, 104
        %v3551 = vpop.permute.xlu0 %3550
        %3552 = vrot.lane.b32.xlu0 %v727, 104
        %v3553 = vpop.permute.xlu0 %3552
        %3554 = vrot.lane.b32.xlu0 %v862, 104
        %v3555 = vpop.permute.xlu0 %3554
        %3556 = vrot.lane.b32.xlu0 %v867, 104
        %v3557 = vpop.permute.xlu0 %3556
        %v3558 = vsel %vm1040, %v3551, 0
        %v3560 = vsel %vm1040, %v3553, 0
        %v3562 = vsel %vm1040, %v3555, 0
        %v3564 = vsel %vm1040, %v3557, 0
        %3566 = vmatprep.subr.mxu0 0.0
        %3567 = vmatpush1.xpose.msra.mxu0 0.0
        %3568 = vmatprep.subr.mxu0 0.0
        %3569 = vmatpush1.xpose.msra.mxu0 0.0
        %3570 = vmatprep.subr.mxu0 0.0
        %3571 = vmatpush1.xpose.msra.mxu0 0.0
        %3572 = vmatprep.subr.mxu0 0.0
        %3573 = vmatpush1.xpose.msra.mxu0 0.0
        %3574 = vmatprep.subr.mxu0 0.0
        %3575 = vmatpush1.xpose.msra.mxu0 0.0
        %3576 = vmatprep.subr.mxu0 0.0
        %3577 = vmatpush1.xpose.msra.mxu0 0.0
        %3578 = vmatprep.subr.mxu0 0.0
        %3579 = vmatpush1.xpose.msra.mxu0 0.0
        %3580 = vmatprep.subr.mxu0 0.0
        %3581 = vmatpush1.xpose.msra.mxu0 0.0
        %3582 = vmatprep.subr.mxu0 0.0
        %3583 = vmatpush1.xpose.msra.mxu0 0.0
        %3584 = vmatprep.subr.mxu0 0.0
        %3585 = vmatpush1.xpose.msra.mxu0 0.0
        %3586 = vmatprep.subr.mxu0 0.0
        %3587 = vmatpush1.xpose.msra.mxu0 0.0
        %3588 = vmatprep.subr.mxu0 0.0
        %3589 = vmatpush1.xpose.msra.mxu0 0.0
        %3590 = vmatprep.subr.mxu0 0.0
        %3591 = vmatpush1.xpose.msra.mxu0 0.0
        %3592 = vmatprep.subr.mxu0 0.0
        %3593 = vmatpush1.xpose.msra.mxu0 0.0
        %3594 = vmatprep.subr.mxu0 0.0
        %3595 = vmatpush1.xpose.msra.mxu0 %v3564
        %3596 = vmatprep.subr.mxu0 0.0
        %3597 = vmatpush1.xpose.msra.mxu0 %v3562
        %3598 = vmatprep.subr.mxu0 0.0
        %3599 = vmatpush2.xpose.msra.mxu0 0.0
        %3600 = vmatprep.subr.mxu0 0.0
        %3601 = vmatpush2.xpose.msra.mxu0 0.0
        %3602 = vmatprep.subr.mxu0 0.0
        %3603 = vmatpush2.xpose.msra.mxu0 0.0
        %3604 = vmatprep.subr.mxu0 0.0
        %3605 = vmatpush2.xpose.msra.mxu0 0.0
        %3606 = vmatprep.subr.mxu0 0.0
        %3607 = vmatpush2.xpose.msra.mxu0 0.0
        %3608 = vmatprep.subr.mxu0 0.0
        %3609 = vmatpush2.xpose.msra.mxu0 0.0
        %3610 = vmatprep.subr.mxu0 0.0
        %3611 = vmatpush2.xpose.msra.mxu0 0.0
        %3612 = vmatprep.subr.mxu0 0.0
        %3613 = vmatpush2.xpose.msra.mxu0 0.0
        %3614 = vmatprep.subr.mxu0 0.0
        %3615 = vmatpush2.xpose.msra.mxu0 0.0
        %3616 = vmatprep.subr.mxu0 0.0
        %3617 = vmatpush2.xpose.msra.mxu0 0.0
        %3618 = vmatprep.subr.mxu0 0.0
        %3619 = vmatpush2.xpose.msra.mxu0 0.0
        %3620 = vmatprep.subr.mxu0 0.0
        %3621 = vmatpush2.xpose.msra.mxu0 0.0
        %3622 = vmatprep.subr.mxu0 0.0
        %3623 = vmatpush2.xpose.msra.mxu0 0.0
        %3624 = vmatprep.subr.mxu0 0.0
        %3625 = vmatpush2.xpose.msra.mxu0 0.0
        %3626 = vmatprep.subr.mxu0 0.0
        %3627 = vmatpush2.xpose.msra.mxu0 0.0
        %3628 = vmatprep.subr.mxu0 0.0
        %3629 = vmatpush2.xpose.msra.mxu0 0.0
        %3630 = vmatprep.mubr.f32.mxu0 0.0
        %3631 = vmatmul.mubr.f32.gmra.mxu0 %v3558
        %v3632 = vpop.f32.mrf.mxu0
        %v3633 = vadd.f32 0.0, %v3632
        %v3634 = vpop.f32.mrf.mxu0
        %3635 = vmatprep.mubr.f32.mxu0 0.0
        %3636 = vmatmul.mubr.f32.gmra.mxu0 %v3560
        %v3637 = vpop.f32.mrf.mxu0
        %v3638 = vadd.f32 0.0, %v3637
        %v3639 = vpop.f32.mrf.mxu0
        %3640 = vdwg.mxu0
        %3641 = vrot.lane.b32.xlu0 %v732, 104
        %v3642 = vpop.permute.xlu0 %3641
        %3643 = vrot.lane.b32.xlu0 %v737, 104
        %v3644 = vpop.permute.xlu0 %3643
        %3645 = vrot.lane.b32.xlu0 %v872, 104
        %v3646 = vpop.permute.xlu0 %3645
        %3647 = vrot.lane.b32.xlu0 %v877, 104
        %v3648 = vpop.permute.xlu0 %3647
        %v3649 = vsel %vm1040, %v3642, 0
        %v3651 = vsel %vm1040, %v3644, 0
        %v3653 = vsel %vm1040, %v3646, 0
        %v3655 = vsel %vm1040, %v3648, 0
        %3657 = vmatprep.subr.mxu0 0.0
        %3658 = vmatpush1.xpose.msra.mxu0 0.0
        %3659 = vmatprep.subr.mxu0 0.0
        %3660 = vmatpush1.xpose.msra.mxu0 0.0
        %3661 = vmatprep.subr.mxu0 0.0
        %3662 = vmatpush1.xpose.msra.mxu0 0.0
        %3663 = vmatprep.subr.mxu0 0.0
        %3664 = vmatpush1.xpose.msra.mxu0 0.0
        %3665 = vmatprep.subr.mxu0 0.0
        %3666 = vmatpush1.xpose.msra.mxu0 0.0
        %3667 = vmatprep.subr.mxu0 0.0
        %3668 = vmatpush1.xpose.msra.mxu0 0.0
        %3669 = vmatprep.subr.mxu0 0.0
        %3670 = vmatpush1.xpose.msra.mxu0 0.0
        %3671 = vmatprep.subr.mxu0 0.0
        %3672 = vmatpush1.xpose.msra.mxu0 0.0
        %3673 = vmatprep.subr.mxu0 0.0
        %3674 = vmatpush1.xpose.msra.mxu0 0.0
        %3675 = vmatprep.subr.mxu0 0.0
        %3676 = vmatpush1.xpose.msra.mxu0 0.0
        %3677 = vmatprep.subr.mxu0 0.0
        %3678 = vmatpush1.xpose.msra.mxu0 0.0
        %3679 = vmatprep.subr.mxu0 0.0
        %3680 = vmatpush1.xpose.msra.mxu0 0.0
        %3681 = vmatprep.subr.mxu0 0.0
        %3682 = vmatpush1.xpose.msra.mxu0 0.0
        %3683 = vmatprep.subr.mxu0 0.0
        %3684 = vmatpush1.xpose.msra.mxu0 0.0
        %3685 = vmatprep.subr.mxu0 0.0
        %3686 = vmatpush1.xpose.msra.mxu0 %v3655
        %3687 = vmatprep.subr.mxu0 0.0
        %3688 = vmatpush1.xpose.msra.mxu0 %v3653
        %3689 = vmatprep.subr.mxu0 0.0
        %3690 = vmatpush2.xpose.msra.mxu0 0.0
        %3691 = vmatprep.subr.mxu0 0.0
        %3692 = vmatpush2.xpose.msra.mxu0 0.0
        %3693 = vmatprep.subr.mxu0 0.0
        %3694 = vmatpush2.xpose.msra.mxu0 0.0
        %3695 = vmatprep.subr.mxu0 0.0
        %3696 = vmatpush2.xpose.msra.mxu0 0.0
        %3697 = vmatprep.subr.mxu0 0.0
        %3698 = vmatpush2.xpose.msra.mxu0 0.0
        %3699 = vmatprep.subr.mxu0 0.0
        %3700 = vmatpush2.xpose.msra.mxu0 0.0
        %3701 = vmatprep.subr.mxu0 0.0
        %3702 = vmatpush2.xpose.msra.mxu0 0.0
        %3703 = vmatprep.subr.mxu0 0.0
        %3704 = vmatpush2.xpose.msra.mxu0 0.0
        %3705 = vmatprep.subr.mxu0 0.0
        %3706 = vmatpush2.xpose.msra.mxu0 0.0
        %3707 = vmatprep.subr.mxu0 0.0
        %3708 = vmatpush2.xpose.msra.mxu0 0.0
        %3709 = vmatprep.subr.mxu0 0.0
        %3710 = vmatpush2.xpose.msra.mxu0 0.0
        %3711 = vmatprep.subr.mxu0 0.0
        %3712 = vmatpush2.xpose.msra.mxu0 0.0
        %3713 = vmatprep.subr.mxu0 0.0
        %3714 = vmatpush2.xpose.msra.mxu0 0.0
        %3715 = vmatprep.subr.mxu0 0.0
        %3716 = vmatpush2.xpose.msra.mxu0 0.0
        %3717 = vmatprep.subr.mxu0 0.0
        %3718 = vmatpush2.xpose.msra.mxu0 0.0
        %3719 = vmatprep.subr.mxu0 0.0
        %3720 = vmatpush2.xpose.msra.mxu0 0.0
        %3721 = vmatprep.mubr.f32.mxu0 0.0
        %3722 = vmatmul.mubr.f32.gmra.mxu0 %v3649
        %v3723 = vpop.f32.mrf.mxu0
        %v3724 = vadd.f32 0.0, %v3723
        %v3725 = vpop.f32.mrf.mxu0
        %3726 = vmatprep.mubr.f32.mxu0 0.0
        %3727 = vmatmul.mubr.f32.gmra.mxu0 %v3651
        %v3728 = vpop.f32.mrf.mxu0
        %v3729 = vadd.f32 0.0, %v3728
        %v3730 = vpop.f32.mrf.mxu0
        %3731 = vdwg.mxu0
        %3732 = vrot.lane.b32.xlu0 %v742, 104
        %v3733 = vpop.permute.xlu0 %3732
        %3734 = vrot.lane.b32.xlu0 %v747, 104
        %v3735 = vpop.permute.xlu0 %3734
        %3736 = vrot.lane.b32.xlu0 %v882, 104
        %v3737 = vpop.permute.xlu0 %3736
        %3738 = vrot.lane.b32.xlu0 %v887, 104
        %v3739 = vpop.permute.xlu0 %3738
        %v3740 = vsel %vm1040, %v3733, 0
        %v3742 = vsel %vm1040, %v3735, 0
        %v3744 = vsel %vm1040, %v3737, 0
        %v3746 = vsel %vm1040, %v3739, 0
        %3748 = vmatprep.subr.mxu0 0.0
        %3749 = vmatpush1.xpose.msra.mxu0 0.0
        %3750 = vmatprep.subr.mxu0 0.0
        %3751 = vmatpush1.xpose.msra.mxu0 0.0
        %3752 = vmatprep.subr.mxu0 0.0
        %3753 = vmatpush1.xpose.msra.mxu0 0.0
        %3754 = vmatprep.subr.mxu0 0.0
        %3755 = vmatpush1.xpose.msra.mxu0 0.0
        %3756 = vmatprep.subr.mxu0 0.0
        %3757 = vmatpush1.xpose.msra.mxu0 0.0
        %3758 = vmatprep.subr.mxu0 0.0
        %3759 = vmatpush1.xpose.msra.mxu0 0.0
        %3760 = vmatprep.subr.mxu0 0.0
        %3761 = vmatpush1.xpose.msra.mxu0 0.0
        %3762 = vmatprep.subr.mxu0 0.0
        %3763 = vmatpush1.xpose.msra.mxu0 0.0
        %3764 = vmatprep.subr.mxu0 0.0
        %3765 = vmatpush1.xpose.msra.mxu0 0.0
        %3766 = vmatprep.subr.mxu0 0.0
        %3767 = vmatpush1.xpose.msra.mxu0 0.0
        %3768 = vmatprep.subr.mxu0 0.0
        %3769 = vmatpush1.xpose.msra.mxu0 0.0
        %3770 = vmatprep.subr.mxu0 0.0
        %3771 = vmatpush1.xpose.msra.mxu0 0.0
        %3772 = vmatprep.subr.mxu0 0.0
        %3773 = vmatpush1.xpose.msra.mxu0 0.0
        %3774 = vmatprep.subr.mxu0 0.0
        %3775 = vmatpush1.xpose.msra.mxu0 0.0
        %3776 = vmatprep.subr.mxu0 0.0
        %3777 = vmatpush1.xpose.msra.mxu0 %v3746
        %3778 = vmatprep.subr.mxu0 0.0
        %3779 = vmatpush1.xpose.msra.mxu0 %v3744
        %3780 = vmatprep.subr.mxu0 0.0
        %3781 = vmatpush2.xpose.msra.mxu0 0.0
        %3782 = vmatprep.subr.mxu0 0.0
        %3783 = vmatpush2.xpose.msra.mxu0 0.0
        %3784 = vmatprep.subr.mxu0 0.0
        %3785 = vmatpush2.xpose.msra.mxu0 0.0
        %3786 = vmatprep.subr.mxu0 0.0
        %3787 = vmatpush2.xpose.msra.mxu0 0.0
        %3788 = vmatprep.subr.mxu0 0.0
        %3789 = vmatpush2.xpose.msra.mxu0 0.0
        %3790 = vmatprep.subr.mxu0 0.0
        %3791 = vmatpush2.xpose.msra.mxu0 0.0
        %3792 = vmatprep.subr.mxu0 0.0
        %3793 = vmatpush2.xpose.msra.mxu0 0.0
        %3794 = vmatprep.subr.mxu0 0.0
        %3795 = vmatpush2.xpose.msra.mxu0 0.0
        %3796 = vmatprep.subr.mxu0 0.0
        %3797 = vmatpush2.xpose.msra.mxu0 0.0
        %3798 = vmatprep.subr.mxu0 0.0
        %3799 = vmatpush2.xpose.msra.mxu0 0.0
        %3800 = vmatprep.subr.mxu0 0.0
        %3801 = vmatpush2.xpose.msra.mxu0 0.0
        %3802 = vmatprep.subr.mxu0 0.0
        %3803 = vmatpush2.xpose.msra.mxu0 0.0
        %3804 = vmatprep.subr.mxu0 0.0
        %3805 = vmatpush2.xpose.msra.mxu0 0.0
        %3806 = vmatprep.subr.mxu0 0.0
        %3807 = vmatpush2.xpose.msra.mxu0 0.0
        %3808 = vmatprep.subr.mxu0 0.0
        %3809 = vmatpush2.xpose.msra.mxu0 0.0
        %3810 = vmatprep.subr.mxu0 0.0
        %3811 = vmatpush2.xpose.msra.mxu0 0.0
        %3812 = vmatprep.mubr.f32.mxu0 0.0
        %3813 = vmatmul.mubr.f32.gmra.mxu0 %v3740
        %v3814 = vpop.f32.mrf.mxu0
        %v3815 = vadd.f32 0.0, %v3814
        %v3816 = vpop.f32.mrf.mxu0
        %3817 = vmatprep.mubr.f32.mxu0 0.0
        %3818 = vmatmul.mubr.f32.gmra.mxu0 %v3742
        %v3819 = vpop.f32.mrf.mxu0
        %v3820 = vadd.f32 0.0, %v3819
        %v3821 = vpop.f32.mrf.mxu0
        %3822 = vdwg.mxu0
        %3823 = vrot.lane.b32.xlu0 %v752, 104
        %v3824 = vpop.permute.xlu0 %3823
        %3825 = vrot.lane.b32.xlu0 %v757, 104
        %v3826 = vpop.permute.xlu0 %3825
        %3827 = vrot.lane.b32.xlu0 %v892, 104
        %v3828 = vpop.permute.xlu0 %3827
        %3829 = vrot.lane.b32.xlu0 %v897, 104
        %v3830 = vpop.permute.xlu0 %3829
        %v3831 = vsel %vm1040, %v3824, 0
        %v3833 = vsel %vm1040, %v3826, 0
        %v3835 = vsel %vm1040, %v3828, 0
        %v3837 = vsel %vm1040, %v3830, 0
        %3839 = vmatprep.subr.mxu0 0.0
        %3840 = vmatpush1.xpose.msra.mxu0 0.0
        %3841 = vmatprep.subr.mxu0 0.0
        %3842 = vmatpush1.xpose.msra.mxu0 0.0
        %3843 = vmatprep.subr.mxu0 0.0
        %3844 = vmatpush1.xpose.msra.mxu0 0.0
        %3845 = vmatprep.subr.mxu0 0.0
        %3846 = vmatpush1.xpose.msra.mxu0 0.0
        %3847 = vmatprep.subr.mxu0 0.0
        %3848 = vmatpush1.xpose.msra.mxu0 0.0
        %3849 = vmatprep.subr.mxu0 0.0
        %3850 = vmatpush1.xpose.msra.mxu0 0.0
        %3851 = vmatprep.subr.mxu0 0.0
        %3852 = vmatpush1.xpose.msra.mxu0 0.0
        %3853 = vmatprep.subr.mxu0 0.0
        %3854 = vmatpush1.xpose.msra.mxu0 0.0
        %3855 = vmatprep.subr.mxu0 0.0
        %3856 = vmatpush1.xpose.msra.mxu0 0.0
        %3857 = vmatprep.subr.mxu0 0.0
        %3858 = vmatpush1.xpose.msra.mxu0 0.0
        %3859 = vmatprep.subr.mxu0 0.0
        %3860 = vmatpush1.xpose.msra.mxu0 0.0
        %3861 = vmatprep.subr.mxu0 0.0
        %3862 = vmatpush1.xpose.msra.mxu0 0.0
        %3863 = vmatprep.subr.mxu0 0.0
        %3864 = vmatpush1.xpose.msra.mxu0 0.0
        %3865 = vmatprep.subr.mxu0 0.0
        %3866 = vmatpush1.xpose.msra.mxu0 0.0
        %3867 = vmatprep.subr.mxu0 0.0
        %3868 = vmatpush1.xpose.msra.mxu0 %v3837
        %3869 = vmatprep.subr.mxu0 0.0
        %3870 = vmatpush1.xpose.msra.mxu0 %v3835
        %3871 = vmatprep.subr.mxu0 0.0
        %3872 = vmatpush2.xpose.msra.mxu0 0.0
        %3873 = vmatprep.subr.mxu0 0.0
        %3874 = vmatpush2.xpose.msra.mxu0 0.0
        %3875 = vmatprep.subr.mxu0 0.0
        %3876 = vmatpush2.xpose.msra.mxu0 0.0
        %3877 = vmatprep.subr.mxu0 0.0
        %3878 = vmatpush2.xpose.msra.mxu0 0.0
        %3879 = vmatprep.subr.mxu0 0.0
        %3880 = vmatpush2.xpose.msra.mxu0 0.0
        %3881 = vmatprep.subr.mxu0 0.0
        %3882 = vmatpush2.xpose.msra.mxu0 0.0
        %3883 = vmatprep.subr.mxu0 0.0
        %3884 = vmatpush2.xpose.msra.mxu0 0.0
        %3885 = vmatprep.subr.mxu0 0.0
        %3886 = vmatpush2.xpose.msra.mxu0 0.0
        %3887 = vmatprep.subr.mxu0 0.0
        %3888 = vmatpush2.xpose.msra.mxu0 0.0
        %3889 = vmatprep.subr.mxu0 0.0
        %3890 = vmatpush2.xpose.msra.mxu0 0.0
        %3891 = vmatprep.subr.mxu0 0.0
        %3892 = vmatpush2.xpose.msra.mxu0 0.0
        %3893 = vmatprep.subr.mxu0 0.0
        %3894 = vmatpush2.xpose.msra.mxu0 0.0
        %3895 = vmatprep.subr.mxu0 0.0
        %3896 = vmatpush2.xpose.msra.mxu0 0.0
        %3897 = vmatprep.subr.mxu0 0.0
        %3898 = vmatpush2.xpose.msra.mxu0 0.0
        %3899 = vmatprep.subr.mxu0 0.0
        %3900 = vmatpush2.xpose.msra.mxu0 0.0
        %3901 = vmatprep.subr.mxu0 0.0
        %3902 = vmatpush2.xpose.msra.mxu0 0.0
        %3903 = vmatprep.mubr.f32.mxu0 0.0
        %3904 = vmatmul.mubr.f32.gmra.mxu0 %v3831
        %v3905 = vpop.f32.mrf.mxu0
        %v3906 = vadd.f32 0.0, %v3905
        %v3907 = vpop.f32.mrf.mxu0
        %3908 = vmatprep.mubr.f32.mxu0 0.0
        %3909 = vmatmul.mubr.f32.gmra.mxu0 %v3833
        %v3910 = vpop.f32.mrf.mxu0
        %v3911 = vadd.f32 0.0, %v3910
        %v3912 = vpop.f32.mrf.mxu0
        %3913 = vdwg.mxu0
        %v3914 = vmul.f32 %v3633, 0.35355338
        %v3915 = vmul.f32 %v3638, 0.35355338
        %v3916 = vmul.f32 %v3724, 0.35355338
        %v3917 = vmul.f32 %v3729, 0.35355338
        %v3918 = vmul.f32 %v3815, 0.35355338
        %v3919 = vmul.f32 %v3820, 0.35355338
        %v3920 = vmul.f32 %v3906, 0.35355338
        %v3921 = vmul.f32 %v3911, 0.35355338
        %v3922 = vsel %vm1397, %v3914, -inf
        %3923 = vmax.xlane.f32.xlu0 %v3922
        %v3924 = vpop.xlane.xlu0 %3923
        %v3925 = vsel %vm1397, %v3915, -inf
        %3926 = vmax.xlane.f32.xlu0 %v3925
        %v3927 = vpop.xlane.xlu0 %3926
        %v3928 = vsel %vm1397, %v3916, -inf
        %3929 = vmax.xlane.f32.xlu0 %v3928
        %v3930 = vpop.xlane.xlu0 %3929
        %v3931 = vsel %vm1397, %v3917, -inf
        %3932 = vmax.xlane.f32.xlu0 %v3931
        %v3933 = vpop.xlane.xlu0 %3932
        %v3934 = vsel %vm1397, %v3918, -inf
        %3935 = vmax.xlane.f32.xlu0 %v3934
        %v3936 = vpop.xlane.xlu0 %3935
        %v3937 = vsel %vm1397, %v3919, -inf
        %3938 = vmax.xlane.f32.xlu0 %v3937
        %v3939 = vpop.xlane.xlu0 %3938
        %v3940 = vsel %vm1397, %v3920, -inf
        %3941 = vmax.xlane.f32.xlu0 %v3940
        %v3942 = vpop.xlane.xlu0 %3941
        %v3943 = vsel %vm1397, %v3921, -inf
        %3944 = vmax.xlane.f32.xlu0 %v3943
        %v3945 = vpop.xlane.xlu0 %3944
        %v3946 = vsub.f32 %v3914, %v3924
        %v3947 = vsub.f32 %v3915, %v3927
        %v3948 = vsub.f32 %v3916, %v3930
        %v3949 = vsub.f32 %v3917, %v3933
        %v3950 = vsub.f32 %v3918, %v3936
        %v3951 = vsub.f32 %v3919, %v3939
        %v3952 = vsub.f32 %v3920, %v3942
        %v3953 = vsub.f32 %v3921, %v3945
        %v3954 = vmul.f32 %v3946, 1.442695
        %v3955 = vpow.pop %v3954
        %v3956 = vmul.f32 %v3947, 1.442695
        %v3957 = vpow.pop %v3956
        %v3958 = vmul.f32 %v3948, 1.442695
        %v3959 = vpow.pop %v3958
        %v3960 = vmul.f32 %v3949, 1.442695
        %v3961 = vpow.pop %v3960
        %v3962 = vmul.f32 %v3950, 1.442695
        %v3963 = vpow.pop %v3962
        %v3964 = vmul.f32 %v3951, 1.442695
        %v3965 = vpow.pop %v3964
        %v3966 = vmul.f32 %v3952, 1.442695
        %v3967 = vpow.pop %v3966
        %v3968 = vmul.f32 %v3953, 1.442695
        %v3969 = vpow.pop %v3968
        %v3970 = vsel %vm1397, %v3955, 0.0
        %3971 = vadd.xlane.f32.xlu0 %v3970
        %v3972 = vpop.xlane.xlu0 %3971
        %v3973 = vsel %vm1397, %v3957, 0.0
        %3974 = vadd.xlane.f32.xlu0 %v3973
        %v3975 = vpop.xlane.xlu0 %3974
        %v3976 = vsel %vm1397, %v3959, 0.0
        %3977 = vadd.xlane.f32.xlu0 %v3976
        %v3978 = vpop.xlane.xlu0 %3977
        %v3979 = vsel %vm1397, %v3961, 0.0
        %3980 = vadd.xlane.f32.xlu0 %v3979
        %v3981 = vpop.xlane.xlu0 %3980
        %v3982 = vsel %vm1397, %v3963, 0.0
        %3983 = vadd.xlane.f32.xlu0 %v3982
        %v3984 = vpop.xlane.xlu0 %3983
        %v3985 = vsel %vm1397, %v3965, 0.0
        %3986 = vadd.xlane.f32.xlu0 %v3985
        %v3987 = vpop.xlane.xlu0 %3986
        %v3988 = vsel %vm1397, %v3967, 0.0
        %3989 = vadd.xlane.f32.xlu0 %v3988
        %v3990 = vpop.xlane.xlu0 %3989
        %v3991 = vsel %vm1397, %v3969, 0.0
        %3992 = vadd.xlane.f32.xlu0 %v3991
        %v3993 = vpop.xlane.xlu0 %3992
        %v3994 = vrcp.pop %v3972
        %v3995 = vrcp.pop %v3975
        %v3996 = vrcp.pop %v3978
        %v3997 = vrcp.pop %v3981
        %v3998 = vrcp.pop %v3984
        %v3999 = vrcp.pop %v3987
        %v4000 = vrcp.pop %v3990
        %v4001 = vrcp.pop %v3993
        %v4002 = vmul.f32 %v3955, %v3994
        %v4003 = vmul.f32 %v3957, %v3995
        %v4004 = vmul.f32 %v3959, %v3996
        %v4005 = vmul.f32 %v3961, %v3997
        %v4006 = vmul.f32 %v3963, %v3998
        %v4007 = vmul.f32 %v3965, %v3999
        %v4008 = vmul.f32 %v3967, %v4000
        %v4009 = vmul.f32 %v3969, %v4001
        %s4010 = scalar_lea.vmem %s589, 192 [#allocation18]
        %4011 = vst.msk [vmem:[%s4010] sm:$0xff] %vm1397, %v4002
        %4012 = vst.msk [vmem:[%s4010 + $0x8] sm:$0xff] %vm1397, %v4003
        %4013 = vst.msk [vmem:[%s4010 + $0x10] sm:$0xff] %vm1397, %v4004
        %4014 = vst.msk [vmem:[%s4010 + $0x18] sm:$0xff] %vm1397, %v4005
        %4015 = vst.msk [vmem:[%s4010 + $0x20] sm:$0xff] %vm1397, %v4006
        %4016 = vst.msk [vmem:[%s4010 + $0x28] sm:$0xff] %vm1397, %v4007
        %4017 = vst.msk [vmem:[%s4010 + $0x30] sm:$0xff] %vm1397, %v4008
        %4018 = vst.msk [vmem:[%s4010 + $0x38] sm:$0xff] %vm1397, %v4009
        %4019 = vrot.lane.b32.xlu0 %v1002, 104
        %v4020 = vpop.permute.xlu0 %4019
        %4021 = vrot.lane.b32.xlu0 %v1007, 104
        %v4022 = vpop.permute.xlu0 %4021
        %v4026 = vsel %vm1397, %v4002, 0
        %v4029 = vsel %vm1397, %v4003, 0
        %4031 = vmatprep.subr.mxu0 0.0
        %4032 = vmatpush1.msra.mxu0 0.0
        %4033 = vmatprep.subr.mxu0 0.0
        %4034 = vmatpush1.msra.mxu0 0.0
        %4035 = vmatprep.subr.mxu0 0.0
        %4036 = vmatpush1.msra.mxu0 0.0
        %4037 = vmatprep.subr.mxu0 0.0
        %4038 = vmatpush1.msra.mxu0 0.0
        %4039 = vmatprep.subr.mxu0 0.0
        %4040 = vmatpush1.msra.mxu0 0.0
        %4041 = vmatprep.subr.mxu0 0.0
        %4042 = vmatpush1.msra.mxu0 0.0
        %4043 = vmatprep.subr.mxu0 0.0
        %4044 = vmatpush1.msra.mxu0 0.0
        %4045 = vmatprep.subr.mxu0 0.0
        %4046 = vmatpush1.msra.mxu0 0.0
        %4047 = vmatprep.subr.mxu0 0.0
        %4048 = vmatpush1.msra.mxu0 0.0
        %4049 = vmatprep.subr.mxu0 0.0
        %4050 = vmatpush1.msra.mxu0 0.0
        %4051 = vmatprep.subr.mxu0 0.0
        %4052 = vmatpush1.msra.mxu0 0.0
        %4053 = vmatprep.subr.mxu0 0.0
        %4054 = vmatpush1.msra.mxu0 0.0
        %4055 = vmatprep.subr.mxu0 0.0
        %4056 = vmatpush1.msra.mxu0 0.0
        %4057 = vmatprep.subr.mxu0 0.0
        %4058 = vmatpush1.msra.mxu0 0.0
        %4059 = vmatprep.subr.mxu0 0.0
        %4060 = vmatpush1.msra.mxu0 %v4022
        %4061 = vmatprep.subr.mxu0 0.0
        %4062 = vmatpush1.msra.mxu0 %v4020
        %4063 = vmatprep.subr.mxu0 0.0
        %4064 = vmatpush2.msra.mxu0 0.0
        %4065 = vmatprep.subr.mxu0 0.0
        %4066 = vmatpush2.msra.mxu0 0.0
        %4067 = vmatprep.subr.mxu0 0.0
        %4068 = vmatpush2.msra.mxu0 0.0
        %4069 = vmatprep.subr.mxu0 0.0
        %4070 = vmatpush2.msra.mxu0 0.0
        %4071 = vmatprep.subr.mxu0 0.0
        %4072 = vmatpush2.msra.mxu0 0.0
        %4073 = vmatprep.subr.mxu0 0.0
        %4074 = vmatpush2.msra.mxu0 0.0
        %4075 = vmatprep.subr.mxu0 0.0
        %4076 = vmatpush2.msra.mxu0 0.0
        %4077 = vmatprep.subr.mxu0 0.0
        %4078 = vmatpush2.msra.mxu0 0.0
        %4079 = vmatprep.subr.mxu0 0.0
        %4080 = vmatpush2.msra.mxu0 0.0
        %4081 = vmatprep.subr.mxu0 0.0
        %4082 = vmatpush2.msra.mxu0 0.0
        %4083 = vmatprep.subr.mxu0 0.0
        %4084 = vmatpush2.msra.mxu0 0.0
        %4085 = vmatprep.subr.mxu0 0.0
        %4086 = vmatpush2.msra.mxu0 0.0
        %4087 = vmatprep.subr.mxu0 0.0
        %4088 = vmatpush2.msra.mxu0 0.0
        %4089 = vmatprep.subr.mxu0 0.0
        %4090 = vmatpush2.msra.mxu0 0.0
        %4091 = vmatprep.subr.mxu0 0.0
        %4092 = vmatpush2.msra.mxu0 0.0
        %4093 = vmatprep.subr.mxu0 0.0
        %4094 = vmatpush2.msra.mxu0 0.0
        %4095 = vmatprep.mubr.f32.mxu0 0.0
        %4096 = vmatmul.mubr.f32.gmra.mxu0 %v4026
        %v4097 = vpop.f32.mrf.mxu0
        %v4098 = vadd.f32 0.0, %v4097
        %v4099 = vpop.f32.mrf.mxu0
        %4100 = vmatprep.mubr.f32.mxu0 0.0
        %4101 = vmatmul.mubr.f32.gmra.mxu0 %v4029
        %v4102 = vpop.f32.mrf.mxu0
        %v4103 = vadd.f32 0.0, %v4102
        %v4104 = vpop.f32.mrf.mxu0
        %4105 = vdwg.mxu0
        %4106 = vrot.lane.b32.xlu0 %v1012, 104
        %v4107 = vpop.permute.xlu0 %4106
        %4108 = vrot.lane.b32.xlu0 %v1017, 104
        %v4109 = vpop.permute.xlu0 %4108
        %v4113 = vsel %vm1397, %v4004, 0
        %v4116 = vsel %vm1397, %v4005, 0
        %4118 = vmatprep.subr.mxu0 0.0
        %4119 = vmatpush1.msra.mxu0 0.0
        %4120 = vmatprep.subr.mxu0 0.0
        %4121 = vmatpush1.msra.mxu0 0.0
        %4122 = vmatprep.subr.mxu0 0.0
        %4123 = vmatpush1.msra.mxu0 0.0
        %4124 = vmatprep.subr.mxu0 0.0
        %4125 = vmatpush1.msra.mxu0 0.0
        %4126 = vmatprep.subr.mxu0 0.0
        %4127 = vmatpush1.msra.mxu0 0.0
        %4128 = vmatprep.subr.mxu0 0.0
        %4129 = vmatpush1.msra.mxu0 0.0
        %4130 = vmatprep.subr.mxu0 0.0
        %4131 = vmatpush1.msra.mxu0 0.0
        %4132 = vmatprep.subr.mxu0 0.0
        %4133 = vmatpush1.msra.mxu0 0.0
        %4134 = vmatprep.subr.mxu0 0.0
        %4135 = vmatpush1.msra.mxu0 0.0
        %4136 = vmatprep.subr.mxu0 0.0
        %4137 = vmatpush1.msra.mxu0 0.0
        %4138 = vmatprep.subr.mxu0 0.0
        %4139 = vmatpush1.msra.mxu0 0.0
        %4140 = vmatprep.subr.mxu0 0.0
        %4141 = vmatpush1.msra.mxu0 0.0
        %4142 = vmatprep.subr.mxu0 0.0
        %4143 = vmatpush1.msra.mxu0 0.0
        %4144 = vmatprep.subr.mxu0 0.0
        %4145 = vmatpush1.msra.mxu0 0.0
        %4146 = vmatprep.subr.mxu0 0.0
        %4147 = vmatpush1.msra.mxu0 %v4109
        %4148 = vmatprep.subr.mxu0 0.0
        %4149 = vmatpush1.msra.mxu0 %v4107
        %4150 = vmatprep.subr.mxu0 0.0
        %4151 = vmatpush2.msra.mxu0 0.0
        %4152 = vmatprep.subr.mxu0 0.0
        %4153 = vmatpush2.msra.mxu0 0.0
        %4154 = vmatprep.subr.mxu0 0.0
        %4155 = vmatpush2.msra.mxu0 0.0
        %4156 = vmatprep.subr.mxu0 0.0
        %4157 = vmatpush2.msra.mxu0 0.0
        %4158 = vmatprep.subr.mxu0 0.0
        %4159 = vmatpush2.msra.mxu0 0.0
        %4160 = vmatprep.subr.mxu0 0.0
        %4161 = vmatpush2.msra.mxu0 0.0
        %4162 = vmatprep.subr.mxu0 0.0
        %4163 = vmatpush2.msra.mxu0 0.0
        %4164 = vmatprep.subr.mxu0 0.0
        %4165 = vmatpush2.msra.mxu0 0.0
        %4166 = vmatprep.subr.mxu0 0.0
        %4167 = vmatpush2.msra.mxu0 0.0
        %4168 = vmatprep.subr.mxu0 0.0
        %4169 = vmatpush2.msra.mxu0 0.0
        %4170 = vmatprep.subr.mxu0 0.0
        %4171 = vmatpush2.msra.mxu0 0.0
        %4172 = vmatprep.subr.mxu0 0.0
        %4173 = vmatpush2.msra.mxu0 0.0
        %4174 = vmatprep.subr.mxu0 0.0
        %4175 = vmatpush2.msra.mxu0 0.0
        %4176 = vmatprep.subr.mxu0 0.0
        %4177 = vmatpush2.msra.mxu0 0.0
        %4178 = vmatprep.subr.mxu0 0.0
        %4179 = vmatpush2.msra.mxu0 0.0
        %4180 = vmatprep.subr.mxu0 0.0
        %4181 = vmatpush2.msra.mxu0 0.0
        %4182 = vmatprep.mubr.f32.mxu0 0.0
        %4183 = vmatmul.mubr.f32.gmra.mxu0 %v4113
        %v4184 = vpop.f32.mrf.mxu0
        %v4185 = vadd.f32 0.0, %v4184
        %v4186 = vpop.f32.mrf.mxu0
        %4187 = vmatprep.mubr.f32.mxu0 0.0
        %4188 = vmatmul.mubr.f32.gmra.mxu0 %v4116
        %v4189 = vpop.f32.mrf.mxu0
        %v4190 = vadd.f32 0.0, %v4189
        %v4191 = vpop.f32.mrf.mxu0
        %4192 = vdwg.mxu0
        %4193 = vrot.lane.b32.xlu0 %v1022, 104
        %v4194 = vpop.permute.xlu0 %4193
        %4195 = vrot.lane.b32.xlu0 %v1027, 104
        %v4196 = vpop.permute.xlu0 %4195
        %v4200 = vsel %vm1397, %v4006, 0
        %v4203 = vsel %vm1397, %v4007, 0
        %4205 = vmatprep.subr.mxu0 0.0
        %4206 = vmatpush1.msra.mxu0 0.0
        %4207 = vmatprep.subr.mxu0 0.0
        %4208 = vmatpush1.msra.mxu0 0.0
        %4209 = vmatprep.subr.mxu0 0.0
        %4210 = vmatpush1.msra.mxu0 0.0
        %4211 = vmatprep.subr.mxu0 0.0
        %4212 = vmatpush1.msra.mxu0 0.0
        %4213 = vmatprep.subr.mxu0 0.0
        %4214 = vmatpush1.msra.mxu0 0.0
        %4215 = vmatprep.subr.mxu0 0.0
        %4216 = vmatpush1.msra.mxu0 0.0
        %4217 = vmatprep.subr.mxu0 0.0
        %4218 = vmatpush1.msra.mxu0 0.0
        %4219 = vmatprep.subr.mxu0 0.0
        %4220 = vmatpush1.msra.mxu0 0.0
        %4221 = vmatprep.subr.mxu0 0.0
        %4222 = vmatpush1.msra.mxu0 0.0
        %4223 = vmatprep.subr.mxu0 0.0
        %4224 = vmatpush1.msra.mxu0 0.0
        %4225 = vmatprep.subr.mxu0 0.0
        %4226 = vmatpush1.msra.mxu0 0.0
        %4227 = vmatprep.subr.mxu0 0.0
        %4228 = vmatpush1.msra.mxu0 0.0
        %4229 = vmatprep.subr.mxu0 0.0
        %4230 = vmatpush1.msra.mxu0 0.0
        %4231 = vmatprep.subr.mxu0 0.0
        %4232 = vmatpush1.msra.mxu0 0.0
        %4233 = vmatprep.subr.mxu0 0.0
        %4234 = vmatpush1.msra.mxu0 %v4196
        %4235 = vmatprep.subr.mxu0 0.0
        %4236 = vmatpush1.msra.mxu0 %v4194
        %4237 = vmatprep.subr.mxu0 0.0
        %4238 = vmatpush2.msra.mxu0 0.0
        %4239 = vmatprep.subr.mxu0 0.0
        %4240 = vmatpush2.msra.mxu0 0.0
        %4241 = vmatprep.subr.mxu0 0.0
        %4242 = vmatpush2.msra.mxu0 0.0
        %4243 = vmatprep.subr.mxu0 0.0
        %4244 = vmatpush2.msra.mxu0 0.0
        %4245 = vmatprep.subr.mxu0 0.0
        %4246 = vmatpush2.msra.mxu0 0.0
        %4247 = vmatprep.subr.mxu0 0.0
        %4248 = vmatpush2.msra.mxu0 0.0
        %4249 = vmatprep.subr.mxu0 0.0
        %4250 = vmatpush2.msra.mxu0 0.0
        %4251 = vmatprep.subr.mxu0 0.0
        %4252 = vmatpush2.msra.mxu0 0.0
        %4253 = vmatprep.subr.mxu0 0.0
        %4254 = vmatpush2.msra.mxu0 0.0
        %4255 = vmatprep.subr.mxu0 0.0
        %4256 = vmatpush2.msra.mxu0 0.0
        %4257 = vmatprep.subr.mxu0 0.0
        %4258 = vmatpush2.msra.mxu0 0.0
        %4259 = vmatprep.subr.mxu0 0.0
        %4260 = vmatpush2.msra.mxu0 0.0
        %4261 = vmatprep.subr.mxu0 0.0
        %4262 = vmatpush2.msra.mxu0 0.0
        %4263 = vmatprep.subr.mxu0 0.0
        %4264 = vmatpush2.msra.mxu0 0.0
        %4265 = vmatprep.subr.mxu0 0.0
        %4266 = vmatpush2.msra.mxu0 0.0
        %4267 = vmatprep.subr.mxu0 0.0
        %4268 = vmatpush2.msra.mxu0 0.0
        %4269 = vmatprep.mubr.f32.mxu0 0.0
        %4270 = vmatmul.mubr.f32.gmra.mxu0 %v4200
        %v4271 = vpop.f32.mrf.mxu0
        %v4272 = vadd.f32 0.0, %v4271
        %v4273 = vpop.f32.mrf.mxu0
        %4274 = vmatprep.mubr.f32.mxu0 0.0
        %4275 = vmatmul.mubr.f32.gmra.mxu0 %v4203
        %v4276 = vpop.f32.mrf.mxu0
        %v4277 = vadd.f32 0.0, %v4276
        %v4278 = vpop.f32.mrf.mxu0
        %4279 = vdwg.mxu0
        %4280 = vrot.lane.b32.xlu0 %v1032, 104
        %v4281 = vpop.permute.xlu0 %4280
        %4282 = vrot.lane.b32.xlu0 %v1037, 104
        %v4283 = vpop.permute.xlu0 %4282
        %v4287 = vsel %vm1397, %v4008, 0
        %v4290 = vsel %vm1397, %v4009, 0
        %4292 = vmatprep.subr.mxu0 0.0
        %4293 = vmatpush1.msra.mxu0 0.0
        %4294 = vmatprep.subr.mxu0 0.0
        %4295 = vmatpush1.msra.mxu0 0.0
        %4296 = vmatprep.subr.mxu0 0.0
        %4297 = vmatpush1.msra.mxu0 0.0
        %4298 = vmatprep.subr.mxu0 0.0
        %4299 = vmatpush1.msra.mxu0 0.0
        %4300 = vmatprep.subr.mxu0 0.0
        %4301 = vmatpush1.msra.mxu0 0.0
        %4302 = vmatprep.subr.mxu0 0.0
        %4303 = vmatpush1.msra.mxu0 0.0
        %4304 = vmatprep.subr.mxu0 0.0
        %4305 = vmatpush1.msra.mxu0 0.0
        %4306 = vmatprep.subr.mxu0 0.0
        %4307 = vmatpush1.msra.mxu0 0.0
        %4308 = vmatprep.subr.mxu0 0.0
        %4309 = vmatpush1.msra.mxu0 0.0
        %4310 = vmatprep.subr.mxu0 0.0
        %4311 = vmatpush1.msra.mxu0 0.0
        %4312 = vmatprep.subr.mxu0 0.0
        %4313 = vmatpush1.msra.mxu0 0.0
        %4314 = vmatprep.subr.mxu0 0.0
        %4315 = vmatpush1.msra.mxu0 0.0
        %4316 = vmatprep.subr.mxu0 0.0
        %4317 = vmatpush1.msra.mxu0 0.0
        %4318 = vmatprep.subr.mxu0 0.0
        %4319 = vmatpush1.msra.mxu0 0.0
        %4320 = vmatprep.subr.mxu0 0.0
        %4321 = vmatpush1.msra.mxu0 %v4283
        %4322 = vmatprep.subr.mxu0 0.0
        %4323 = vmatpush1.msra.mxu0 %v4281
        %4324 = vmatprep.subr.mxu0 0.0
        %4325 = vmatpush2.msra.mxu0 0.0
        %4326 = vmatprep.subr.mxu0 0.0
        %4327 = vmatpush2.msra.mxu0 0.0
        %4328 = vmatprep.subr.mxu0 0.0
        %4329 = vmatpush2.msra.mxu0 0.0
        %4330 = vmatprep.subr.mxu0 0.0
        %4331 = vmatpush2.msra.mxu0 0.0
        %4332 = vmatprep.subr.mxu0 0.0
        %4333 = vmatpush2.msra.mxu0 0.0
        %4334 = vmatprep.subr.mxu0 0.0
        %4335 = vmatpush2.msra.mxu0 0.0
        %4336 = vmatprep.subr.mxu0 0.0
        %4337 = vmatpush2.msra.mxu0 0.0
        %4338 = vmatprep.subr.mxu0 0.0
        %4339 = vmatpush2.msra.mxu0 0.0
        %4340 = vmatprep.subr.mxu0 0.0
        %4341 = vmatpush2.msra.mxu0 0.0
        %4342 = vmatprep.subr.mxu0 0.0
        %4343 = vmatpush2.msra.mxu0 0.0
        %4344 = vmatprep.subr.mxu0 0.0
        %4345 = vmatpush2.msra.mxu0 0.0
        %4346 = vmatprep.subr.mxu0 0.0
        %4347 = vmatpush2.msra.mxu0 0.0
        %4348 = vmatprep.subr.mxu0 0.0
        %4349 = vmatpush2.msra.mxu0 0.0
        %4350 = vmatprep.subr.mxu0 0.0
        %4351 = vmatpush2.msra.mxu0 0.0
        %4352 = vmatprep.subr.mxu0 0.0
        %4353 = vmatpush2.msra.mxu0 0.0
        %4354 = vmatprep.subr.mxu0 0.0
        %4355 = vmatpush2.msra.mxu0 0.0
        %4356 = vmatprep.mubr.f32.mxu0 0.0
        %4357 = vmatmul.mubr.f32.gmra.mxu0 %v4287
        %v4358 = vpop.f32.mrf.mxu0
        %v4359 = vadd.f32 0.0, %v4358
        %v4360 = vpop.f32.mrf.mxu0
        %4361 = vmatprep.mubr.f32.mxu0 0.0
        %4362 = vmatmul.mubr.f32.gmra.mxu0 %v4290
        %v4363 = vpop.f32.mrf.mxu0
        %v4364 = vadd.f32 0.0, %v4363
        %v4365 = vpop.f32.mrf.mxu0
        %4366 = vdwg.mxu0
        %4375 = vrot.lane.b32.xlu0 %v4098, 24
        %v4376 = vpop.permute.xlu0 %4375
        %4377 = vrot.lane.b32.xlu0 %v4103, 24
        %v4378 = vpop.permute.xlu0 %4377
        %4379 = vrot.lane.b32.xlu0 %v4185, 24
        %v4380 = vpop.permute.xlu0 %4379
        %4381 = vrot.lane.b32.xlu0 %v4190, 24
        %v4382 = vpop.permute.xlu0 %4381
        %4383 = vrot.lane.b32.xlu0 %v4272, 24
        %v4384 = vpop.permute.xlu0 %4383
        %4385 = vrot.lane.b32.xlu0 %v4277, 24
        %v4386 = vpop.permute.xlu0 %4385
        %4387 = vrot.lane.b32.xlu0 %v4359, 24
        %v4388 = vpop.permute.xlu0 %4387
        %4389 = vrot.lane.b32.xlu0 %v4364, 24
        %v4390 = vpop.permute.xlu0 %4389
        %vm4399 = vcmask 261312
        %4400 = vst.msk [vmem:[#allocation2] sm:$0xff] %vm4399, %v4376
        %4401 = vst.msk [vmem:[#allocation2 + $0x8] sm:$0xff] %vm4399, %v4378
        %4402 = vst.msk [vmem:[#allocation2 + $0x10] sm:$0xff] %vm4399, %v4380
        %4403 = vst.msk [vmem:[#allocation2 + $0x18] sm:$0xff] %vm4399, %v4382
        %4404 = vst.msk [vmem:[#allocation2 + $0x20] sm:$0xff] %vm4399, %v4384
        %4405 = vst.msk [vmem:[#allocation2 + $0x28] sm:$0xff] %vm4399, %v4386
        %4406 = vst.msk [vmem:[#allocation2 + $0x30] sm:$0xff] %vm4399, %v4388
        %4407 = vst.msk [vmem:[#allocation2 + $0x38] sm:$0xff] %vm4399, %v4390
        %v4408 = vld [vmem:[#allocation2] sm:$0xff]
        %v4409 = vld [vmem:[#allocation2 + $0x8] sm:$0xff]
        %v4410 = vld [vmem:[#allocation2 + $0x10] sm:$0xff]
        %v4411 = vld [vmem:[#allocation2 + $0x18] sm:$0xff]
        %v4412 = vld [vmem:[#allocation2 + $0x20] sm:$0xff]
        %v4413 = vld [vmem:[#allocation2 + $0x28] sm:$0xff]
        %v4414 = vld [vmem:[#allocation2 + $0x30] sm:$0xff]
        %v4415 = vld [vmem:[#allocation2 + $0x38] sm:$0xff]
        %v4416 = vld [vmem:[#allocation15] sm:$0xff]
        %v4417 = vld [vmem:[#allocation15 + $0x8] sm:$0xff]
        %v4418 = vld [vmem:[#allocation15 + $0x10] sm:$0xff]
        %v4419 = vld [vmem:[#allocation15 + $0x18] sm:$0xff]
        %v4420 = vld [vmem:[%s10] sm:$0x1]
        %v4422 = vlaneseq
        %v4423 = vshrl.u32 %v4422, 7
        %v4424 = vsub.s32 0, %v4423
        %v4425 = vrot.slane %v4420, %v4424
        %v4428 = vsel %vm630, %v4408, 0
        %v4431 = vsel %vm630, %v4409, 0
        %v4434 = vsel %vm630, %v4410, 0
        %v4437 = vsel %vm630, %v4411, 0
        %v4440 = vsel %vm630, %v4412, 0
        %v4443 = vsel %vm630, %v4413, 0
        %v4446 = vsel %vm630, %v4414, 0
        %v4449 = vsel %vm630, %v4415, 0
        %4451 = vmatprep.subr.mxu0 0.0
        %4452 = vmatpush1.msra.mxu0 0.0
        %4453 = vmatprep.subr.mxu0 0.0
        %4454 = vmatpush1.msra.mxu0 0.0
        %4455 = vmatprep.subr.mxu0 0.0
        %4456 = vmatpush1.msra.mxu0 0.0
        %4457 = vmatprep.subr.mxu0 0.0
        %4458 = vmatpush1.msra.mxu0 0.0
        %4459 = vmatprep.subr.mxu0 0.0
        %4460 = vmatpush1.msra.mxu0 0.0
        %4461 = vmatprep.subr.mxu0 0.0
        %4462 = vmatpush1.msra.mxu0 0.0
        %4463 = vmatprep.subr.mxu0 0.0
        %4464 = vmatpush1.msra.mxu0 0.0
        %4465 = vmatprep.subr.mxu0 0.0
        %4466 = vmatpush1.msra.mxu0 0.0
        %4467 = vmatprep.subr.mxu0 0.0
        %4468 = vmatpush1.msra.mxu0 0.0
        %4469 = vmatprep.subr.mxu0 0.0
        %4470 = vmatpush1.msra.mxu0 0.0
        %4471 = vmatprep.subr.mxu0 0.0
        %4472 = vmatpush1.msra.mxu0 0.0
        %4473 = vmatprep.subr.mxu0 0.0
        %4474 = vmatpush1.msra.mxu0 0.0
        %4475 = vmatprep.subr.mxu0 0.0
        %4476 = vmatpush1.msra.mxu0 %v4419
        %4477 = vmatprep.subr.mxu0 0.0
        %4478 = vmatpush1.msra.mxu0 %v4418
        %4479 = vmatprep.subr.mxu0 0.0
        %4480 = vmatpush1.msra.mxu0 %v4417
        %4481 = vmatprep.subr.mxu0 0.0
        %4482 = vmatpush1.msra.mxu0 %v4416
        %4483 = vmatprep.subr.mxu0 0.0
        %4484 = vmatpush2.msra.mxu0 0.0
        %4485 = vmatprep.subr.mxu0 0.0
        %4486 = vmatpush2.msra.mxu0 0.0
        %4487 = vmatprep.subr.mxu0 0.0
        %4488 = vmatpush2.msra.mxu0 0.0
        %4489 = vmatprep.subr.mxu0 0.0
        %4490 = vmatpush2.msra.mxu0 0.0
        %4491 = vmatprep.subr.mxu0 0.0
        %4492 = vmatpush2.msra.mxu0 0.0
        %4493 = vmatprep.subr.mxu0 0.0
        %4494 = vmatpush2.msra.mxu0 0.0
        %4495 = vmatprep.subr.mxu0 0.0
        %4496 = vmatpush2.msra.mxu0 0.0
        %4497 = vmatprep.subr.mxu0 0.0
        %4498 = vmatpush2.msra.mxu0 0.0
        %4499 = vmatprep.subr.mxu0 0.0
        %4500 = vmatpush2.msra.mxu0 0.0
        %4501 = vmatprep.subr.mxu0 0.0
        %4502 = vmatpush2.msra.mxu0 0.0
        %4503 = vmatprep.subr.mxu0 0.0
        %4504 = vmatpush2.msra.mxu0 0.0
        %4505 = vmatprep.subr.mxu0 0.0
        %4506 = vmatpush2.msra.mxu0 0.0
        %4507 = vmatprep.subr.mxu0 0.0
        %4508 = vmatpush2.msra.mxu0 0.0
        %4509 = vmatprep.subr.mxu0 0.0
        %4510 = vmatpush2.msra.mxu0 0.0
        %4511 = vmatprep.subr.mxu0 0.0
        %4512 = vmatpush2.msra.mxu0 0.0
        %4513 = vmatprep.subr.mxu0 0.0
        %4514 = vmatpush2.msra.mxu0 0.0
        %4515 = vmatprep.mubr.f32.mxu0 0.0
        %4516 = vmatmul.mubr.f32.gmra.mxu0 %v4428
        %v4517 = vpop.f32.mrf.mxu0
        %v4518 = vadd.f32 %v4425, %v4517
        %v4519 = vpop.f32.mrf.mxu0
        %4520 = vmatprep.mubr.f32.mxu0 0.0
        %4521 = vmatmul.mubr.f32.gmra.mxu0 %v4431
        %v4522 = vpop.f32.mrf.mxu0
        %v4523 = vadd.f32 %v4425, %v4522
        %v4524 = vpop.f32.mrf.mxu0
        %4525 = vmatprep.mubr.f32.mxu0 0.0
        %4526 = vmatmul.mubr.f32.gmra.mxu0 %v4434
        %v4527 = vpop.f32.mrf.mxu0
        %v4528 = vadd.f32 %v4425, %v4527
        %v4529 = vpop.f32.mrf.mxu0
        %4530 = vmatprep.mubr.f32.mxu0 0.0
        %4531 = vmatmul.mubr.f32.gmra.mxu0 %v4437
        %v4532 = vpop.f32.mrf.mxu0
        %v4533 = vadd.f32 %v4425, %v4532
        %v4534 = vpop.f32.mrf.mxu0
        %4535 = vmatprep.mubr.f32.mxu0 0.0
        %4536 = vmatmul.mubr.f32.gmra.mxu0 %v4440
        %v4537 = vpop.f32.mrf.mxu0
        %v4538 = vadd.f32 %v4425, %v4537
        %v4539 = vpop.f32.mrf.mxu0
        %4540 = vmatprep.mubr.f32.mxu0 0.0
        %4541 = vmatmul.mubr.f32.gmra.mxu0 %v4443
        %v4542 = vpop.f32.mrf.mxu0
        %v4543 = vadd.f32 %v4425, %v4542
        %v4544 = vpop.f32.mrf.mxu0
        %4545 = vmatprep.mubr.f32.mxu0 0.0
        %4546 = vmatmul.mubr.f32.gmra.mxu0 %v4446
        %v4547 = vpop.f32.mrf.mxu0
        %v4548 = vadd.f32 %v4425, %v4547
        %v4549 = vpop.f32.mrf.mxu0
        %4550 = vmatprep.mubr.f32.mxu0 0.0
        %4551 = vmatmul.mubr.f32.gmra.mxu0 %v4449
        %v4552 = vpop.f32.mrf.mxu0
        %v4553 = vadd.f32 %v4425, %v4552
        %v4554 = vpop.f32.mrf.mxu0
        %4555 = vdwg.mxu0
        %4556 = vst.msk [vmem:[%s583] sm:$0xff] %vm630, %v4518
        %4557 = vst.msk [vmem:[%s583 + $0x8] sm:$0xff] %vm630, %v4523
        %4558 = vst.msk [vmem:[%s583 + $0x10] sm:$0xff] %vm630, %v4528
        %4559 = vst.msk [vmem:[%s583 + $0x18] sm:$0xff] %vm630, %v4533
        %4560 = vst.msk [vmem:[%s583 + $0x20] sm:$0xff] %vm630, %v4538
        %4561 = vst.msk [vmem:[%s583 + $0x28] sm:$0xff] %vm630, %v4543
        %4562 = vst.msk [vmem:[%s583 + $0x30] sm:$0xff] %vm630, %v4548
        %4563 = vst.msk [vmem:[%s583 + $0x38] sm:$0xff] %vm630, %v4553
        %s4564 = sand.u32 %s290, 1
        %s4565 = scalar_lea.sflag [#allocation5], %s4564
        %s4566 = sand.u32 %s290, 1
        %s4567 = smul.addr %s4566, 64
        %s4568 = scalar_lea.vmem [#allocation17], %s4567
        %s4569 = sand.u32 %s316, 1
        %s4570 = sand.u32 %s316, 1
        %s4571 = smul.addr %s4570, 256
        %s4572 = scalar_lea.vmem [#allocation18], %s4571
        // Predicated region
        $region97: #{_lambda_.1} parent=63 // pred_check
          %p4573 = pneg %p300
        $region98: #{_lambda_.1} parent=63 // pred_check_branch
          %4575 = sbr.rel (%p4573) target = $region100
        $region99: #{_lambda_.1} parent=63 // pred_region
          %s4576 = smul.u32 4, %s36
          %s4578 = ssub.s32 1024, 1024
          %4579 = vsyncadd %s4565, %s4578
          %s4580 = smul.addr %s4576, 2
          %s4581 = smul.addr %s4580, 128
          %s4582 = scalar_lea.hbm %s11, %s4581
          %s4583 = sshll.u32 %s4568, 4
          %s4584 = int_to_ptr.vmem [resolvable:$true] %s4583
          %4589 = dma.vmem_to_hbm [thread:$0]  %s4584, 1024, %s4582, %s4565, 128, 128, 8
        $region100: #{_lambda_.1} parent=63 // pred_fallthru
          _
        // Predicated region
        $region101: #{_lambda_.1} parent=63 // pred_check
          %p4590 = pneg %p326
        $region102: #{_lambda_.1} parent=63 // pred_check_branch
          %4592 = sbr.rel (%p4590) target = $region104
        $region103: #{_lambda_.1} parent=63 // pred_region
          %s4593 = smul.u32 4, %s36
          %s4594 = smul.addr %s4593, 2
          %s4595 = smul.addr %s4594, 8
          %s4596 = scalar_lea.vmem %s12, %s4595
          // Predicated region
          $region105: #{_lambda_.1} parent=103 // pred_check
            _
          $region106: #{_lambda_.1} parent=103 // pred_check_branch
            %4598 = sbr.rel (0) target = $region108
          $region107: #{_lambda_.1} parent=103 // pred_region
            // Predicated region
            $region109: #{_lambda_.1} parent=107 // pred_check
              _
            $region110: #{_lambda_.1} parent=107 // pred_check_branch
              %4600 = sbr.rel (0) target = $region112
            $region111: #{_lambda_.1} parent=107 // pred_region
              // Predicated region
              $region124: #{_lambda_.1} parent=111 // pred_check
                _
              $region125: #{_lambda_.1} parent=111 // pred_check_branch
                %4678 = sbr.rel (0) target = $region127
              $region126: #{_lambda_.1} parent=111 // pred_region
                loop: start=0, step=1, limit=1
                $region128: #{_lambda_.1} parent=126 // loop_pre_header
                  _
                $region129: #{_lambda_.1} parent=126 // loop_header
                  %s4680 = sphi 0, %s4684
                  %p4681 = scmp.ge.s32.totalorder %s4680, 1
                  %s4685 = sphi %s4572, %s4572
                  %s4686 = sphi %s4596, %s4596
                $region130: #{_lambda_.1} parent=126 // loop_header_branch
                  %4683 = sbr.rel (%p4681) target = $region134
                $region131: #{_lambda_.1} parent=126 // loop_body
                  %v4687 = vld [vmem:[%s4685] sm:$0xff]
                  %4688 = vst [vmem:[%s4686] sm:$0xff] %v4687
                  %v4689 = vld [vmem:[%s4685 + $0x8] sm:$0xff]
                  %4690 = vst [vmem:[%s4686 + $0x8] sm:$0xff] %v4689
                  %v4691 = vld [vmem:[%s4685 + $0x10] sm:$0xff]
                  %4692 = vst [vmem:[%s4686 + $0x10] sm:$0xff] %v4691
                  %v4693 = vld [vmem:[%s4685 + $0x18] sm:$0xff]
                  %4694 = vst [vmem:[%s4686 + $0x18] sm:$0xff] %v4693
                  %v4695 = vld [vmem:[%s4685 + $0x20] sm:$0xff]
                  %4696 = vst [vmem:[%s4686 + $0x20] sm:$0xff] %v4695
                  %v4697 = vld [vmem:[%s4685 + $0x28] sm:$0xff]
                  %4698 = vst [vmem:[%s4686 + $0x28] sm:$0xff] %v4697
                  %v4699 = vld [vmem:[%s4685 + $0x30] sm:$0xff]
                  %4700 = vst [vmem:[%s4686 + $0x30] sm:$0xff] %v4699
                  %v4701 = vld [vmem:[%s4685 + $0x38] sm:$0xff]
                  %4702 = vst [vmem:[%s4686 + $0x38] sm:$0xff] %v4701
                  %v4703 = vld [vmem:[%s4685 + $0x40] sm:$0xff]
                  %4704 = vst [vmem:[%s4686 + $0x80] sm:$0xff] %v4703
                  %v4705 = vld [vmem:[%s4685 + $0x48] sm:$0xff]
                  %4706 = vst [vmem:[%s4686 + $0x88] sm:$0xff] %v4705
                  %v4707 = vld [vmem:[%s4685 + $0x50] sm:$0xff]
                  %4708 = vst [vmem:[%s4686 + $0x90] sm:$0xff] %v4707
                  %v4709 = vld [vmem:[%s4685 + $0x58] sm:$0xff]
                  %4710 = vst [vmem:[%s4686 + $0x98] sm:$0xff] %v4709
                  %v4711 = vld [vmem:[%s4685 + $0x60] sm:$0xff]
                  %4712 = vst [vmem:[%s4686 + $0xa0] sm:$0xff] %v4711
                  %v4713 = vld [vmem:[%s4685 + $0x68] sm:$0xff]
                  %4714 = vst [vmem:[%s4686 + $0xa8] sm:$0xff] %v4713
                  %v4715 = vld [vmem:[%s4685 + $0x70] sm:$0xff]
                  %4716 = vst [vmem:[%s4686 + $0xb0] sm:$0xff] %v4715
                  %v4717 = vld [vmem:[%s4685 + $0x78] sm:$0xff]
                  %4718 = vst [vmem:[%s4686 + $0xb8] sm:$0xff] %v4717
                  %v4719 = vld [vmem:[%s4685 + $0x80] sm:$0xff]
                  %4720 = vst [vmem:[%s4686 + $0x100] sm:$0xff] %v4719
                  %v4721 = vld [vmem:[%s4685 + $0x88] sm:$0xff]
                  %4722 = vst [vmem:[%s4686 + $0x108] sm:$0xff] %v4721
                  %v4723 = vld [vmem:[%s4685 + $0x90] sm:$0xff]
                  %4724 = vst [vmem:[%s4686 + $0x110] sm:$0xff] %v4723
                  %v4725 = vld [vmem:[%s4685 + $0x98] sm:$0xff]
                  %4726 = vst [vmem:[%s4686 + $0x118] sm:$0xff] %v4725
                  %v4727 = vld [vmem:[%s4685 + $0xa0] sm:$0xff]
                  %4728 = vst [vmem:[%s4686 + $0x120] sm:$0xff] %v4727
                  %v4729 = vld [vmem:[%s4685 + $0xa8] sm:$0xff]
                  %4730 = vst [vmem:[%s4686 + $0x128] sm:$0xff] %v4729
                  %v4731 = vld [vmem:[%s4685 + $0xb0] sm:$0xff]
                  %4732 = vst [vmem:[%s4686 + $0x130] sm:$0xff] %v4731
                  %v4733 = vld [vmem:[%s4685 + $0xb8] sm:$0xff]
                  %4734 = vst [vmem:[%s4686 + $0x138] sm:$0xff] %v4733
                  %v4735 = vld [vmem:[%s4685 + $0xc0] sm:$0xff]
                  %4736 = vst [vmem:[%s4686 + $0x180] sm:$0xff] %v4735
                  %v4737 = vld [vmem:[%s4685 + $0xc8] sm:$0xff]
                  %4738 = vst [vmem:[%s4686 + $0x188] sm:$0xff] %v4737
                  %v4739 = vld [vmem:[%s4685 + $0xd0] sm:$0xff]
                  %4740 = vst [vmem:[%s4686 + $0x190] sm:$0xff] %v4739
                  %v4741 = vld [vmem:[%s4685 + $0xd8] sm:$0xff]
                  %4742 = vst [vmem:[%s4686 + $0x198] sm:$0xff] %v4741
                  %v4743 = vld [vmem:[%s4685 + $0xe0] sm:$0xff]
                  %4744 = vst [vmem:[%s4686 + $0x1a0] sm:$0xff] %v4743
                  %v4745 = vld [vmem:[%s4685 + $0xe8] sm:$0xff]
                  %4746 = vst [vmem:[%s4686 + $0x1a8] sm:$0xff] %v4745
                  %v4747 = vld [vmem:[%s4685 + $0xf0] sm:$0xff]
                  %4748 = vst [vmem:[%s4686 + $0x1b0] sm:$0xff] %v4747
                  %v4749 = vld [vmem:[%s4685 + $0xf8] sm:$0xff]
                  %4750 = vst [vmem:[%s4686 + $0x1b8] sm:$0xff] %v4749
                $region132: #{_lambda_.1} parent=126 // loop_footer
                  %s4684 = sadd.s32 1, %s4680
                $region133: #{_lambda_.1} parent=126 // loop_footer_branch
                  %4679 = sbr.rel target = $region129
                $region134: #{_lambda_.1} parent=126 // loop_exit
                  _
              $region127: #{_lambda_.1} parent=111 // pred_fallthru
                _
              // Predicated region
              $region135: #{_lambda_.1} parent=111 // pred_check
                _
              $region136: #{_lambda_.1} parent=111 // pred_check_branch
                %4752 = sbr.rel target = $region138
              $region137: #{_lambda_.1} parent=111 // pred_region
                _
              $region138: #{_lambda_.1} parent=111 // pred_fallthru
                _
            $region112: #{_lambda_.1} parent=107 // pred_fallthru
              _
            // Predicated region
            $region113: #{_lambda_.1} parent=107 // pred_check
              _
            $region114: #{_lambda_.1} parent=107 // pred_check_branch
              %4602 = sbr.rel target = $region116
            $region115: #{_lambda_.1} parent=107 // pred_region
              %s4604 = ssub.s32 256, 1
              loop: start=0, step=1, limit=1
              $region117: #{_lambda_.1} parent=115 // loop_pre_header
                _
              $region118: #{_lambda_.1} parent=115 // loop_header
                %s4606 = sphi 0, %s4610
                %p4607 = scmp.ge.s32.totalorder %s4606, 1
                %s4611 = sphi %s4572, %s4572
                %s4612 = sphi %s4596, %s4596
              $region119: #{_lambda_.1} parent=115 // loop_header_branch
                %4609 = sbr.rel (%p4607) target = $region123
              $region120: #{_lambda_.1} parent=115 // loop_body
                %v4613 = vld [vmem:[%s4611] sm:%s4604]
                %4614 = vst [vmem:[%s4612] sm:%s4604] %v4613
                %v4615 = vld [vmem:[%s4611 + $0x8] sm:%s4604]
                %4616 = vst [vmem:[%s4612 + $0x8] sm:%s4604] %v4615
                %v4617 = vld [vmem:[%s4611 + $0x10] sm:%s4604]
                %4618 = vst [vmem:[%s4612 + $0x10] sm:%s4604] %v4617
                %v4619 = vld [vmem:[%s4611 + $0x18] sm:%s4604]
                %4620 = vst [vmem:[%s4612 + $0x18] sm:%s4604] %v4619
                %v4621 = vld [vmem:[%s4611 + $0x20] sm:%s4604]
                %4622 = vst [vmem:[%s4612 + $0x20] sm:%s4604] %v4621
                %v4623 = vld [vmem:[%s4611 + $0x28] sm:%s4604]
                %4624 = vst [vmem:[%s4612 + $0x28] sm:%s4604] %v4623
                %v4625 = vld [vmem:[%s4611 + $0x30] sm:%s4604]
                %4626 = vst [vmem:[%s4612 + $0x30] sm:%s4604] %v4625
                %v4627 = vld [vmem:[%s4611 + $0x38] sm:%s4604]
                %4628 = vst [vmem:[%s4612 + $0x38] sm:%s4604] %v4627
                %v4629 = vld [vmem:[%s4611 + $0x40] sm:%s4604]
                %4630 = vst [vmem:[%s4612 + $0x80] sm:%s4604] %v4629
                %v4631 = vld [vmem:[%s4611 + $0x48] sm:%s4604]
                %4632 = vst [vmem:[%s4612 + $0x88] sm:%s4604] %v4631
                %v4633 = vld [vmem:[%s4611 + $0x50] sm:%s4604]
                %4634 = vst [vmem:[%s4612 + $0x90] sm:%s4604] %v4633
                %v4635 = vld [vmem:[%s4611 + $0x58] sm:%s4604]
                %4636 = vst [vmem:[%s4612 + $0x98] sm:%s4604] %v4635
                %v4637 = vld [vmem:[%s4611 + $0x60] sm:%s4604]
                %4638 = vst [vmem:[%s4612 + $0xa0] sm:%s4604] %v4637
                %v4639 = vld [vmem:[%s4611 + $0x68] sm:%s4604]
                %4640 = vst [vmem:[%s4612 + $0xa8] sm:%s4604] %v4639
                %v4641 = vld [vmem:[%s4611 + $0x70] sm:%s4604]
                %4642 = vst [vmem:[%s4612 + $0xb0] sm:%s4604] %v4641
                %v4643 = vld [vmem:[%s4611 + $0x78] sm:%s4604]
                %4644 = vst [vmem:[%s4612 + $0xb8] sm:%s4604] %v4643
                %v4645 = vld [vmem:[%s4611 + $0x80] sm:%s4604]
                %4646 = vst [vmem:[%s4612 + $0x100] sm:%s4604] %v4645
                %v4647 = vld [vmem:[%s4611 + $0x88] sm:%s4604]
                %4648 = vst [vmem:[%s4612 + $0x108] sm:%s4604] %v4647
                %v4649 = vld [vmem:[%s4611 + $0x90] sm:%s4604]
                %4650 = vst [vmem:[%s4612 + $0x110] sm:%s4604] %v4649
                %v4651 = vld [vmem:[%s4611 + $0x98] sm:%s4604]
                %4652 = vst [vmem:[%s4612 + $0x118] sm:%s4604] %v4651
                %v4653 = vld [vmem:[%s4611 + $0xa0] sm:%s4604]
                %4654 = vst [vmem:[%s4612 + $0x120] sm:%s4604] %v4653
                %v4655 = vld [vmem:[%s4611 + $0xa8] sm:%s4604]
                %4656 = vst [vmem:[%s4612 + $0x128] sm:%s4604] %v4655
                %v4657 = vld [vmem:[%s4611 + $0xb0] sm:%s4604]
                %4658 = vst [vmem:[%s4612 + $0x130] sm:%s4604] %v4657
                %v4659 = vld [vmem:[%s4611 + $0xb8] sm:%s4604]
                %4660 = vst [vmem:[%s4612 + $0x138] sm:%s4604] %v4659
                %v4661 = vld [vmem:[%s4611 + $0xc0] sm:%s4604]
                %4662 = vst [vmem:[%s4612 + $0x180] sm:%s4604] %v4661
                %v4663 = vld [vmem:[%s4611 + $0xc8] sm:%s4604]
                %4664 = vst [vmem:[%s4612 + $0x188] sm:%s4604] %v4663
                %v4665 = vld [vmem:[%s4611 + $0xd0] sm:%s4604]
                %4666 = vst [vmem:[%s4612 + $0x190] sm:%s4604] %v4665
                %v4667 = vld [vmem:[%s4611 + $0xd8] sm:%s4604]
                %4668 = vst [vmem:[%s4612 + $0x198] sm:%s4604] %v4667
                %v4669 = vld [vmem:[%s4611 + $0xe0] sm:%s4604]
                %4670 = vst [vmem:[%s4612 + $0x1a0] sm:%s4604] %v4669
                %v4671 = vld [vmem:[%s4611 + $0xe8] sm:%s4604]
                %4672 = vst [vmem:[%s4612 + $0x1a8] sm:%s4604] %v4671
                %v4673 = vld [vmem:[%s4611 + $0xf0] sm:%s4604]
                %4674 = vst [vmem:[%s4612 + $0x1b0] sm:%s4604] %v4673
                %v4675 = vld [vmem:[%s4611 + $0xf8] sm:%s4604]
                %4676 = vst [vmem:[%s4612 + $0x1b8] sm:%s4604] %v4675
              $region121: #{_lambda_.1} parent=115 // loop_footer
                %s4610 = sadd.s32 1, %s4606
              $region122: #{_lambda_.1} parent=115 // loop_footer_branch
                %4605 = sbr.rel target = $region118
              $region123: #{_lambda_.1} parent=115 // loop_exit
                _
            $region116: #{_lambda_.1} parent=107 // pred_fallthru
              _
          $region108: #{_lambda_.1} parent=103 // pred_fallthru
            _
          %4753 = vnop
        $region104: #{_lambda_.1} parent=63 // pred_fallthru
          _
      $region64: #{_lambda_.1} parent=5 // pred_fallthru
        _
      %p4754 = scmp.le.s32.totalorder 2, %s31
      // Predicated region
      $region139: #{_lambda_.1} parent=5 // pred_check
        %p4755 = pneg %p4754
      $region140: #{_lambda_.1} parent=5 // pred_check_branch
        %4757 = sbr.rel (%p4755) target = $region142
      $region141: #{_lambda_.1} parent=5 // pred_region
        %s4758 = ssub.s32 %s31, 2
        // Predicated region
        $region143: #{_lambda_.1} parent=141 // pred_check
          %p4759 = pneg %p306
        $region144: #{_lambda_.1} parent=141 // pred_check_branch
          %4761 = sbr.rel (%p4759) target = $region146
        $region145: #{_lambda_.1} parent=141 // pred_region
          %s4762 = sand.u32 %s291, 1
          %s4763 = scalar_lea.sflag [#allocation5], %s4762
          %s4764 = sand.u32 %s291, 1
          %s4765 = smul.addr %s4764, 64
          %s4766 = scalar_lea.vmem [#allocation17], %s4765
          %4767 = dma.done %s4763, 1024
        $region146: #{_lambda_.1} parent=141 // pred_fallthru
          _
        // Predicated region
        $region147: #{_lambda_.1} parent=141 // pred_check
          %p4768 = pneg %p332
        $region148: #{_lambda_.1} parent=141 // pred_check_branch
          %4770 = sbr.rel (%p4768) target = $region150
        $region149: #{_lambda_.1} parent=141 // pred_region
          %s4771 = sand.u32 %s317, 1
          %s4772 = sand.u32 %s317, 1
          %s4773 = smul.addr %s4772, 256
          %s4774 = scalar_lea.vmem [#allocation18], %s4773
        $region150: #{_lambda_.1} parent=141 // pred_fallthru
          _
      $region142: #{_lambda_.1} parent=5 // pred_fallthru
        _
    $region6: #{_lambda_.1} parent=1 // loop_footer
      %s35 = sadd.s32 1, %s31
    $region7: #{_lambda_.1} parent=1 // loop_footer_branch
      %30 = sbr.rel target = $region3
    $region8: #{_lambda_.1} parent=1 // loop_exit
      _
    %4775 = vsyncpa [#allocation4], 1
    %s4776 = scalar_lea.sflag [#allocation4], 1
    %4777 = vsyncpa %s4776, 1
    %4778 = vsyncpa [#allocation7], 1
    %s4779 = scalar_lea.sflag [#allocation7], 1
    %4780 = vsyncpa %s4779, 1
    %4781 = vsyncpa [#allocation10], 1
    %4782 = vsyncpa [#allocation13], 1
    %4783 = vsyncpa [#allocation16], 1
    %4784 = vsyncpa [#allocation5], 1
    %s4785 = scalar_lea.sflag [#allocation5], 1
    %4786 = vsyncpa %s4785, 1

</llo_original>
